<compile_context>
chip_gen: v5e
topology: v5e:2x2
jax: 0.10.0
libtpu: 0.0.40
codegen_flags: <defaults>
</compile_context>

<pallas_src>
import math

import jax
import jax.numpy as jnp
from jax.experimental import pallas as pl
from jax.experimental.pallas import tpu as pltpu

# ----------------------------- hyper-parameters -----------------------------
TAU = 4            # forecast horizon (decoder length)
T_ENC = 8          # encoder sequence length
M_WIND = 3         # wind-source features
M_OTHER = 3        # other-source features
INPUT_SIZE = 2     # encoder / decoder input features
HIDDEN = 32        # GRU hidden size
INPUT_DIM = 32     # == HIDDEN (seq2seq outputs must line up with res1 outputs)
INPUT_MIX = 16     # == attention output_dim
M_COMP = 3         # number of Beta mixture components
R1 = 16            # residual-net 1 hidden width
R2 = 16            # residual-net 2 hidden width

B_PAD = 8          # batch padded to one full sublane group (power of two)

# ------------------------- packed-parameter layout --------------------------
# Weight slab: all weight matrices row-stacked, each start row 8-aligned.
_W_SPECS = (("w_in", INPUT_SIZE), ("w_mp", M_WIND + M_OTHER),
            ("w_hh_e", HIDDEN), ("w_hh_d", HIDDEN), ("w_do", HIDDEN),
            ("r1_w2", R1), ("wqkv", INPUT_DIM), ("w_r2", INPUT_DIM),
            ("r2_w2", R2), ("w_head", INPUT_MIX))
W_OFF = {}
_r = 0
for _n, _rows in _W_SPECS:
    W_OFF[_n] = _r
    _r = -(-(_r + _rows) // 8) * 8
W_ROWS = _r                                     # 224
W_LANES = 6 * HIDDEN + R1 + INPUT_DIM           # 240 (width of fused w_in)

# Bias / LayerNorm slab: one row vector per row.
_B_NAMES = ("b_ih_e", "b_ih_d", "b_hh_e", "b_hh_d", "b_mp", "b_do",
            "r1_b1", "r1_b2", "g1", "be1", "r2_b1", "r2_b2", "g2", "be2",
            "b_head")
B_IDX = {n: i for i, n in enumerate(_B_NAMES)}
B_ROWS = 16
B_LANES = 3 * HIDDEN                            # 96


# ------------------------------ small helpers -------------------------------
def _sigmoid(x):
    return 1.0 / (1.0 + jnp.exp(-x))


def _softplus(x):
    return jnp.maximum(x, 0.0) + jnp.log1p(jnp.exp(-jnp.abs(x)))


def _softmax(x, approx=False):
    mx = jnp.max(x, axis=-1, keepdims=True)
    e = jnp.exp(x - mx)
    s = jnp.sum(e, axis=-1, keepdims=True)
    if approx:
        return e * pl.reciprocal(s, approx=True)
    return e / s


def _layer_norm(x, g, b, eps=1e-5):
    mu = jnp.mean(x, axis=-1, keepdims=True)
    var = jnp.mean(jnp.square(x - mu), axis=-1, keepdims=True)
    return (x - mu) * jax.lax.rsqrt(var + eps) * g + b


# --------------------------------- kernel -----------------------------------
def make_kernel(Bp, T_enc, tau):
    H, D, Do, m = HIDDEN, INPUT_DIM, INPUT_MIX, M_COMP
    n_enc = T_enc * Bp
    n_dec = tau * Bp
    N = n_enc + n_dec

    def kernel(data_ref, w_ref, b_ref, out_ref, seq_buf):
        f32 = jnp.float32

        def wmat(name, rows, cols):
            r0 = W_OFF[name]
            return w_ref[r0:r0 + rows, 0:cols]

        def brow(name, cols):
            i = B_IDX[name]
            return b_ref[i:i + 1, 0:cols]

        # ---- packed-slab views (static slices of the 3 DMA'd inputs) -------
        en_x = data_ref[0:n_enc, 0:INPUT_SIZE]                    # (64, 2)
        wo = data_ref[n_enc:n_enc + n_dec, 0:M_WIND + M_OTHER]    # (32, 6)
        pe = data_ref[n_enc + n_dec:n_enc + n_dec + N, 0:D]       # (96, 32)

        w_mp = wmat("w_mp", M_WIND + M_OTHER, INPUT_SIZE)
        w_in = wmat("w_in", INPUT_SIZE, W_LANES)
        w_hh_e = wmat("w_hh_e", H, 3 * H)
        w_hh_d = wmat("w_hh_d", H, 3 * H)
        w_do = wmat("w_do", H, D)
        r1_w2 = wmat("r1_w2", R1, D)
        wqkv = wmat("wqkv", D, 3 * Do)
        w_r2 = wmat("w_r2", D, R2 + Do)
        r2_w2 = wmat("r2_w2", R2, Do)
        w_head = wmat("w_head", Do, 3 * m)

        # ---- MultiSourceProcess: (wind ++ other) -> 2 decoder features -----
        dec_in = jnp.tanh(
            jnp.dot(wo, w_mp, preferred_element_type=f32)
            + brow("b_mp", INPUT_SIZE))                           # (32, 2)

        # ---- ONE fused input projection:
        #      [GRU enc gates | GRU dec gates | res1 hidden | res1 skip] ------
        x_all = jnp.concatenate([en_x, dec_in], axis=0)           # (96, 2)
        pre = jnp.dot(x_all, w_in, preferred_element_type=f32)    # (96, 240)
        gi_enc = pre[0:n_enc, 0:3 * H] + brow("b_ih_e", 3 * H)
        gi_dec = pre[n_enc:N, 3 * H:6 * H] + brow("b_ih_d", 3 * H)
        r1_h = jnp.maximum(pre[:, 6 * H:6 * H + R1] + brow("r1_b1", R1), 0.0)
        res1 = (jnp.dot(r1_h, r1_w2, preferred_element_type=f32)
                + brow("r1_b2", D) + pre[:, 6 * H + R1:6 * H + R1 + D])

        # ---- Seq2Seq GRU recurrence (torch.nn.GRU gate/bias semantics) -----
        bhe = jnp.broadcast_to(brow("b_hh_e", 3 * H), (Bp, 3 * H))  # hoisted
        bhd = jnp.broadcast_to(brow("b_hh_d", 3 * H), (Bp, 3 * H))

        def gru(gi, gh, h):
            r = _sigmoid(gi[:, 0:H] + gh[:, 0:H])
            z = _sigmoid(gi[:, H:2 * H] + gh[:, H:2 * H])
            n = jnp.tanh(gi[:, 2 * H:3 * H] + r * gh[:, 2 * H:3 * H])
            return (1.0 - z) * n + z * h

        # TODO(synk): hold w_hh in MXU weight regs (matmul_push_rhs/acc/pop).
        h = jnp.zeros((Bp, H), f32)
        for t in range(T_enc):                 # fully unrolled, static offsets
            gh = jnp.dot(h, w_hh_e, preferred_element_type=f32) + bhe
            h = gru(gi_enc[t * Bp:(t + 1) * Bp, :], gh, h)
            seq_buf[t * Bp:(t + 1) * Bp, :] = h        # aligned (8, H) store
        for t in range(tau):
            gh = jnp.dot(h, w_hh_d, preferred_element_type=f32) + bhd
            h = gru(gi_dec[t * Bp:(t + 1) * Bp, :], gh, h)
            seq_buf[n_enc + t * Bp:n_enc + (t + 1) * Bp, :] = h

        # decoder output projection, written back in place
        seq_buf[n_enc:N, :] = (
            jnp.dot(seq_buf[n_enc:N, :], w_do, preferred_element_type=f32)
            + brow("b_do", D))

        # ---- norm1(seq2seq_out + res1), positional encoding ----------------
        normed = _layer_norm(seq_buf[...] + res1, brow("g1", D), brow("be1", D))
        x = normed + pe

        # ---- fused QKV + batched self-attention (block-diag mask in-kernel)
        qkv = jnp.dot(x, wqkv, preferred_element_type=f32)        # (96, 48)
        q = qkv[:, 0:Do]
        k = qkv[:, Do:2 * Do]
        v = qkv[:, 2 * Do:3 * Do]
        s = jax.lax.dot_general(q, k, (((1,), (1,)), ((), ())),
                                preferred_element_type=f32)       # (96, 96)
        s = s * (1.0 / math.sqrt(Do))
        rb = jax.lax.broadcasted_iota(jnp.int32, (N, N), 0) & (Bp - 1)
        cb = jax.lax.broadcasted_iota(jnp.int32, (N, N), 1) & (Bp - 1)
        s = jnp.where(rb == cb, s, -1e9)       # attend only within own batch
        a = _softmax(s, approx=True)
        ob = jnp.dot(a, v, preferred_element_type=f32)            # (96, Do)

        # ---- last tau steps + res2 + norm2 + Beta mixture-density head -----
        tail = ob[n_enc:N, :]                                     # (32, Do)
        out2_n = normed[n_enc:N, :]                               # (32, D)
        pre2 = jnp.dot(out2_n, w_r2, preferred_element_type=f32)  # (32, R2+Do)
        h2 = jnp.maximum(pre2[:, 0:R2] + brow("r2_b1", R2), 0.0)
        res2 = (jnp.dot(h2, r2_w2, preferred_element_type=f32)
                + brow("r2_b2", Do) + pre2[:, R2:R2 + Do])
        res = _layer_norm(tail + res2, brow("g2", Do), brow("be2", Do))

        raw = (jnp.dot(res, w_head, preferred_element_type=f32)
               + brow("b_head", 3 * m))                           # (32, 9)
        alpha = _softplus(raw[:, 0:m]) + 1e-6
        beta = _softplus(raw[:, m:2 * m]) + 1e-6
        pi = _softmax(raw[:, 2 * m:3 * m])                        # exact div
        out_ref[...] = jnp.concatenate([alpha, beta, pi], axis=-1)

    return kernel


# ------------------------------ plain-JAX glue -------------------------------
def _positional_encoding(T, D):
    pos = jnp.arange(T, dtype=jnp.float32)[:, None]
    i = jnp.arange(0, D, 2, dtype=jnp.float32)
    div = jnp.exp(-jnp.log(10000.0) * i / D)
    ang = pos * div
    pe = jnp.zeros((T, D), jnp.float32)
    pe = pe.at[:, 0::2].set(jnp.sin(ang))
    pe = pe.at[:, 1::2].set(jnp.cos(ang))
    return pe


def init_params(key):
    shapes = {
        "w_mp": (M_WIND + M_OTHER, INPUT_SIZE), "b_mp": (1, INPUT_SIZE),
        "w_ih_e": (INPUT_SIZE, 3 * HIDDEN), "b_ih_e": (1, 3 * HIDDEN),
        "w_hh_e": (HIDDEN, 3 * HIDDEN), "b_hh_e": (1, 3 * HIDDEN),
        "w_ih_d": (INPUT_SIZE, 3 * HIDDEN), "b_ih_d": (1, 3 * HIDDEN),
        "w_hh_d": (HIDDEN, 3 * HIDDEN), "b_hh_d": (1, 3 * HIDDEN),
        "w_do": (HIDDEN, INPUT_DIM), "b_do": (1, INPUT_DIM),
        "r1_w1": (INPUT_SIZE, R1), "r1_b1": (1, R1),
        "r1_w2": (R1, INPUT_DIM), "r1_b2": (1, INPUT_DIM),
        "r1_ws": (INPUT_SIZE, INPUT_DIM),
        "wq": (INPUT_DIM, INPUT_MIX), "wk": (INPUT_DIM, INPUT_MIX),
        "wv": (INPUT_DIM, INPUT_MIX),
        "r2_w1": (INPUT_DIM, R2), "r2_b1": (1, R2),
        "r2_w2": (R2, INPUT_MIX), "r2_b2": (1, INPUT_MIX),
        "r2_ws": (INPUT_DIM, INPUT_MIX),
        "wa": (INPUT_MIX, M_COMP), "ba": (1, M_COMP),
        "wb": (INPUT_MIX, M_COMP), "bb": (1, M_COMP),
        "wp": (INPUT_MIX, M_COMP), "bp": (1, M_COMP),
    }
    params = {}
    for i, name in enumerate(sorted(shapes)):
        params[name] = 0.1 * jax.random.normal(
            jax.random.fold_in(key, i), shapes[name], jnp.float32)
    # LayerNorm (Norm) parameters
    params["g1"] = jnp.ones((1, INPUT_DIM), jnp.float32)
    params["be1"] = jnp.zeros((1, INPUT_DIM), jnp.float32)
    params["g2"] = jnp.ones((1, INPUT_MIX), jnp.float32)
    params["be2"] = jnp.zeros((1, INPUT_MIX), jnp.float32)
    return params


def pack_params(params):
    """Pack all weights / biases into two contiguous f32 slabs (2 DMAs)."""
    w_slab = jnp.zeros((W_ROWS, W_LANES), jnp.float32)

    def put(slab, name, mat):
        r0 = W_OFF[name]
        rows, cols = mat.shape
        return slab.at[r0:r0 + rows, 0:cols].set(mat)

    w_in = jnp.concatenate([params["w_ih_e"], params["w_ih_d"],
                            params["r1_w1"], params["r1_ws"]], axis=1)
    wqkv = jnp.concatenate([params["wq"], params["wk"], params["wv"]], axis=1)
    w_r2 = jnp.concatenate([params["r2_w1"], params["r2_ws"]], axis=1)
    w_head = jnp.concatenate([params["wa"], params["wb"], params["wp"]], axis=1)

    w_slab = put(w_slab, "w_in", w_in)
    w_slab = put(w_slab, "w_mp", params["w_mp"])
    w_slab = put(w_slab, "w_hh_e", params["w_hh_e"])
    w_slab = put(w_slab, "w_hh_d", params["w_hh_d"])
    w_slab = put(w_slab, "w_do", params["w_do"])
    w_slab = put(w_slab, "r1_w2", params["r1_w2"])
    w_slab = put(w_slab, "wqkv", wqkv)
    w_slab = put(w_slab, "w_r2", w_r2)
    w_slab = put(w_slab, "r2_w2", params["r2_w2"])
    w_slab = put(w_slab, "w_head", w_head)

    b_slab = jnp.zeros((B_ROWS, B_LANES), jnp.float32)
    vecs = dict(params)
    vecs["b_head"] = jnp.concatenate(
        [params["ba"], params["bb"], params["bp"]], axis=1)
    for name in _B_NAMES:
        v = vecs[name]
        b_slab = b_slab.at[B_IDX[name]:B_IDX[name] + 1, 0:v.shape[1]].set(v)
    return w_slab, b_slab


def mstan_forward(en_x, wind_x, other_x, y, w_slab, b_slab):
    B, T_enc, _ = en_x.shape
    tau = wind_x.shape[1]
    T_total = T_enc + tau
    Bp = B_PAD
    assert B <= Bp and (Bp & (Bp - 1)) == 0
    assert HIDDEN == INPUT_DIM, "hidden_size must equal input_dim"
    D, m = INPUT_DIM, M_COMP
    n_enc, n_dec = T_enc * Bp, tau * Bp
    N = n_enc + n_dec

    # ---- time-major, batch-padded 2-D layout (row = t * Bp + b) ------------
    pad = ((0, Bp - B), (0, 0), (0, 0))
    en_x_tm = jnp.transpose(jnp.pad(en_x.astype(jnp.float32), pad),
                            (1, 0, 2)).reshape(n_enc, INPUT_SIZE)
    wo = jnp.concatenate([wind_x, other_x], axis=-1).astype(jnp.float32)
    wo_tm = jnp.transpose(jnp.pad(wo, pad),
                          (1, 0, 2)).reshape(n_dec, M_WIND + M_OTHER)
    pe_tm = jnp.repeat(_positional_encoding(T_total, D), Bp, axis=0)

    # ---- single packed data slab (1 DMA): [en_x | wind++other | pos-enc] ---
    data = jnp.zeros((n_enc + n_dec + N, D), jnp.float32)
    data = data.at[0:n_enc, 0:INPUT_SIZE].set(en_x_tm)
    data = data.at[n_enc:n_enc + n_dec, 0:M_WIND + M_OTHER].set(wo_tm)
    data = data.at[n_enc + n_dec:, 0:D].set(pe_tm)

    vmem = pl.BlockSpec(memory_space=pltpu.MemorySpace.VMEM)
    packed = pl.pallas_call(
        make_kernel(Bp, T_enc, tau),
        out_shape=jax.ShapeDtypeStruct((n_dec, 3 * m), jnp.float32),
        in_specs=[vmem, vmem, vmem],
        out_specs=vmem,
        scratch_shapes=[pltpu.VMEM((N, HIDDEN), jnp.float32)],  # enc+dec states
    )(data, w_slab, b_slab)

    # ---- unpack: (tau*Bp, 3m) time-major -> (B, tau, m) x 3 ----------------
    packed = jnp.transpose(packed.reshape(tau, Bp, 3 * m), (1, 0, 2))[:B]
    alpha = packed[..., 0:m]
    beta = packed[..., m:2 * m]
    pi = packed[..., 2 * m:3 * m]
    Y = y[:, -tau:]
    return alpha, beta, pi, Y


# ----------------------------------- main ------------------------------------
if __name__ == "__main__":
    B = 2
    key = jax.random.PRNGKey(0)
    k1, k2, k3, k4 = jax.random.split(key, 4)

    en_x = jax.random.normal(k1, (B, T_ENC, INPUT_SIZE), jnp.float32)
    wind_x = jax.random.normal(k2, (B, TAU, M_WIND), jnp.float32)
    other_x = jax.random.normal(k3, (B, TAU, M_OTHER), jnp.float32)
    y = jax.random.normal(k4, (B, T_ENC + TAU), jnp.float32)

    params = init_params(jax.random.PRNGKey(42))
    w_slab, b_slab = pack_params(params)

    fwd = jax.jit(mstan_forward)
    alpha, beta, pi, Y = fwd(en_x, wind_x, other_x, y, w_slab, b_slab)
    jax.block_until_ready((alpha, beta, pi, Y))

    assert alpha.shape == (B, TAU, M_COMP)
    assert beta.shape == (B, TAU, M_COMP)
    assert pi.shape == (B, TAU, M_COMP)
    assert Y.shape == (B, TAU)
    assert bool(jnp.all(alpha > 0)) and bool(jnp.all(beta > 0))
    assert bool(jnp.allclose(jnp.sum(pi, axis=-1), 1.0, atol=1e-4))
    print("KERNEL_OK")
</pallas_src>

<mosaic_0001>
module attributes {stable_mosaic.version = 11 : i64} {
  func.func @kernel(%arg0: memref<192x32xf32, #tpu.memory_space<vmem>>, %arg1: memref<224x240xf32, #tpu.memory_space<vmem>>, %arg2: memref<16x96xf32, #tpu.memory_space<vmem>>, %arg3: memref<32x9xf32, #tpu.memory_space<vmem>>, %arg4: memref<96x32xf32, #tpu.memory_space<vmem>>) attributes {dimension_semantics = [], scalar_prefetch = 0 : i64, scratch_operands = 1 : i64, tpu.core_type = #tpu.core_type<tc>} {
    %c0 = arith.constant 0 : index
    %c0_0 = arith.constant 0 : index
    %0 = vector.load %arg0[%c0, %c0_0] : memref<192x32xf32, #tpu.memory_space<vmem>>, vector<64x2xf32>
    %c64 = arith.constant 64 : index
    %c0_1 = arith.constant 0 : index
    %1 = vector.load %arg0[%c64, %c0_1] : memref<192x32xf32, #tpu.memory_space<vmem>>, vector<32x6xf32>
    %c96 = arith.constant 96 : index
    %c0_2 = arith.constant 0 : index
    %2 = vector.load %arg0[%c96, %c0_2] : memref<192x32xf32, #tpu.memory_space<vmem>>, vector<96x32xf32>
    %c8 = arith.constant 8 : index
    %c0_3 = arith.constant 0 : index
    %3 = vector.load %arg1[%c8, %c0_3] : memref<224x240xf32, #tpu.memory_space<vmem>>, vector<6x2xf32>
    %c0_4 = arith.constant 0 : index
    %c0_5 = arith.constant 0 : index
    %4 = vector.load %arg1[%c0_4, %c0_5] : memref<224x240xf32, #tpu.memory_space<vmem>>, vector<2x240xf32>
    %c16 = arith.constant 16 : index
    %c0_6 = arith.constant 0 : index
    %5 = vector.load %arg1[%c16, %c0_6] : memref<224x240xf32, #tpu.memory_space<vmem>>, vector<32x96xf32>
    %c48 = arith.constant 48 : index
    %c0_7 = arith.constant 0 : index
    %6 = vector.load %arg1[%c48, %c0_7] : memref<224x240xf32, #tpu.memory_space<vmem>>, vector<32x96xf32>
    %c80 = arith.constant 80 : index
    %c0_8 = arith.constant 0 : index
    %7 = vector.load %arg1[%c80, %c0_8] : memref<224x240xf32, #tpu.memory_space<vmem>>, vector<32x32xf32>
    %c112 = arith.constant 112 : index
    %c0_9 = arith.constant 0 : index
    %8 = vector.load %arg1[%c112, %c0_9] : memref<224x240xf32, #tpu.memory_space<vmem>>, vector<16x32xf32>
    %c128 = arith.constant 128 : index
    %c0_10 = arith.constant 0 : index
    %9 = vector.load %arg1[%c128, %c0_10] : memref<224x240xf32, #tpu.memory_space<vmem>>, vector<32x48xf32>
    %c160 = arith.constant 160 : index
    %c0_11 = arith.constant 0 : index
    %10 = vector.load %arg1[%c160, %c0_11] : memref<224x240xf32, #tpu.memory_space<vmem>>, vector<32x32xf32>
    %c192 = arith.constant 192 : index
    %c0_12 = arith.constant 0 : index
    %11 = vector.load %arg1[%c192, %c0_12] : memref<224x240xf32, #tpu.memory_space<vmem>>, vector<16x16xf32>
    %c208 = arith.constant 208 : index
    %c0_13 = arith.constant 0 : index
    %12 = vector.load %arg1[%c208, %c0_13] : memref<224x240xf32, #tpu.memory_space<vmem>>, vector<16x9xf32>
    %cst = arith.constant dense<0.000000e+00> : vector<32x2xf32>
    %13 = tpu.matmul %1, %3, %cst {dimension_numbers = #tpu.dot_dimension_numbers<[1], [0], [0], [1], [0, 0, 1, 1], [], []>} : vector<32x6xf32>, vector<6x2xf32>, vector<32x2xf32> -> vector<32x2xf32>
    %c4 = arith.constant 4 : index
    %c0_14 = arith.constant 0 : index
    %14 = vector.load %arg2[%c4, %c0_14] : memref<16x96xf32, #tpu.memory_space<vmem>>, vector<1x2xf32>
    %15 = vector.broadcast %14 : vector<1x2xf32> to vector<32x2xf32>
    %16 = arith.addf %13, %15 : vector<32x2xf32>
    %17 = math.tanh %16 : vector<32x2xf32>
    %18 = tpu.concatenate %0, %17 in 0 : vector<64x2xf32>, vector<32x2xf32> -> vector<96x2xf32>
    %cst_15 = arith.constant dense<0.000000e+00> : vector<96x240xf32>
    %19 = tpu.matmul %18, %4, %cst_15 {dimension_numbers = #tpu.dot_dimension_numbers<[1], [0], [0], [1], [0, 0, 1, 1], [], []>} : vector<96x2xf32>, vector<2x240xf32>, vector<96x240xf32> -> vector<96x240xf32>
    %20 = vector.extract_strided_slice %19 {offsets = [0, 0], sizes = [64, 96], strides = [1, 1]} : vector<96x240xf32> to vector<64x96xf32>
    %c0_16 = arith.constant 0 : index
    %c0_17 = arith.constant 0 : index
    %21 = vector.load %arg2[%c0_16, %c0_17] : memref<16x96xf32, #tpu.memory_space<vmem>>, vector<1x96xf32>
    %22 = vector.broadcast %21 : vector<1x96xf32> to vector<64x96xf32>
    %23 = arith.addf %20, %22 : vector<64x96xf32>
    %24 = vector.extract_strided_slice %19 {offsets = [64, 96], sizes = [32, 96], strides = [1, 1]} : vector<96x240xf32> to vector<32x96xf32>
    %c1 = arith.constant 1 : index
    %c0_18 = arith.constant 0 : index
    %25 = vector.load %arg2[%c1, %c0_18] : memref<16x96xf32, #tpu.memory_space<vmem>>, vector<1x96xf32>
    %26 = vector.broadcast %25 : vector<1x96xf32> to vector<32x96xf32>
    %27 = arith.addf %24, %26 : vector<32x96xf32>
    %28 = vector.extract_strided_slice %19 {offsets = [0, 192], sizes = [96, 16], strides = [1, 1]} : vector<96x240xf32> to vector<96x16xf32>
    %c6 = arith.constant 6 : index
    %c0_19 = arith.constant 0 : index
    %29 = vector.load %arg2[%c6, %c0_19] : memref<16x96xf32, #tpu.memory_space<vmem>>, vector<1x16xf32>
    %30 = vector.broadcast %29 : vector<1x16xf32> to vector<96x16xf32>
    %31 = arith.addf %28, %30 : vector<96x16xf32>
    %cst_20 = arith.constant 0.000000e+00 : f32
    %32 = vector.broadcast %cst_20 : f32 to vector<96x16xf32>
    %33 = arith.maximumf %31, %32 : vector<96x16xf32>
    %cst_21 = arith.constant dense<0.000000e+00> : vector<96x32xf32>
    %34 = tpu.matmul %33, %8, %cst_21 {dimension_numbers = #tpu.dot_dimension_numbers<[1], [0], [0], [1], [0, 0, 1, 1], [], []>} : vector<96x16xf32>, vector<16x32xf32>, vector<96x32xf32> -> vector<96x32xf32>
    %c7 = arith.constant 7 : index
    %c0_22 = arith.constant 0 : index
    %35 = vector.load %arg2[%c7, %c0_22] : memref<16x96xf32, #tpu.memory_space<vmem>>, vector<1x32xf32>
    %36 = vector.broadcast %35 : vector<1x32xf32> to vector<96x32xf32>
    %37 = arith.addf %34, %36 : vector<96x32xf32>
    %38 = vector.extract_strided_slice %19 {offsets = [0, 208], sizes = [96, 32], strides = [1, 1]} : vector<96x240xf32> to vector<96x32xf32>
    %39 = arith.addf %37, %38 : vector<96x32xf32>
    %c2 = arith.constant 2 : index
    %c0_23 = arith.constant 0 : index
    %40 = vector.load %arg2[%c2, %c0_23] : memref<16x96xf32, #tpu.memory_space<vmem>>, vector<1x96xf32>
    %41 = vector.shape_cast %40 : vector<1x96xf32> to vector<1x96xf32>
    %42 = vector.broadcast %41 : vector<1x96xf32> to vector<8x96xf32>
    %c3 = arith.constant 3 : index
    %c0_24 = arith.constant 0 : index
    %43 = vector.load %arg2[%c3, %c0_24] : memref<16x96xf32, #tpu.memory_space<vmem>>, vector<1x96xf32>
    %44 = vector.shape_cast %43 : vector<1x96xf32> to vector<1x96xf32>
    %45 = vector.broadcast %44 : vector<1x96xf32> to vector<8x96xf32>
    %cst_25 = arith.constant 0.000000e+00 : f32
    %46 = vector.broadcast %cst_25 : f32 to vector<8x32xf32>
    %cst_26 = arith.constant dense<0.000000e+00> : vector<8x96xf32>
    %47 = tpu.matmul %46, %5, %cst_26 {dimension_numbers = #tpu.dot_dimension_numbers<[1], [0], [0], [1], [0, 0, 1, 1], [], []>} : vector<8x32xf32>, vector<32x96xf32>, vector<8x96xf32> -> vector<8x96xf32>
    %48 = arith.addf %47, %42 : vector<8x96xf32>
    %49 = vector.extract_strided_slice %23 {offsets = [0, 0], sizes = [8, 96], strides = [1, 1]} : vector<64x96xf32> to vector<8x96xf32>
    %50 = vector.extract_strided_slice %49 {offsets = [0, 0], sizes = [8, 32], strides = [1, 1]} : vector<8x96xf32> to vector<8x32xf32>
    %51 = vector.extract_strided_slice %48 {offsets = [0, 0], sizes = [8, 32], strides = [1, 1]} : vector<8x96xf32> to vector<8x32xf32>
    %52 = arith.addf %50, %51 : vector<8x32xf32>
    %cst_27 = arith.constant 0.000000e+00 : f32
    %53 = vector.broadcast %cst_27 : f32 to vector<8x32xf32>
    %54 = arith.subf %53, %52 : vector<8x32xf32>
    %55 = math.exp %54 : vector<8x32xf32>
    %cst_28 = arith.constant 1.000000e+00 : f32
    %56 = vector.broadcast %cst_28 : f32 to vector<8x32xf32>
    %57 = arith.addf %56, %55 : vector<8x32xf32>
    %cst_29 = arith.constant 1.000000e+00 : f32
    %58 = vector.broadcast %cst_29 : f32 to vector<8x32xf32>
    %59 = arith.divf %58, %57 : vector<8x32xf32>
    %60 = vector.extract_strided_slice %49 {offsets = [0, 32], sizes = [8, 32], strides = [1, 1]} : vector<8x96xf32> to vector<8x32xf32>
    %61 = vector.extract_strided_slice %48 {offsets = [0, 32], sizes = [8, 32], strides = [1, 1]} : vector<8x96xf32> to vector<8x32xf32>
    %62 = arith.addf %60, %61 : vector<8x32xf32>
    %cst_30 = arith.constant 0.000000e+00 : f32
    %63 = vector.broadcast %cst_30 : f32 to vector<8x32xf32>
    %64 = arith.subf %63, %62 : vector<8x32xf32>
    %65 = math.exp %64 : vector<8x32xf32>
    %cst_31 = arith.constant 1.000000e+00 : f32
    %66 = vector.broadcast %cst_31 : f32 to vector<8x32xf32>
    %67 = arith.addf %66, %65 : vector<8x32xf32>
    %cst_32 = arith.constant 1.000000e+00 : f32
    %68 = vector.broadcast %cst_32 : f32 to vector<8x32xf32>
    %69 = arith.divf %68, %67 : vector<8x32xf32>
    %70 = vector.extract_strided_slice %49 {offsets = [0, 64], sizes = [8, 32], strides = [1, 1]} : vector<8x96xf32> to vector<8x32xf32>
    %71 = vector.extract_strided_slice %48 {offsets = [0, 64], sizes = [8, 32], strides = [1, 1]} : vector<8x96xf32> to vector<8x32xf32>
    %72 = arith.mulf %59, %71 : vector<8x32xf32>
    %73 = arith.addf %70, %72 : vector<8x32xf32>
    %74 = math.tanh %73 : vector<8x32xf32>
    %cst_33 = arith.constant 1.000000e+00 : f32
    %75 = vector.broadcast %cst_33 : f32 to vector<8x32xf32>
    %76 = arith.subf %75, %69 : vector<8x32xf32>
    %77 = arith.mulf %76, %74 : vector<8x32xf32>
    %78 = arith.mulf %69, %46 : vector<8x32xf32>
    %79 = arith.addf %77, %78 : vector<8x32xf32>
    %c0_34 = arith.constant 0 : index
    %c0_35 = arith.constant 0 : index
    %80 = vector.load %arg4[%c0_34, %c0_35] : memref<96x32xf32, #tpu.memory_space<vmem>>, vector<8x32xf32>
    tpu.vector_store %arg4[%c0_34, %c0_35], %79 {strides = array<i32>} : memref<96x32xf32, #tpu.memory_space<vmem>>, vector<8x32xf32>,
    %cst_36 = arith.constant dense<0.000000e+00> : vector<8x96xf32>
    %81 = tpu.matmul %79, %5, %cst_36 {dimension_numbers = #tpu.dot_dimension_numbers<[1], [0], [0], [1], [0, 0, 1, 1], [], []>} : vector<8x32xf32>, vector<32x96xf32>, vector<8x96xf32> -> vector<8x96xf32>
    %82 = arith.addf %81, %42 : vector<8x96xf32>
    %83 = vector.extract_strided_slice %23 {offsets = [8, 0], sizes = [8, 96], strides = [1, 1]} : vector<64x96xf32> to vector<8x96xf32>
    %84 = vector.extract_strided_slice %83 {offsets = [0, 0], sizes = [8, 32], strides = [1, 1]} : vector<8x96xf32> to vector<8x32xf32>
    %85 = vector.extract_strided_slice %82 {offsets = [0, 0], sizes = [8, 32], strides = [1, 1]} : vector<8x96xf32> to vector<8x32xf32>
    %86 = arith.addf %84, %85 : vector<8x32xf32>
    %cst_37 = arith.constant 0.000000e+00 : f32
    %87 = vector.broadcast %cst_37 : f32 to vector<8x32xf32>
    %88 = arith.subf %87, %86 : vector<8x32xf32>
    %89 = math.exp %88 : vector<8x32xf32>
    %cst_38 = arith.constant 1.000000e+00 : f32
    %90 = vector.broadcast %cst_38 : f32 to vector<8x32xf32>
    %91 = arith.addf %90, %89 : vector<8x32xf32>
    %cst_39 = arith.constant 1.000000e+00 : f32
    %92 = vector.broadcast %cst_39 : f32 to vector<8x32xf32>
    %93 = arith.divf %92, %91 : vector<8x32xf32>
    %94 = vector.extract_strided_slice %83 {offsets = [0, 32], sizes = [8, 32], strides = [1, 1]} : vector<8x96xf32> to vector<8x32xf32>
    %95 = vector.extract_strided_slice %82 {offsets = [0, 32], sizes = [8, 32], strides = [1, 1]} : vector<8x96xf32> to vector<8x32xf32>
    %96 = arith.addf %94, %95 : vector<8x32xf32>
    %cst_40 = arith.constant 0.000000e+00 : f32
    %97 = vector.broadcast %cst_40 : f32 to vector<8x32xf32>
    %98 = arith.subf %97, %96 : vector<8x32xf32>
    %99 = math.exp %98 : vector<8x32xf32>
    %cst_41 = arith.constant 1.000000e+00 : f32
    %100 = vector.broadcast %cst_41 : f32 to vector<8x32xf32>
    %101 = arith.addf %100, %99 : vector<8x32xf32>
    %cst_42 = arith.constant 1.000000e+00 : f32
    %102 = vector.broadcast %cst_42 : f32 to vector<8x32xf32>
    %103 = arith.divf %102, %101 : vector<8x32xf32>
    %104 = vector.extract_strided_slice %83 {offsets = [0, 64], sizes = [8, 32], strides = [1, 1]} : vector<8x96xf32> to vector<8x32xf32>
    %105 = vector.extract_strided_slice %82 {offsets = [0, 64], sizes = [8, 32], strides = [1, 1]} : vector<8x96xf32> to vector<8x32xf32>
    %106 = arith.mulf %93, %105 : vector<8x32xf32>
    %107 = arith.addf %104, %106 : vector<8x32xf32>
    %108 = math.tanh %107 : vector<8x32xf32>
    %cst_43 = arith.constant 1.000000e+00 : f32
    %109 = vector.broadcast %cst_43 : f32 to vector<8x32xf32>
    %110 = arith.subf %109, %103 : vector<8x32xf32>
    %111 = arith.mulf %110, %108 : vector<8x32xf32>
    %112 = arith.mulf %103, %79 : vector<8x32xf32>
    %113 = arith.addf %111, %112 : vector<8x32xf32>
    %c8_44 = arith.constant 8 : index
    %c0_45 = arith.constant 0 : index
    %114 = vector.load %arg4[%c8_44, %c0_45] : memref<96x32xf32, #tpu.memory_space<vmem>>, vector<8x32xf32>
    tpu.vector_store %arg4[%c8_44, %c0_45], %113 {strides = array<i32>} : memref<96x32xf32, #tpu.memory_space<vmem>>, vector<8x32xf32>,
    %cst_46 = arith.constant dense<0.000000e+00> : vector<8x96xf32>
    %115 = tpu.matmul %113, %5, %cst_46 {dimension_numbers = #tpu.dot_dimension_numbers<[1], [0], [0], [1], [0, 0, 1, 1], [], []>} : vector<8x32xf32>, vector<32x96xf32>, vector<8x96xf32> -> vector<8x96xf32>
    %116 = arith.addf %115, %42 : vector<8x96xf32>
    %117 = vector.extract_strided_slice %23 {offsets = [16, 0], sizes = [8, 96], strides = [1, 1]} : vector<64x96xf32> to vector<8x96xf32>
    %118 = vector.extract_strided_slice %117 {offsets = [0, 0], sizes = [8, 32], strides = [1, 1]} : vector<8x96xf32> to vector<8x32xf32>
    %119 = vector.extract_strided_slice %116 {offsets = [0, 0], sizes = [8, 32], strides = [1, 1]} : vector<8x96xf32> to vector<8x32xf32>
    %120 = arith.addf %118, %119 : vector<8x32xf32>
    %cst_47 = arith.constant 0.000000e+00 : f32
    %121 = vector.broadcast %cst_47 : f32 to vector<8x32xf32>
    %122 = arith.subf %121, %120 : vector<8x32xf32>
    %123 = math.exp %122 : vector<8x32xf32>
    %cst_48 = arith.constant 1.000000e+00 : f32
    %124 = vector.broadcast %cst_48 : f32 to vector<8x32xf32>
    %125 = arith.addf %124, %123 : vector<8x32xf32>
    %cst_49 = arith.constant 1.000000e+00 : f32
    %126 = vector.broadcast %cst_49 : f32 to vector<8x32xf32>
    %127 = arith.divf %126, %125 : vector<8x32xf32>
    %128 = vector.extract_strided_slice %117 {offsets = [0, 32], sizes = [8, 32], strides = [1, 1]} : vector<8x96xf32> to vector<8x32xf32>
    %129 = vector.extract_strided_slice %116 {offsets = [0, 32], sizes = [8, 32], strides = [1, 1]} : vector<8x96xf32> to vector<8x32xf32>
    %130 = arith.addf %128, %129 : vector<8x32xf32>
    %cst_50 = arith.constant 0.000000e+00 : f32
    %131 = vector.broadcast %cst_50 : f32 to vector<8x32xf32>
    %132 = arith.subf %131, %130 : vector<8x32xf32>
    %133 = math.exp %132 : vector<8x32xf32>
    %cst_51 = arith.constant 1.000000e+00 : f32
    %134 = vector.broadcast %cst_51 : f32 to vector<8x32xf32>
    %135 = arith.addf %134, %133 : vector<8x32xf32>
    %cst_52 = arith.constant 1.000000e+00 : f32
    %136 = vector.broadcast %cst_52 : f32 to vector<8x32xf32>
    %137 = arith.divf %136, %135 : vector<8x32xf32>
    %138 = vector.extract_strided_slice %117 {offsets = [0, 64], sizes = [8, 32], strides = [1, 1]} : vector<8x96xf32> to vector<8x32xf32>
    %139 = vector.extract_strided_slice %116 {offsets = [0, 64], sizes = [8, 32], strides = [1, 1]} : vector<8x96xf32> to vector<8x32xf32>
    %140 = arith.mulf %127, %139 : vector<8x32xf32>
    %141 = arith.addf %138, %140 : vector<8x32xf32>
    %142 = math.tanh %141 : vector<8x32xf32>
    %cst_53 = arith.constant 1.000000e+00 : f32
    %143 = vector.broadcast %cst_53 : f32 to vector<8x32xf32>
    %144 = arith.subf %143, %137 : vector<8x32xf32>
    %145 = arith.mulf %144, %142 : vector<8x32xf32>
    %146 = arith.mulf %137, %113 : vector<8x32xf32>
    %147 = arith.addf %145, %146 : vector<8x32xf32>
    %c16_54 = arith.constant 16 : index
    %c0_55 = arith.constant 0 : index
    %148 = vector.load %arg4[%c16_54, %c0_55] : memref<96x32xf32, #tpu.memory_space<vmem>>, vector<8x32xf32>
    tpu.vector_store %arg4[%c16_54, %c0_55], %147 {strides = array<i32>} : memref<96x32xf32, #tpu.memory_space<vmem>>, vector<8x32xf32>,
    %cst_56 = arith.constant dense<0.000000e+00> : vector<8x96xf32>
    %149 = tpu.matmul %147, %5, %cst_56 {dimension_numbers = #tpu.dot_dimension_numbers<[1], [0], [0], [1], [0, 0, 1, 1], [], []>} : vector<8x32xf32>, vector<32x96xf32>, vector<8x96xf32> -> vector<8x96xf32>
    %150 = arith.addf %149, %42 : vector<8x96xf32>
    %151 = vector.extract_strided_slice %23 {offsets = [24, 0], sizes = [8, 96], strides = [1, 1]} : vector<64x96xf32> to vector<8x96xf32>
    %152 = vector.extract_strided_slice %151 {offsets = [0, 0], sizes = [8, 32], strides = [1, 1]} : vector<8x96xf32> to vector<8x32xf32>
    %153 = vector.extract_strided_slice %150 {offsets = [0, 0], sizes = [8, 32], strides = [1, 1]} : vector<8x96xf32> to vector<8x32xf32>
    %154 = arith.addf %152, %153 : vector<8x32xf32>
    %cst_57 = arith.constant 0.000000e+00 : f32
    %155 = vector.broadcast %cst_57 : f32 to vector<8x32xf32>
    %156 = arith.subf %155, %154 : vector<8x32xf32>
    %157 = math.exp %156 : vector<8x32xf32>
    %cst_58 = arith.constant 1.000000e+00 : f32
    %158 = vector.broadcast %cst_58 : f32 to vector<8x32xf32>
    %159 = arith.addf %158, %157 : vector<8x32xf32>
    %cst_59 = arith.constant 1.000000e+00 : f32
    %160 = vector.broadcast %cst_59 : f32 to vector<8x32xf32>
    %161 = arith.divf %160, %159 : vector<8x32xf32>
    %162 = vector.extract_strided_slice %151 {offsets = [0, 32], sizes = [8, 32], strides = [1, 1]} : vector<8x96xf32> to vector<8x32xf32>
    %163 = vector.extract_strided_slice %150 {offsets = [0, 32], sizes = [8, 32], strides = [1, 1]} : vector<8x96xf32> to vector<8x32xf32>
    %164 = arith.addf %162, %163 : vector<8x32xf32>
    %cst_60 = arith.constant 0.000000e+00 : f32
    %165 = vector.broadcast %cst_60 : f32 to vector<8x32xf32>
    %166 = arith.subf %165, %164 : vector<8x32xf32>
    %167 = math.exp %166 : vector<8x32xf32>
    %cst_61 = arith.constant 1.000000e+00 : f32
    %168 = vector.broadcast %cst_61 : f32 to vector<8x32xf32>
    %169 = arith.addf %168, %167 : vector<8x32xf32>
    %cst_62 = arith.constant 1.000000e+00 : f32
    %170 = vector.broadcast %cst_62 : f32 to vector<8x32xf32>
    %171 = arith.divf %170, %169 : vector<8x32xf32>
    %172 = vector.extract_strided_slice %151 {offsets = [0, 64], sizes = [8, 32], strides = [1, 1]} : vector<8x96xf32> to vector<8x32xf32>
    %173 = vector.extract_strided_slice %150 {offsets = [0, 64], sizes = [8, 32], strides = [1, 1]} : vector<8x96xf32> to vector<8x32xf32>
    %174 = arith.mulf %161, %173 : vector<8x32xf32>
    %175 = arith.addf %172, %174 : vector<8x32xf32>
    %176 = math.tanh %175 : vector<8x32xf32>
    %cst_63 = arith.constant 1.000000e+00 : f32
    %177 = vector.broadcast %cst_63 : f32 to vector<8x32xf32>
    %178 = arith.subf %177, %171 : vector<8x32xf32>
    %179 = arith.mulf %178, %176 : vector<8x32xf32>
    %180 = arith.mulf %171, %147 : vector<8x32xf32>
    %181 = arith.addf %179, %180 : vector<8x32xf32>
    %c24 = arith.constant 24 : index
    %c0_64 = arith.constant 0 : index
    %182 = vector.load %arg4[%c24, %c0_64] : memref<96x32xf32, #tpu.memory_space<vmem>>, vector<8x32xf32>
    tpu.vector_store %arg4[%c24, %c0_64], %181 {strides = array<i32>} : memref<96x32xf32, #tpu.memory_space<vmem>>, vector<8x32xf32>,
    %cst_65 = arith.constant dense<0.000000e+00> : vector<8x96xf32>
    %183 = tpu.matmul %181, %5, %cst_65 {dimension_numbers = #tpu.dot_dimension_numbers<[1], [0], [0], [1], [0, 0, 1, 1], [], []>} : vector<8x32xf32>, vector<32x96xf32>, vector<8x96xf32> -> vector<8x96xf32>
    %184 = arith.addf %183, %42 : vector<8x96xf32>
    %185 = vector.extract_strided_slice %23 {offsets = [32, 0], sizes = [8, 96], strides = [1, 1]} : vector<64x96xf32> to vector<8x96xf32>
    %186 = vector.extract_strided_slice %185 {offsets = [0, 0], sizes = [8, 32], strides = [1, 1]} : vector<8x96xf32> to vector<8x32xf32>
    %187 = vector.extract_strided_slice %184 {offsets = [0, 0], sizes = [8, 32], strides = [1, 1]} : vector<8x96xf32> to vector<8x32xf32>
    %188 = arith.addf %186, %187 : vector<8x32xf32>
    %cst_66 = arith.constant 0.000000e+00 : f32
    %189 = vector.broadcast %cst_66 : f32 to vector<8x32xf32>
    %190 = arith.subf %189, %188 : vector<8x32xf32>
    %191 = math.exp %190 : vector<8x32xf32>
    %cst_67 = arith.constant 1.000000e+00 : f32
    %192 = vector.broadcast %cst_67 : f32 to vector<8x32xf32>
    %193 = arith.addf %192, %191 : vector<8x32xf32>
    %cst_68 = arith.constant 1.000000e+00 : f32
    %194 = vector.broadcast %cst_68 : f32 to vector<8x32xf32>
    %195 = arith.divf %194, %193 : vector<8x32xf32>
    %196 = vector.extract_strided_slice %185 {offsets = [0, 32], sizes = [8, 32], strides = [1, 1]} : vector<8x96xf32> to vector<8x32xf32>
    %197 = vector.extract_strided_slice %184 {offsets = [0, 32], sizes = [8, 32], strides = [1, 1]} : vector<8x96xf32> to vector<8x32xf32>
    %198 = arith.addf %196, %197 : vector<8x32xf32>
    %cst_69 = arith.constant 0.000000e+00 : f32
    %199 = vector.broadcast %cst_69 : f32 to vector<8x32xf32>
    %200 = arith.subf %199, %198 : vector<8x32xf32>
    %201 = math.exp %200 : vector<8x32xf32>
    %cst_70 = arith.constant 1.000000e+00 : f32
    %202 = vector.broadcast %cst_70 : f32 to vector<8x32xf32>
    %203 = arith.addf %202, %201 : vector<8x32xf32>
    %cst_71 = arith.constant 1.000000e+00 : f32
    %204 = vector.broadcast %cst_71 : f32 to vector<8x32xf32>
    %205 = arith.divf %204, %203 : vector<8x32xf32>
    %206 = vector.extract_strided_slice %185 {offsets = [0, 64], sizes = [8, 32], strides = [1, 1]} : vector<8x96xf32> to vector<8x32xf32>
    %207 = vector.extract_strided_slice %184 {offsets = [0, 64], sizes = [8, 32], strides = [1, 1]} : vector<8x96xf32> to vector<8x32xf32>
    %208 = arith.mulf %195, %207 : vector<8x32xf32>
    %209 = arith.addf %206, %208 : vector<8x32xf32>
    %210 = math.tanh %209 : vector<8x32xf32>
    %cst_72 = arith.constant 1.000000e+00 : f32
    %211 = vector.broadcast %cst_72 : f32 to vector<8x32xf32>
    %212 = arith.subf %211, %205 : vector<8x32xf32>
    %213 = arith.mulf %212, %210 : vector<8x32xf32>
    %214 = arith.mulf %205, %181 : vector<8x32xf32>
    %215 = arith.addf %213, %214 : vector<8x32xf32>
    %c32 = arith.constant 32 : index
    %c0_73 = arith.constant 0 : index
    %216 = vector.load %arg4[%c32, %c0_73] : memref<96x32xf32, #tpu.memory_space<vmem>>, vector<8x32xf32>
    tpu.vector_store %arg4[%c32, %c0_73], %215 {strides = array<i32>} : memref<96x32xf32, #tpu.memory_space<vmem>>, vector<8x32xf32>,
    %cst_74 = arith.constant dense<0.000000e+00> : vector<8x96xf32>
    %217 = tpu.matmul %215, %5, %cst_74 {dimension_numbers = #tpu.dot_dimension_numbers<[1], [0], [0], [1], [0, 0, 1, 1], [], []>} : vector<8x32xf32>, vector<32x96xf32>, vector<8x96xf32> -> vector<8x96xf32>
    %218 = arith.addf %217, %42 : vector<8x96xf32>
    %219 = vector.extract_strided_slice %23 {offsets = [40, 0], sizes = [8, 96], strides = [1, 1]} : vector<64x96xf32> to vector<8x96xf32>
    %220 = vector.extract_strided_slice %219 {offsets = [0, 0], sizes = [8, 32], strides = [1, 1]} : vector<8x96xf32> to vector<8x32xf32>
    %221 = vector.extract_strided_slice %218 {offsets = [0, 0], sizes = [8, 32], strides = [1, 1]} : vector<8x96xf32> to vector<8x32xf32>
    %222 = arith.addf %220, %221 : vector<8x32xf32>
    %cst_75 = arith.constant 0.000000e+00 : f32
    %223 = vector.broadcast %cst_75 : f32 to vector<8x32xf32>
    %224 = arith.subf %223, %222 : vector<8x32xf32>
    %225 = math.exp %224 : vector<8x32xf32>
    %cst_76 = arith.constant 1.000000e+00 : f32
    %226 = vector.broadcast %cst_76 : f32 to vector<8x32xf32>
    %227 = arith.addf %226, %225 : vector<8x32xf32>
    %cst_77 = arith.constant 1.000000e+00 : f32
    %228 = vector.broadcast %cst_77 : f32 to vector<8x32xf32>
    %229 = arith.divf %228, %227 : vector<8x32xf32>
    %230 = vector.extract_strided_slice %219 {offsets = [0, 32], sizes = [8, 32], strides = [1, 1]} : vector<8x96xf32> to vector<8x32xf32>
    %231 = vector.extract_strided_slice %218 {offsets = [0, 32], sizes = [8, 32], strides = [1, 1]} : vector<8x96xf32> to vector<8x32xf32>
    %232 = arith.addf %230, %231 : vector<8x32xf32>
    %cst_78 = arith.constant 0.000000e+00 : f32
    %233 = vector.broadcast %cst_78 : f32 to vector<8x32xf32>
    %234 = arith.subf %233, %232 : vector<8x32xf32>
    %235 = math.exp %234 : vector<8x32xf32>
    %cst_79 = arith.constant 1.000000e+00 : f32
    %236 = vector.broadcast %cst_79 : f32 to vector<8x32xf32>
    %237 = arith.addf %236, %235 : vector<8x32xf32>
    %cst_80 = arith.constant 1.000000e+00 : f32
    %238 = vector.broadcast %cst_80 : f32 to vector<8x32xf32>
    %239 = arith.divf %238, %237 : vector<8x32xf32>
    %240 = vector.extract_strided_slice %219 {offsets = [0, 64], sizes = [8, 32], strides = [1, 1]} : vector<8x96xf32> to vector<8x32xf32>
    %241 = vector.extract_strided_slice %218 {offsets = [0, 64], sizes = [8, 32], strides = [1, 1]} : vector<8x96xf32> to vector<8x32xf32>
    %242 = arith.mulf %229, %241 : vector<8x32xf32>
    %243 = arith.addf %240, %242 : vector<8x32xf32>
    %244 = math.tanh %243 : vector<8x32xf32>
    %cst_81 = arith.constant 1.000000e+00 : f32
    %245 = vector.broadcast %cst_81 : f32 to vector<8x32xf32>
    %246 = arith.subf %245, %239 : vector<8x32xf32>
    %247 = arith.mulf %246, %244 : vector<8x32xf32>
    %248 = arith.mulf %239, %215 : vector<8x32xf32>
    %249 = arith.addf %247, %248 : vector<8x32xf32>
    %c40 = arith.constant 40 : index
    %c0_82 = arith.constant 0 : index
    %250 = vector.load %arg4[%c40, %c0_82] : memref<96x32xf32, #tpu.memory_space<vmem>>, vector<8x32xf32>
    tpu.vector_store %arg4[%c40, %c0_82], %249 {strides = array<i32>} : memref<96x32xf32, #tpu.memory_space<vmem>>, vector<8x32xf32>,
    %cst_83 = arith.constant dense<0.000000e+00> : vector<8x96xf32>
    %251 = tpu.matmul %249, %5, %cst_83 {dimension_numbers = #tpu.dot_dimension_numbers<[1], [0], [0], [1], [0, 0, 1, 1], [], []>} : vector<8x32xf32>, vector<32x96xf32>, vector<8x96xf32> -> vector<8x96xf32>
    %252 = arith.addf %251, %42 : vector<8x96xf32>
    %253 = vector.extract_strided_slice %23 {offsets = [48, 0], sizes = [8, 96], strides = [1, 1]} : vector<64x96xf32> to vector<8x96xf32>
    %254 = vector.extract_strided_slice %253 {offsets = [0, 0], sizes = [8, 32], strides = [1, 1]} : vector<8x96xf32> to vector<8x32xf32>
    %255 = vector.extract_strided_slice %252 {offsets = [0, 0], sizes = [8, 32], strides = [1, 1]} : vector<8x96xf32> to vector<8x32xf32>
    %256 = arith.addf %254, %255 : vector<8x32xf32>
    %cst_84 = arith.constant 0.000000e+00 : f32
    %257 = vector.broadcast %cst_84 : f32 to vector<8x32xf32>
    %258 = arith.subf %257, %256 : vector<8x32xf32>
    %259 = math.exp %258 : vector<8x32xf32>
    %cst_85 = arith.constant 1.000000e+00 : f32
    %260 = vector.broadcast %cst_85 : f32 to vector<8x32xf32>
    %261 = arith.addf %260, %259 : vector<8x32xf32>
    %cst_86 = arith.constant 1.000000e+00 : f32
    %262 = vector.broadcast %cst_86 : f32 to vector<8x32xf32>
    %263 = arith.divf %262, %261 : vector<8x32xf32>
    %264 = vector.extract_strided_slice %253 {offsets = [0, 32], sizes = [8, 32], strides = [1, 1]} : vector<8x96xf32> to vector<8x32xf32>
    %265 = vector.extract_strided_slice %252 {offsets = [0, 32], sizes = [8, 32], strides = [1, 1]} : vector<8x96xf32> to vector<8x32xf32>
    %266 = arith.addf %264, %265 : vector<8x32xf32>
    %cst_87 = arith.constant 0.000000e+00 : f32
    %267 = vector.broadcast %cst_87 : f32 to vector<8x32xf32>
    %268 = arith.subf %267, %266 : vector<8x32xf32>
    %269 = math.exp %268 : vector<8x32xf32>
    %cst_88 = arith.constant 1.000000e+00 : f32
    %270 = vector.broadcast %cst_88 : f32 to vector<8x32xf32>
    %271 = arith.addf %270, %269 : vector<8x32xf32>
    %cst_89 = arith.constant 1.000000e+00 : f32
    %272 = vector.broadcast %cst_89 : f32 to vector<8x32xf32>
    %273 = arith.divf %272, %271 : vector<8x32xf32>
    %274 = vector.extract_strided_slice %253 {offsets = [0, 64], sizes = [8, 32], strides = [1, 1]} : vector<8x96xf32> to vector<8x32xf32>
    %275 = vector.extract_strided_slice %252 {offsets = [0, 64], sizes = [8, 32], strides = [1, 1]} : vector<8x96xf32> to vector<8x32xf32>
    %276 = arith.mulf %263, %275 : vector<8x32xf32>
    %277 = arith.addf %274, %276 : vector<8x32xf32>
    %278 = math.tanh %277 : vector<8x32xf32>
    %cst_90 = arith.constant 1.000000e+00 : f32
    %279 = vector.broadcast %cst_90 : f32 to vector<8x32xf32>
    %280 = arith.subf %279, %273 : vector<8x32xf32>
    %281 = arith.mulf %280, %278 : vector<8x32xf32>
    %282 = arith.mulf %273, %249 : vector<8x32xf32>
    %283 = arith.addf %281, %282 : vector<8x32xf32>
    %c48_91 = arith.constant 48 : index
    %c0_92 = arith.constant 0 : index
    %284 = vector.load %arg4[%c48_91, %c0_92] : memref<96x32xf32, #tpu.memory_space<vmem>>, vector<8x32xf32>
    tpu.vector_store %arg4[%c48_91, %c0_92], %283 {strides = array<i32>} : memref<96x32xf32, #tpu.memory_space<vmem>>, vector<8x32xf32>,
    %cst_93 = arith.constant dense<0.000000e+00> : vector<8x96xf32>
    %285 = tpu.matmul %283, %5, %cst_93 {dimension_numbers = #tpu.dot_dimension_numbers<[1], [0], [0], [1], [0, 0, 1, 1], [], []>} : vector<8x32xf32>, vector<32x96xf32>, vector<8x96xf32> -> vector<8x96xf32>
    %286 = arith.addf %285, %42 : vector<8x96xf32>
    %287 = vector.extract_strided_slice %23 {offsets = [56, 0], sizes = [8, 96], strides = [1, 1]} : vector<64x96xf32> to vector<8x96xf32>
    %288 = vector.extract_strided_slice %287 {offsets = [0, 0], sizes = [8, 32], strides = [1, 1]} : vector<8x96xf32> to vector<8x32xf32>
    %289 = vector.extract_strided_slice %286 {offsets = [0, 0], sizes = [8, 32], strides = [1, 1]} : vector<8x96xf32> to vector<8x32xf32>
    %290 = arith.addf %288, %289 : vector<8x32xf32>
    %cst_94 = arith.constant 0.000000e+00 : f32
    %291 = vector.broadcast %cst_94 : f32 to vector<8x32xf32>
    %292 = arith.subf %291, %290 : vector<8x32xf32>
    %293 = math.exp %292 : vector<8x32xf32>
    %cst_95 = arith.constant 1.000000e+00 : f32
    %294 = vector.broadcast %cst_95 : f32 to vector<8x32xf32>
    %295 = arith.addf %294, %293 : vector<8x32xf32>
    %cst_96 = arith.constant 1.000000e+00 : f32
    %296 = vector.broadcast %cst_96 : f32 to vector<8x32xf32>
    %297 = arith.divf %296, %295 : vector<8x32xf32>
    %298 = vector.extract_strided_slice %287 {offsets = [0, 32], sizes = [8, 32], strides = [1, 1]} : vector<8x96xf32> to vector<8x32xf32>
    %299 = vector.extract_strided_slice %286 {offsets = [0, 32], sizes = [8, 32], strides = [1, 1]} : vector<8x96xf32> to vector<8x32xf32>
    %300 = arith.addf %298, %299 : vector<8x32xf32>
    %cst_97 = arith.constant 0.000000e+00 : f32
    %301 = vector.broadcast %cst_97 : f32 to vector<8x32xf32>
    %302 = arith.subf %301, %300 : vector<8x32xf32>
    %303 = math.exp %302 : vector<8x32xf32>
    %cst_98 = arith.constant 1.000000e+00 : f32
    %304 = vector.broadcast %cst_98 : f32 to vector<8x32xf32>
    %305 = arith.addf %304, %303 : vector<8x32xf32>
    %cst_99 = arith.constant 1.000000e+00 : f32
    %306 = vector.broadcast %cst_99 : f32 to vector<8x32xf32>
    %307 = arith.divf %306, %305 : vector<8x32xf32>
    %308 = vector.extract_strided_slice %287 {offsets = [0, 64], sizes = [8, 32], strides = [1, 1]} : vector<8x96xf32> to vector<8x32xf32>
    %309 = vector.extract_strided_slice %286 {offsets = [0, 64], sizes = [8, 32], strides = [1, 1]} : vector<8x96xf32> to vector<8x32xf32>
    %310 = arith.mulf %297, %309 : vector<8x32xf32>
    %311 = arith.addf %308, %310 : vector<8x32xf32>
    %312 = math.tanh %311 : vector<8x32xf32>
    %cst_100 = arith.constant 1.000000e+00 : f32
    %313 = vector.broadcast %cst_100 : f32 to vector<8x32xf32>
    %314 = arith.subf %313, %307 : vector<8x32xf32>
    %315 = arith.mulf %314, %312 : vector<8x32xf32>
    %316 = arith.mulf %307, %283 : vector<8x32xf32>
    %317 = arith.addf %315, %316 : vector<8x32xf32>
    %c56 = arith.constant 56 : index
    %c0_101 = arith.constant 0 : index
    %318 = vector.load %arg4[%c56, %c0_101] : memref<96x32xf32, #tpu.memory_space<vmem>>, vector<8x32xf32>
    tpu.vector_store %arg4[%c56, %c0_101], %317 {strides = array<i32>} : memref<96x32xf32, #tpu.memory_space<vmem>>, vector<8x32xf32>,
    %cst_102 = arith.constant dense<0.000000e+00> : vector<8x96xf32>
    %319 = tpu.matmul %317, %6, %cst_102 {dimension_numbers = #tpu.dot_dimension_numbers<[1], [0], [0], [1], [0, 0, 1, 1], [], []>} : vector<8x32xf32>, vector<32x96xf32>, vector<8x96xf32> -> vector<8x96xf32>
    %320 = arith.addf %319, %45 : vector<8x96xf32>
    %321 = vector.extract_strided_slice %27 {offsets = [0, 0], sizes = [8, 96], strides = [1, 1]} : vector<32x96xf32> to vector<8x96xf32>
    %322 = vector.extract_strided_slice %321 {offsets = [0, 0], sizes = [8, 32], strides = [1, 1]} : vector<8x96xf32> to vector<8x32xf32>
    %323 = vector.extract_strided_slice %320 {offsets = [0, 0], sizes = [8, 32], strides = [1, 1]} : vector<8x96xf32> to vector<8x32xf32>
    %324 = arith.addf %322, %323 : vector<8x32xf32>
    %cst_103 = arith.constant 0.000000e+00 : f32
    %325 = vector.broadcast %cst_103 : f32 to vector<8x32xf32>
    %326 = arith.subf %325, %324 : vector<8x32xf32>
    %327 = math.exp %326 : vector<8x32xf32>
    %cst_104 = arith.constant 1.000000e+00 : f32
    %328 = vector.broadcast %cst_104 : f32 to vector<8x32xf32>
    %329 = arith.addf %328, %327 : vector<8x32xf32>
    %cst_105 = arith.constant 1.000000e+00 : f32
    %330 = vector.broadcast %cst_105 : f32 to vector<8x32xf32>
    %331 = arith.divf %330, %329 : vector<8x32xf32>
    %332 = vector.extract_strided_slice %321 {offsets = [0, 32], sizes = [8, 32], strides = [1, 1]} : vector<8x96xf32> to vector<8x32xf32>
    %333 = vector.extract_strided_slice %320 {offsets = [0, 32], sizes = [8, 32], strides = [1, 1]} : vector<8x96xf32> to vector<8x32xf32>
    %334 = arith.addf %332, %333 : vector<8x32xf32>
    %cst_106 = arith.constant 0.000000e+00 : f32
    %335 = vector.broadcast %cst_106 : f32 to vector<8x32xf32>
    %336 = arith.subf %335, %334 : vector<8x32xf32>
    %337 = math.exp %336 : vector<8x32xf32>
    %cst_107 = arith.constant 1.000000e+00 : f32
    %338 = vector.broadcast %cst_107 : f32 to vector<8x32xf32>
    %339 = arith.addf %338, %337 : vector<8x32xf32>
    %cst_108 = arith.constant 1.000000e+00 : f32
    %340 = vector.broadcast %cst_108 : f32 to vector<8x32xf32>
    %341 = arith.divf %340, %339 : vector<8x32xf32>
    %342 = vector.extract_strided_slice %321 {offsets = [0, 64], sizes = [8, 32], strides = [1, 1]} : vector<8x96xf32> to vector<8x32xf32>
    %343 = vector.extract_strided_slice %320 {offsets = [0, 64], sizes = [8, 32], strides = [1, 1]} : vector<8x96xf32> to vector<8x32xf32>
    %344 = arith.mulf %331, %343 : vector<8x32xf32>
    %345 = arith.addf %342, %344 : vector<8x32xf32>
    %346 = math.tanh %345 : vector<8x32xf32>
    %cst_109 = arith.constant 1.000000e+00 : f32
    %347 = vector.broadcast %cst_109 : f32 to vector<8x32xf32>
    %348 = arith.subf %347, %341 : vector<8x32xf32>
    %349 = arith.mulf %348, %346 : vector<8x32xf32>
    %350 = arith.mulf %341, %317 : vector<8x32xf32>
    %351 = arith.addf %349, %350 : vector<8x32xf32>
    %c64_110 = arith.constant 64 : index
    %c0_111 = arith.constant 0 : index
    %352 = vector.load %arg4[%c64_110, %c0_111] : memref<96x32xf32, #tpu.memory_space<vmem>>, vector<8x32xf32>
    tpu.vector_store %arg4[%c64_110, %c0_111], %351 {strides = array<i32>} : memref<96x32xf32, #tpu.memory_space<vmem>>, vector<8x32xf32>,
    %cst_112 = arith.constant dense<0.000000e+00> : vector<8x96xf32>
    %353 = tpu.matmul %351, %6, %cst_112 {dimension_numbers = #tpu.dot_dimension_numbers<[1], [0], [0], [1], [0, 0, 1, 1], [], []>} : vector<8x32xf32>, vector<32x96xf32>, vector<8x96xf32> -> vector<8x96xf32>
    %354 = arith.addf %353, %45 : vector<8x96xf32>
    %355 = vector.extract_strided_slice %27 {offsets = [8, 0], sizes = [8, 96], strides = [1, 1]} : vector<32x96xf32> to vector<8x96xf32>
    %356 = vector.extract_strided_slice %355 {offsets = [0, 0], sizes = [8, 32], strides = [1, 1]} : vector<8x96xf32> to vector<8x32xf32>
    %357 = vector.extract_strided_slice %354 {offsets = [0, 0], sizes = [8, 32], strides = [1, 1]} : vector<8x96xf32> to vector<8x32xf32>
    %358 = arith.addf %356, %357 : vector<8x32xf32>
    %cst_113 = arith.constant 0.000000e+00 : f32
    %359 = vector.broadcast %cst_113 : f32 to vector<8x32xf32>
    %360 = arith.subf %359, %358 : vector<8x32xf32>
    %361 = math.exp %360 : vector<8x32xf32>
    %cst_114 = arith.constant 1.000000e+00 : f32
    %362 = vector.broadcast %cst_114 : f32 to vector<8x32xf32>
    %363 = arith.addf %362, %361 : vector<8x32xf32>
    %cst_115 = arith.constant 1.000000e+00 : f32
    %364 = vector.broadcast %cst_115 : f32 to vector<8x32xf32>
    %365 = arith.divf %364, %363 : vector<8x32xf32>
    %366 = vector.extract_strided_slice %355 {offsets = [0, 32], sizes = [8, 32], strides = [1, 1]} : vector<8x96xf32> to vector<8x32xf32>
    %367 = vector.extract_strided_slice %354 {offsets = [0, 32], sizes = [8, 32], strides = [1, 1]} : vector<8x96xf32> to vector<8x32xf32>
    %368 = arith.addf %366, %367 : vector<8x32xf32>
    %cst_116 = arith.constant 0.000000e+00 : f32
    %369 = vector.broadcast %cst_116 : f32 to vector<8x32xf32>
    %370 = arith.subf %369, %368 : vector<8x32xf32>
    %371 = math.exp %370 : vector<8x32xf32>
    %cst_117 = arith.constant 1.000000e+00 : f32
    %372 = vector.broadcast %cst_117 : f32 to vector<8x32xf32>
    %373 = arith.addf %372, %371 : vector<8x32xf32>
    %cst_118 = arith.constant 1.000000e+00 : f32
    %374 = vector.broadcast %cst_118 : f32 to vector<8x32xf32>
    %375 = arith.divf %374, %373 : vector<8x32xf32>
    %376 = vector.extract_strided_slice %355 {offsets = [0, 64], sizes = [8, 32], strides = [1, 1]} : vector<8x96xf32> to vector<8x32xf32>
    %377 = vector.extract_strided_slice %354 {offsets = [0, 64], sizes = [8, 32], strides = [1, 1]} : vector<8x96xf32> to vector<8x32xf32>
    %378 = arith.mulf %365, %377 : vector<8x32xf32>
    %379 = arith.addf %376, %378 : vector<8x32xf32>
    %380 = math.tanh %379 : vector<8x32xf32>
    %cst_119 = arith.constant 1.000000e+00 : f32
    %381 = vector.broadcast %cst_119 : f32 to vector<8x32xf32>
    %382 = arith.subf %381, %375 : vector<8x32xf32>
    %383 = arith.mulf %382, %380 : vector<8x32xf32>
    %384 = arith.mulf %375, %351 : vector<8x32xf32>
    %385 = arith.addf %383, %384 : vector<8x32xf32>
    %c72 = arith.constant 72 : index
    %c0_120 = arith.constant 0 : index
    %386 = vector.load %arg4[%c72, %c0_120] : memref<96x32xf32, #tpu.memory_space<vmem>>, vector<8x32xf32>
    tpu.vector_store %arg4[%c72, %c0_120], %385 {strides = array<i32>} : memref<96x32xf32, #tpu.memory_space<vmem>>, vector<8x32xf32>,
    %cst_121 = arith.constant dense<0.000000e+00> : vector<8x96xf32>
    %387 = tpu.matmul %385, %6, %cst_121 {dimension_numbers = #tpu.dot_dimension_numbers<[1], [0], [0], [1], [0, 0, 1, 1], [], []>} : vector<8x32xf32>, vector<32x96xf32>, vector<8x96xf32> -> vector<8x96xf32>
    %388 = arith.addf %387, %45 : vector<8x96xf32>
    %389 = vector.extract_strided_slice %27 {offsets = [16, 0], sizes = [8, 96], strides = [1, 1]} : vector<32x96xf32> to vector<8x96xf32>
    %390 = vector.extract_strided_slice %389 {offsets = [0, 0], sizes = [8, 32], strides = [1, 1]} : vector<8x96xf32> to vector<8x32xf32>
    %391 = vector.extract_strided_slice %388 {offsets = [0, 0], sizes = [8, 32], strides = [1, 1]} : vector<8x96xf32> to vector<8x32xf32>
    %392 = arith.addf %390, %391 : vector<8x32xf32>
    %cst_122 = arith.constant 0.000000e+00 : f32
    %393 = vector.broadcast %cst_122 : f32 to vector<8x32xf32>
    %394 = arith.subf %393, %392 : vector<8x32xf32>
    %395 = math.exp %394 : vector<8x32xf32>
    %cst_123 = arith.constant 1.000000e+00 : f32
    %396 = vector.broadcast %cst_123 : f32 to vector<8x32xf32>
    %397 = arith.addf %396, %395 : vector<8x32xf32>
    %cst_124 = arith.constant 1.000000e+00 : f32
    %398 = vector.broadcast %cst_124 : f32 to vector<8x32xf32>
    %399 = arith.divf %398, %397 : vector<8x32xf32>
    %400 = vector.extract_strided_slice %389 {offsets = [0, 32], sizes = [8, 32], strides = [1, 1]} : vector<8x96xf32> to vector<8x32xf32>
    %401 = vector.extract_strided_slice %388 {offsets = [0, 32], sizes = [8, 32], strides = [1, 1]} : vector<8x96xf32> to vector<8x32xf32>
    %402 = arith.addf %400, %401 : vector<8x32xf32>
    %cst_125 = arith.constant 0.000000e+00 : f32
    %403 = vector.broadcast %cst_125 : f32 to vector<8x32xf32>
    %404 = arith.subf %403, %402 : vector<8x32xf32>
    %405 = math.exp %404 : vector<8x32xf32>
    %cst_126 = arith.constant 1.000000e+00 : f32
    %406 = vector.broadcast %cst_126 : f32 to vector<8x32xf32>
    %407 = arith.addf %406, %405 : vector<8x32xf32>
    %cst_127 = arith.constant 1.000000e+00 : f32
    %408 = vector.broadcast %cst_127 : f32 to vector<8x32xf32>
    %409 = arith.divf %408, %407 : vector<8x32xf32>
    %410 = vector.extract_strided_slice %389 {offsets = [0, 64], sizes = [8, 32], strides = [1, 1]} : vector<8x96xf32> to vector<8x32xf32>
    %411 = vector.extract_strided_slice %388 {offsets = [0, 64], sizes = [8, 32], strides = [1, 1]} : vector<8x96xf32> to vector<8x32xf32>
    %412 = arith.mulf %399, %411 : vector<8x32xf32>
    %413 = arith.addf %410, %412 : vector<8x32xf32>
    %414 = math.tanh %413 : vector<8x32xf32>
    %cst_128 = arith.constant 1.000000e+00 : f32
    %415 = vector.broadcast %cst_128 : f32 to vector<8x32xf32>
    %416 = arith.subf %415, %409 : vector<8x32xf32>
    %417 = arith.mulf %416, %414 : vector<8x32xf32>
    %418 = arith.mulf %409, %385 : vector<8x32xf32>
    %419 = arith.addf %417, %418 : vector<8x32xf32>
    %c80_129 = arith.constant 80 : index
    %c0_130 = arith.constant 0 : index
    %420 = vector.load %arg4[%c80_129, %c0_130] : memref<96x32xf32, #tpu.memory_space<vmem>>, vector<8x32xf32>
    tpu.vector_store %arg4[%c80_129, %c0_130], %419 {strides = array<i32>} : memref<96x32xf32, #tpu.memory_space<vmem>>, vector<8x32xf32>,
    %cst_131 = arith.constant dense<0.000000e+00> : vector<8x96xf32>
    %421 = tpu.matmul %419, %6, %cst_131 {dimension_numbers = #tpu.dot_dimension_numbers<[1], [0], [0], [1], [0, 0, 1, 1], [], []>} : vector<8x32xf32>, vector<32x96xf32>, vector<8x96xf32> -> vector<8x96xf32>
    %422 = arith.addf %421, %45 : vector<8x96xf32>
    %423 = vector.extract_strided_slice %27 {offsets = [24, 0], sizes = [8, 96], strides = [1, 1]} : vector<32x96xf32> to vector<8x96xf32>
    %424 = vector.extract_strided_slice %423 {offsets = [0, 0], sizes = [8, 32], strides = [1, 1]} : vector<8x96xf32> to vector<8x32xf32>
    %425 = vector.extract_strided_slice %422 {offsets = [0, 0], sizes = [8, 32], strides = [1, 1]} : vector<8x96xf32> to vector<8x32xf32>
    %426 = arith.addf %424, %425 : vector<8x32xf32>
    %cst_132 = arith.constant 0.000000e+00 : f32
    %427 = vector.broadcast %cst_132 : f32 to vector<8x32xf32>
    %428 = arith.subf %427, %426 : vector<8x32xf32>
    %429 = math.exp %428 : vector<8x32xf32>
    %cst_133 = arith.constant 1.000000e+00 : f32
    %430 = vector.broadcast %cst_133 : f32 to vector<8x32xf32>
    %431 = arith.addf %430, %429 : vector<8x32xf32>
    %cst_134 = arith.constant 1.000000e+00 : f32
    %432 = vector.broadcast %cst_134 : f32 to vector<8x32xf32>
    %433 = arith.divf %432, %431 : vector<8x32xf32>
    %434 = vector.extract_strided_slice %423 {offsets = [0, 32], sizes = [8, 32], strides = [1, 1]} : vector<8x96xf32> to vector<8x32xf32>
    %435 = vector.extract_strided_slice %422 {offsets = [0, 32], sizes = [8, 32], strides = [1, 1]} : vector<8x96xf32> to vector<8x32xf32>
    %436 = arith.addf %434, %435 : vector<8x32xf32>
    %cst_135 = arith.constant 0.000000e+00 : f32
    %437 = vector.broadcast %cst_135 : f32 to vector<8x32xf32>
    %438 = arith.subf %437, %436 : vector<8x32xf32>
    %439 = math.exp %438 : vector<8x32xf32>
    %cst_136 = arith.constant 1.000000e+00 : f32
    %440 = vector.broadcast %cst_136 : f32 to vector<8x32xf32>
    %441 = arith.addf %440, %439 : vector<8x32xf32>
    %cst_137 = arith.constant 1.000000e+00 : f32
    %442 = vector.broadcast %cst_137 : f32 to vector<8x32xf32>
    %443 = arith.divf %442, %441 : vector<8x32xf32>
    %444 = vector.extract_strided_slice %423 {offsets = [0, 64], sizes = [8, 32], strides = [1, 1]} : vector<8x96xf32> to vector<8x32xf32>
    %445 = vector.extract_strided_slice %422 {offsets = [0, 64], sizes = [8, 32], strides = [1, 1]} : vector<8x96xf32> to vector<8x32xf32>
    %446 = arith.mulf %433, %445 : vector<8x32xf32>
    %447 = arith.addf %444, %446 : vector<8x32xf32>
    %448 = math.tanh %447 : vector<8x32xf32>
    %cst_138 = arith.constant 1.000000e+00 : f32
    %449 = vector.broadcast %cst_138 : f32 to vector<8x32xf32>
    %450 = arith.subf %449, %443 : vector<8x32xf32>
    %451 = arith.mulf %450, %448 : vector<8x32xf32>
    %452 = arith.mulf %443, %419 : vector<8x32xf32>
    %453 = arith.addf %451, %452 : vector<8x32xf32>
    %c88 = arith.constant 88 : index
    %c0_139 = arith.constant 0 : index
    %454 = vector.load %arg4[%c88, %c0_139] : memref<96x32xf32, #tpu.memory_space<vmem>>, vector<8x32xf32>
    tpu.vector_store %arg4[%c88, %c0_139], %453 {strides = array<i32>} : memref<96x32xf32, #tpu.memory_space<vmem>>, vector<8x32xf32>,
    %c64_140 = arith.constant 64 : index
    %c0_141 = arith.constant 0 : index
    %455 = vector.load %arg4[%c64_140, %c0_141] : memref<96x32xf32, #tpu.memory_space<vmem>>, vector<32x32xf32>
    %cst_142 = arith.constant dense<0.000000e+00> : vector<32x32xf32>
    %456 = tpu.matmul %455, %7, %cst_142 {dimension_numbers = #tpu.dot_dimension_numbers<[1], [0], [0], [1], [0, 0, 1, 1], [], []>} : vector<32x32xf32>, vector<32x32xf32>, vector<32x32xf32> -> vector<32x32xf32>
    %c5 = arith.constant 5 : index
    %c0_143 = arith.constant 0 : index
    %457 = vector.load %arg2[%c5, %c0_143] : memref<16x96xf32, #tpu.memory_space<vmem>>, vector<1x32xf32>
    %458 = vector.broadcast %457 : vector<1x32xf32> to vector<32x32xf32>
    %459 = arith.addf %456, %458 : vector<32x32xf32>
    %c64_144 = arith.constant 64 : index
    %c0_145 = arith.constant 0 : index
    %460 = vector.load %arg4[%c64_144, %c0_145] : memref<96x32xf32, #tpu.memory_space<vmem>>, vector<32x32xf32>
    tpu.vector_store %arg4[%c64_144, %c0_145], %459 {strides = array<i32>} : memref<96x32xf32, #tpu.memory_space<vmem>>, vector<32x32xf32>,
    %c0_146 = arith.constant 0 : index
    %c0_147 = arith.constant 0 : index
    %461 = vector.load %arg4[%c0_146, %c0_147] : memref<96x32xf32, #tpu.memory_space<vmem>>, vector<96x32xf32>
    %462 = arith.addf %461, %39 : vector<96x32xf32>
    %c8_148 = arith.constant 8 : index
    %c0_149 = arith.constant 0 : index
    %463 = vector.load %arg2[%c8_148, %c0_149] : memref<16x96xf32, #tpu.memory_space<vmem>>, vector<1x32xf32>
    %c9 = arith.constant 9 : index
    %c0_150 = arith.constant 0 : index
    %464 = vector.load %arg2[%c9, %c0_150] : memref<16x96xf32, #tpu.memory_space<vmem>>, vector<1x32xf32>
    %cst_151 = arith.constant dense<0.000000e+00> : vector<96xf32>
    %465 = vector.multi_reduction <add>, %462, %cst_151 [1] : vector<96x32xf32> to vector<96xf32>
    %466 = vector.shape_cast %465 : vector<96xf32> to vector<96x1xf32>
    %cst_152 = arith.constant 3.200000e+01 : f32
    %467 = vector.broadcast %cst_152 : f32 to vector<96x1xf32>
    %468 = arith.divf %466, %467 : vector<96x1xf32>
    %469 = vector.broadcast %468 : vector<96x1xf32> to vector<96x32xf32>
    %470 = arith.subf %462, %469 : vector<96x32xf32>
    %471 = arith.mulf %470, %470 : vector<96x32xf32>
    %cst_153 = arith.constant dense<0.000000e+00> : vector<96xf32>
    %472 = vector.multi_reduction <add>, %471, %cst_153 [1] : vector<96x32xf32> to vector<96xf32>
    %473 = vector.shape_cast %472 : vector<96xf32> to vector<96x1xf32>
    %cst_154 = arith.constant 3.200000e+01 : f32
    %474 = vector.broadcast %cst_154 : f32 to vector<96x1xf32>
    %475 = arith.divf %473, %474 : vector<96x1xf32>
    %476 = vector.broadcast %468 : vector<96x1xf32> to vector<96x32xf32>
    %477 = arith.subf %462, %476 : vector<96x32xf32>
    %cst_155 = arith.constant 9.99999974E-6 : f32
    %478 = vector.broadcast %cst_155 : f32 to vector<96x1xf32>
    %479 = arith.addf %475, %478 : vector<96x1xf32>
    %480 = math.rsqrt %479 : vector<96x1xf32>
    %481 = vector.broadcast %480 : vector<96x1xf32> to vector<96x32xf32>
    %482 = arith.mulf %477, %481 : vector<96x32xf32>
    %483 = vector.broadcast %463 : vector<1x32xf32> to vector<96x32xf32>
    %484 = arith.mulf %482, %483 : vector<96x32xf32>
    %485 = vector.broadcast %464 : vector<1x32xf32> to vector<96x32xf32>
    %486 = arith.addf %484, %485 : vector<96x32xf32>
    %487 = arith.addf %486, %2 : vector<96x32xf32>
    %cst_156 = arith.constant dense<0.000000e+00> : vector<96x48xf32>
    %488 = tpu.matmul %487, %9, %cst_156 {dimension_numbers = #tpu.dot_dimension_numbers<[1], [0], [0], [1], [0, 0, 1, 1], [], []>} : vector<96x32xf32>, vector<32x48xf32>, vector<96x48xf32> -> vector<96x48xf32>
    %489 = vector.extract_strided_slice %488 {offsets = [0, 0], sizes = [96, 16], strides = [1, 1]} : vector<96x48xf32> to vector<96x16xf32>
    %490 = vector.extract_strided_slice %488 {offsets = [0, 16], sizes = [96, 16], strides = [1, 1]} : vector<96x48xf32> to vector<96x16xf32>
    %491 = vector.extract_strided_slice %488 {offsets = [0, 32], sizes = [96, 16], strides = [1, 1]} : vector<96x48xf32> to vector<96x16xf32>
    %cst_157 = arith.constant dense<0.000000e+00> : vector<96x96xf32>
    %492 = tpu.matmul %489, %490, %cst_157 {dimension_numbers = #tpu.dot_dimension_numbers<[1], [1], [0], [0], [0, 0, 1, 0], [], []>} : vector<96x16xf32>, vector<96x16xf32>, vector<96x96xf32> -> vector<96x96xf32>
    %cst_158 = arith.constant 2.500000e-01 : f32
    %493 = vector.broadcast %cst_158 : f32 to vector<96x96xf32>
    %494 = arith.mulf %492, %493 : vector<96x96xf32>
    %495 = tpu.iota {dimensions = array<i32: 0>} : vector<96x96xi32>
    %c7_i32 = arith.constant 7 : i32
    %496 = vector.broadcast %c7_i32 : i32 to vector<96x96xi32>
    %497 = arith.andi %495, %496 : vector<96x96xi32>
    %498 = tpu.iota {dimensions = array<i32: 1>} : vector<96x96xi32>
    %c7_i32_159 = arith.constant 7 : i32
    %499 = vector.broadcast %c7_i32_159 : i32 to vector<96x96xi32>
    %500 = arith.andi %498, %499 : vector<96x96xi32>
    %501 = arith.cmpi eq, %497, %500 : vector<96x96xi32>
    %cst_160 = arith.constant -1.000000e+09 : f32
    %502 = vector.broadcast %cst_160 : f32 to vector<96x96xf32>
    %503 = arith.select %501, %494, %502 : vector<96x96xi1>, vector<96x96xf32>
    %cst_161 = arith.constant dense<0xFF800000> : vector<96xf32>
    %504 = vector.multi_reduction <maximumf>, %503, %cst_161 [1] : vector<96x96xf32> to vector<96xf32>
    %505 = vector.shape_cast %504 : vector<96xf32> to vector<96x1xf32>
    %506 = vector.broadcast %505 : vector<96x1xf32> to vector<96x96xf32>
    %507 = arith.subf %503, %506 : vector<96x96xf32>
    %508 = math.exp %507 : vector<96x96xf32>
    %cst_162 = arith.constant dense<0.000000e+00> : vector<96xf32>
    %509 = vector.multi_reduction <add>, %508, %cst_162 [1] : vector<96x96xf32> to vector<96xf32>
    %510 = vector.shape_cast %509 : vector<96xf32> to vector<96x1xf32>
    %511 = tpu.reciprocal %510 {approx = true} : vector<96x1xf32> -> vector<96x1xf32>
    %512 = vector.broadcast %511 : vector<96x1xf32> to vector<96x96xf32>
    %513 = arith.mulf %508, %512 : vector<96x96xf32>
    %cst_163 = arith.constant dense<0.000000e+00> : vector<96x16xf32>
    %514 = tpu.matmul %513, %491, %cst_163 {dimension_numbers = #tpu.dot_dimension_numbers<[1], [0], [0], [1], [0, 0, 1, 1], [], []>} : vector<96x96xf32>, vector<96x16xf32>, vector<96x16xf32> -> vector<96x16xf32>
    %515 = vector.extract_strided_slice %514 {offsets = [64, 0], sizes = [32, 16], strides = [1, 1]} : vector<96x16xf32> to vector<32x16xf32>
    %516 = vector.extract_strided_slice %486 {offsets = [64, 0], sizes = [32, 32], strides = [1, 1]} : vector<96x32xf32> to vector<32x32xf32>
    %cst_164 = arith.constant dense<0.000000e+00> : vector<32x32xf32>
    %517 = tpu.matmul %516, %10, %cst_164 {dimension_numbers = #tpu.dot_dimension_numbers<[1], [0], [0], [1], [0, 0, 1, 1], [], []>} : vector<32x32xf32>, vector<32x32xf32>, vector<32x32xf32> -> vector<32x32xf32>
    %518 = vector.extract_strided_slice %517 {offsets = [0, 0], sizes = [32, 16], strides = [1, 1]} : vector<32x32xf32> to vector<32x16xf32>
    %c10 = arith.constant 10 : index
    %c0_165 = arith.constant 0 : index
    %519 = vector.load %arg2[%c10, %c0_165] : memref<16x96xf32, #tpu.memory_space<vmem>>, vector<1x16xf32>
    %520 = vector.broadcast %519 : vector<1x16xf32> to vector<32x16xf32>
    %521 = arith.addf %518, %520 : vector<32x16xf32>
    %cst_166 = arith.constant 0.000000e+00 : f32
    %522 = vector.broadcast %cst_166 : f32 to vector<32x16xf32>
    %523 = arith.maximumf %521, %522 : vector<32x16xf32>
    %cst_167 = arith.constant dense<0.000000e+00> : vector<32x16xf32>
    %524 = tpu.matmul %523, %11, %cst_167 {dimension_numbers = #tpu.dot_dimension_numbers<[1], [0], [0], [1], [0, 0, 1, 1], [], []>} : vector<32x16xf32>, vector<16x16xf32>, vector<32x16xf32> -> vector<32x16xf32>
    %c11 = arith.constant 11 : index
    %c0_168 = arith.constant 0 : index
    %525 = vector.load %arg2[%c11, %c0_168] : memref<16x96xf32, #tpu.memory_space<vmem>>, vector<1x16xf32>
    %526 = vector.broadcast %525 : vector<1x16xf32> to vector<32x16xf32>
    %527 = arith.addf %524, %526 : vector<32x16xf32>
    %528 = vector.extract_strided_slice %517 {offsets = [0, 16], sizes = [32, 16], strides = [1, 1]} : vector<32x32xf32> to vector<32x16xf32>
    %529 = arith.addf %527, %528 : vector<32x16xf32>
    %530 = arith.addf %515, %529 : vector<32x16xf32>
    %c12 = arith.constant 12 : index
    %c0_169 = arith.constant 0 : index
    %531 = vector.load %arg2[%c12, %c0_169] : memref<16x96xf32, #tpu.memory_space<vmem>>, vector<1x16xf32>
    %c13 = arith.constant 13 : index
    %c0_170 = arith.constant 0 : index
    %532 = vector.load %arg2[%c13, %c0_170] : memref<16x96xf32, #tpu.memory_space<vmem>>, vector<1x16xf32>
    %cst_171 = arith.constant dense<0.000000e+00> : vector<32xf32>
    %533 = vector.multi_reduction <add>, %530, %cst_171 [1] : vector<32x16xf32> to vector<32xf32>
    %534 = vector.shape_cast %533 : vector<32xf32> to vector<32x1xf32>
    %cst_172 = arith.constant 1.600000e+01 : f32
    %535 = vector.broadcast %cst_172 : f32 to vector<32x1xf32>
    %536 = arith.divf %534, %535 : vector<32x1xf32>
    %537 = vector.broadcast %536 : vector<32x1xf32> to vector<32x16xf32>
    %538 = arith.subf %530, %537 : vector<32x16xf32>
    %539 = arith.mulf %538, %538 : vector<32x16xf32>
    %cst_173 = arith.constant dense<0.000000e+00> : vector<32xf32>
    %540 = vector.multi_reduction <add>, %539, %cst_173 [1] : vector<32x16xf32> to vector<32xf32>
    %541 = vector.shape_cast %540 : vector<32xf32> to vector<32x1xf32>
    %cst_174 = arith.constant 1.600000e+01 : f32
    %542 = vector.broadcast %cst_174 : f32 to vector<32x1xf32>
    %543 = arith.divf %541, %542 : vector<32x1xf32>
    %544 = vector.broadcast %536 : vector<32x1xf32> to vector<32x16xf32>
    %545 = arith.subf %530, %544 : vector<32x16xf32>
    %cst_175 = arith.constant 9.99999974E-6 : f32
    %546 = vector.broadcast %cst_175 : f32 to vector<32x1xf32>
    %547 = arith.addf %543, %546 : vector<32x1xf32>
    %548 = math.rsqrt %547 : vector<32x1xf32>
    %549 = vector.broadcast %548 : vector<32x1xf32> to vector<32x16xf32>
    %550 = arith.mulf %545, %549 : vector<32x16xf32>
    %551 = vector.broadcast %531 : vector<1x16xf32> to vector<32x16xf32>
    %552 = arith.mulf %550, %551 : vector<32x16xf32>
    %553 = vector.broadcast %532 : vector<1x16xf32> to vector<32x16xf32>
    %554 = arith.addf %552, %553 : vector<32x16xf32>
    %cst_176 = arith.constant dense<0.000000e+00> : vector<32x9xf32>
    %555 = tpu.matmul %554, %12, %cst_176 {dimension_numbers = #tpu.dot_dimension_numbers<[1], [0], [0], [1], [0, 0, 1, 1], [], []>} : vector<32x16xf32>, vector<16x9xf32>, vector<32x9xf32> -> vector<32x9xf32>
    %c14 = arith.constant 14 : index
    %c0_177 = arith.constant 0 : index
    %556 = vector.load %arg2[%c14, %c0_177] : memref<16x96xf32, #tpu.memory_space<vmem>>, vector<1x9xf32>
    %557 = vector.broadcast %556 : vector<1x9xf32> to vector<32x9xf32>
    %558 = arith.addf %555, %557 : vector<32x9xf32>
    %559 = vector.extract_strided_slice %558 {offsets = [0, 0], sizes = [32, 3], strides = [1, 1]} : vector<32x9xf32> to vector<32x3xf32>
    %cst_178 = arith.constant 0.000000e+00 : f32
    %560 = vector.broadcast %cst_178 : f32 to vector<32x3xf32>
    %561 = arith.maximumf %559, %560 : vector<32x3xf32>
    %562 = math.absf %559 : vector<32x3xf32>
    %cst_179 = arith.constant 0.000000e+00 : f32
    %563 = vector.broadcast %cst_179 : f32 to vector<32x3xf32>
    %564 = arith.subf %563, %562 : vector<32x3xf32>
    %565 = math.exp %564 : vector<32x3xf32>
    %566 = math.log1p %565 : vector<32x3xf32>
    %567 = arith.addf %561, %566 : vector<32x3xf32>
    %cst_180 = arith.constant 9.99999997E-7 : f32
    %568 = vector.broadcast %cst_180 : f32 to vector<32x3xf32>
    %569 = arith.addf %567, %568 : vector<32x3xf32>
    %570 = vector.extract_strided_slice %558 {offsets = [0, 3], sizes = [32, 3], strides = [1, 1]} : vector<32x9xf32> to vector<32x3xf32>
    %cst_181 = arith.constant 0.000000e+00 : f32
    %571 = vector.broadcast %cst_181 : f32 to vector<32x3xf32>
    %572 = arith.maximumf %570, %571 : vector<32x3xf32>
    %573 = math.absf %570 : vector<32x3xf32>
    %cst_182 = arith.constant 0.000000e+00 : f32
    %574 = vector.broadcast %cst_182 : f32 to vector<32x3xf32>
    %575 = arith.subf %574, %573 : vector<32x3xf32>
    %576 = math.exp %575 : vector<32x3xf32>
    %577 = math.log1p %576 : vector<32x3xf32>
    %578 = arith.addf %572, %577 : vector<32x3xf32>
    %cst_183 = arith.constant 9.99999997E-7 : f32
    %579 = vector.broadcast %cst_183 : f32 to vector<32x3xf32>
    %580 = arith.addf %578, %579 : vector<32x3xf32>
    %581 = vector.extract_strided_slice %558 {offsets = [0, 6], sizes = [32, 3], strides = [1, 1]} : vector<32x9xf32> to vector<32x3xf32>
    %cst_184 = arith.constant dense<0xFF800000> : vector<32xf32>
    %582 = vector.multi_reduction <maximumf>, %581, %cst_184 [1] : vector<32x3xf32> to vector<32xf32>
    %583 = vector.shape_cast %582 : vector<32xf32> to vector<32x1xf32>
    %584 = vector.broadcast %583 : vector<32x1xf32> to vector<32x3xf32>
    %585 = arith.subf %581, %584 : vector<32x3xf32>
    %586 = math.exp %585 : vector<32x3xf32>
    %cst_185 = arith.constant dense<0.000000e+00> : vector<32xf32>
    %587 = vector.multi_reduction <add>, %586, %cst_185 [1] : vector<32x3xf32> to vector<32xf32>
    %588 = vector.shape_cast %587 : vector<32xf32> to vector<32x1xf32>
    %589 = vector.broadcast %588 : vector<32x1xf32> to vector<32x3xf32>
    %590 = arith.divf %586, %589 : vector<32x3xf32>
    %591 = tpu.concatenate %569, %580, %590 in 1 : vector<32x3xf32>, vector<32x3xf32>, vector<32x3xf32> -> vector<32x9xf32>
    %c0_186 = arith.constant 0 : index
    %c0_187 = arith.constant 0 : index
    %592 = vector.load %arg3[%c0_186, %c0_187] : memref<32x9xf32, #tpu.memory_space<vmem>>, vector<32x9xf32>
    tpu.vector_store %arg3[%c0_186, %c0_187], %591 {strides = array<i32>} : memref<32x9xf32, #tpu.memory_space<vmem>>, vector<32x9xf32>,
    return
  }
}

</mosaic_0001>

<llo_original>
// kernel: mstan_forward.1
$region0: #{mstan_forward.1}
  #allocation0 [shape = 'u32[]', space=smem, size = 0x4, offset = 0x4, fixed_abs, tag = 'smem constant byte address 0x4 - core index']
  #allocation1 [shape = 'u32[72,128]{1,0:T(1,128)}', space=vmem, size = 0x9000, scoped, tag = 'internal scratch']
  #allocation2 [shape = 'f32[96,32]{1,0:T(8,128)}', space=vmem, size = 0xc000, scoped, tag = 'scratch operand']
  %s0 = inlined_call_operand.vmem [shape: f32[192,32], index: 0, kind: input, shape index: {}]
  %s1 = inlined_call_operand.vmem [shape: f32[224,240], index: 1, kind: input, shape index: {}]
  %s2 = inlined_call_operand.vmem [shape: f32[16,96], index: 2, kind: input, shape index: {}]
  %s3 = inlined_call_operand.vmem [shape: f32[32,9], index: 3, kind: output, shape index: {}]
  %s4 = sld [smem:[#allocation0]]
  $region22: #{mstan_forward.1} parent=0
    _
  %s6 = ssub.s32 1, %s4
  %s7 = scalar_select 0, %s6, %s4
  // Predicated region
  $region2: #{mstan_forward.1} parent=0 // pred_check
    _
  $region3: #{mstan_forward.1} parent=0 // pred_check_branch
    %9 = sbr.rel (0) target = $region5
  $region4: #{mstan_forward.1} parent=0 // pred_region
    _
  $region5: #{mstan_forward.1} parent=0 // pred_fallthru
    _
  // Predicated region
  $region6: #{mstan_forward.1} parent=0 // pred_check
    _
  $region7: #{mstan_forward.1} parent=0 // pred_check_branch
    %11 = sbr.rel (0) target = $region9
  $region8: #{mstan_forward.1} parent=0 // pred_region
    _
  $region9: #{mstan_forward.1} parent=0 // pred_fallthru
    _
  // Predicated region
  $region10: #{mstan_forward.1} parent=0 // pred_check
    _
  $region11: #{mstan_forward.1} parent=0 // pred_check_branch
    %13 = sbr.rel (0) target = $region13
  $region12: #{mstan_forward.1} parent=0 // pred_region
    _
  $region13: #{mstan_forward.1} parent=0 // pred_fallthru
    _
  %v14 = vld [vmem:[%s0] sm:$0xff]
  %v15 = vld [vmem:[%s0 + $0x8] sm:$0xff]
  %v16 = vld [vmem:[%s0 + $0x10] sm:$0xff]
  %v17 = vld [vmem:[%s0 + $0x18] sm:$0xff]
  %v18 = vld [vmem:[%s0 + $0x20] sm:$0xff]
  %v19 = vld [vmem:[%s0 + $0x28] sm:$0xff]
  %v20 = vld [vmem:[%s0 + $0x30] sm:$0xff]
  %v21 = vld [vmem:[%s0 + $0x38] sm:$0xff]
  %v22 = vld [vmem:[%s0 + $0x40] sm:$0xff]
  %v23 = vld [vmem:[%s0 + $0x48] sm:$0xff]
  %v24 = vld [vmem:[%s0 + $0x50] sm:$0xff]
  %v25 = vld [vmem:[%s0 + $0x58] sm:$0xff]
  %v26 = vld [vmem:[%s0 + $0x60] sm:$0xff]
  %v27 = vld [vmem:[%s0 + $0x68] sm:$0xff]
  %v28 = vld [vmem:[%s0 + $0x70] sm:$0xff]
  %v29 = vld [vmem:[%s0 + $0x78] sm:$0xff]
  %v30 = vld [vmem:[%s0 + $0x80] sm:$0xff]
  %v31 = vld [vmem:[%s0 + $0x88] sm:$0xff]
  %v32 = vld [vmem:[%s0 + $0x90] sm:$0xff]
  %v33 = vld [vmem:[%s0 + $0x98] sm:$0xff]
  %v34 = vld [vmem:[%s0 + $0xa0] sm:$0xff]
  %v35 = vld [vmem:[%s0 + $0xa8] sm:$0xff]
  %v36 = vld [vmem:[%s0 + $0xb0] sm:$0xff]
  %v37 = vld [vmem:[%s0 + $0xb8] sm:$0xff]
  %v38 = vld [vmem:[%s1 + $0x10] sm:$0x3f]
  %v39 = vld [vmem:[%s1] sm:$0x3]
  %v40 = vld [vmem:[%s1 + $0x8] sm:$0x3]
  %v41 = vld [vmem:[%s1 + $0x20] sm:$0xff]
  %v42 = vld [vmem:[%s1 + $0x30] sm:$0xff]
  %v43 = vld [vmem:[%s1 + $0x40] sm:$0xff]
  %v44 = vld [vmem:[%s1 + $0x50] sm:$0xff]
  %v45 = vld [vmem:[%s1 + $0x60] sm:$0xff]
  %v46 = vld [vmem:[%s1 + $0x70] sm:$0xff]
  %v47 = vld [vmem:[%s1 + $0x80] sm:$0xff]
  %v48 = vld [vmem:[%s1 + $0x90] sm:$0xff]
  %v49 = vld [vmem:[%s1 + $0xa0] sm:$0xff]
  %v50 = vld [vmem:[%s1 + $0xb0] sm:$0xff]
  %v51 = vld [vmem:[%s1 + $0xc0] sm:$0xff]
  %v52 = vld [vmem:[%s1 + $0xd0] sm:$0xff]
  %v53 = vld [vmem:[%s1 + $0xe0] sm:$0xff]
  %v54 = vld [vmem:[%s1 + $0xf0] sm:$0xff]
  %v55 = vld [vmem:[%s1 + $0x100] sm:$0xff]
  %v56 = vld [vmem:[%s1 + $0x110] sm:$0xff]
  %v57 = vld [vmem:[%s1 + $0x120] sm:$0xff]
  %v58 = vld [vmem:[%s1 + $0x130] sm:$0xff]
  %v59 = vld [vmem:[%s1 + $0x140] sm:$0xff]
  %v60 = vld [vmem:[%s1 + $0x150] sm:$0xff]
  %v61 = vld [vmem:[%s1 + $0x160] sm:$0xff]
  %v62 = vld [vmem:[%s1 + $0x170] sm:$0xff]
  %v63 = vld [vmem:[%s1 + $0x180] sm:$0xff]
  %v64 = vld [vmem:[%s1 + $0x190] sm:$0xff]
  %v65 = vld [vmem:[%s1 + $0x1a0] sm:$0xff]
  %v66 = vld [vmem:[%s1 + $0x1b0] sm:$0xff]
  %v67 = vld [vmem:[%s2 + $0x4] sm:$0x1]
  %v68 = vperm.slane %v67, 0
  %vm69 = vcmask 48128
  %v71 = vsel %vm69, %v22, 0
  %v74 = vsel %vm69, %v23, 0
  %v77 = vsel %vm69, %v24, 0
  %v80 = vsel %vm69, %v25, 0
  %vm82 = vcmask 1045504
  %v84 = vsel %vm82, %v38, 0
  %86 = vmatpush.msra.mxu0 0.0
  %87 = vmatpush.msra.mxu0 0.0
  %88 = vmatpush.msra.mxu0 0.0
  %89 = vmatpush.msra.mxu0 0.0
  %90 = vmatpush.msra.mxu0 0.0
  %91 = vmatpush.msra.mxu0 0.0
  %92 = vmatpush.msra.mxu0 0.0
  %93 = vmatpush.msra.mxu0 0.0
  %94 = vmatpush.msra.mxu0 0.0
  %95 = vmatpush.msra.mxu0 0.0
  %96 = vmatpush.msra.mxu0 0.0
  %97 = vmatpush.msra.mxu0 0.0
  %98 = vmatpush.msra.mxu0 0.0
  %99 = vmatpush.msra.mxu0 0.0
  %100 = vmatpush.msra.mxu0 0.0
  %101 = vmatpush.msra.mxu0 %v84
  %102 = vmatmul.f32.gmra.mxu0 %v71
  %v103 = vpop.f32.mrf.mxu0
  %v104 = vadd.f32 %v68, %v103
  %105 = vmatmul.f32.gmra.mxu0 %v74
  %v106 = vpop.f32.mrf.mxu0
  %v107 = vadd.f32 %v68, %v106
  %108 = vmatmul.f32.gmra.mxu0 %v77
  %v109 = vpop.f32.mrf.mxu0
  %v110 = vadd.f32 %v68, %v109
  %111 = vmatmul.f32.gmra.mxu0 %v80
  %v112 = vpop.f32.mrf.mxu0
  %v113 = vadd.f32 %v68, %v112
  %114 = vdwg.mxu0
  %v115 = vtanh.pop %v104
  %v116 = vtanh.pop %v107
  %v117 = vtanh.pop %v110
  %v118 = vtanh.pop %v113
  %vm119 = vcmask 15360
  %v121 = vsel %vm119, %v14, 0
  %v124 = vsel %vm119, %v15, 0
  %v127 = vsel %vm119, %v16, 0
  %v130 = vsel %vm119, %v17, 0
  %v133 = vsel %vm119, %v18, 0
  %v136 = vsel %vm119, %v19, 0
  %v139 = vsel %vm119, %v20, 0
  %v142 = vsel %vm119, %v21, 0
  %v145 = vsel %vm119, %v115, 0
  %v148 = vsel %vm119, %v116, 0
  %v151 = vsel %vm119, %v117, 0
  %v154 = vsel %vm119, %v118, 0
  %vm156 = vcmask 1041408
  %v158 = vsel %vm156, %v39, 0
  %v161 = vsel %vm156, %v40, 0
  %163 = vmatpush.msra.mxu0 0.0
  %164 = vmatpush.msra.mxu0 0.0
  %165 = vmatpush.msra.mxu0 0.0
  %166 = vmatpush.msra.mxu0 0.0
  %167 = vmatpush.msra.mxu0 0.0
  %168 = vmatpush.msra.mxu0 0.0
  %169 = vmatpush.msra.mxu0 0.0
  %170 = vmatpush.msra.mxu0 0.0
  %171 = vmatpush.msra.mxu0 0.0
  %172 = vmatpush.msra.mxu0 0.0
  %173 = vmatpush.msra.mxu0 0.0
  %174 = vmatpush.msra.mxu0 0.0
  %175 = vmatpush.msra.mxu0 0.0
  %176 = vmatpush.msra.mxu0 0.0
  %177 = vmatpush.msra.mxu0 0.0
  %178 = vmatpush.msra.mxu0 %v158
  %179 = vmatmul.f32.gmra.mxu0 %v121
  %v180 = vpop.f32.mrf.mxu0
  %v181 = vadd.f32 0.0, %v180
  %182 = vmatmul.f32.gmra.mxu0 %v124
  %v183 = vpop.f32.mrf.mxu0
  %v184 = vadd.f32 0.0, %v183
  %185 = vmatmul.f32.gmra.mxu0 %v127
  %v186 = vpop.f32.mrf.mxu0
  %v187 = vadd.f32 0.0, %v186
  %188 = vmatmul.f32.gmra.mxu0 %v130
  %v189 = vpop.f32.mrf.mxu0
  %v190 = vadd.f32 0.0, %v189
  %191 = vmatmul.f32.gmra.mxu0 %v133
  %v192 = vpop.f32.mrf.mxu0
  %v193 = vadd.f32 0.0, %v192
  %194 = vmatmul.f32.gmra.mxu0 %v136
  %v195 = vpop.f32.mrf.mxu0
  %v196 = vadd.f32 0.0, %v195
  %197 = vmatmul.f32.gmra.mxu0 %v139
  %v198 = vpop.f32.mrf.mxu0
  %v199 = vadd.f32 0.0, %v198
  %200 = vmatmul.f32.gmra.mxu0 %v142
  %v201 = vpop.f32.mrf.mxu0
  %v202 = vadd.f32 0.0, %v201
  %203 = vmatmul.f32.gmra.mxu0 %v145
  %v204 = vpop.f32.mrf.mxu0
  %v205 = vadd.f32 0.0, %v204
  %206 = vmatmul.f32.gmra.mxu0 %v148
  %v207 = vpop.f32.mrf.mxu0
  %v208 = vadd.f32 0.0, %v207
  %209 = vmatmul.f32.gmra.mxu0 %v151
  %v210 = vpop.f32.mrf.mxu0
  %v211 = vadd.f32 0.0, %v210
  %212 = vmatmul.f32.gmra.mxu0 %v154
  %v213 = vpop.f32.mrf.mxu0
  %v214 = vadd.f32 0.0, %v213
  %215 = vdwg.mxu0
  %216 = vmatpush.msra.mxu0 0.0
  %217 = vmatpush.msra.mxu0 0.0
  %218 = vmatpush.msra.mxu0 0.0
  %219 = vmatpush.msra.mxu0 0.0
  %220 = vmatpush.msra.mxu0 0.0
  %221 = vmatpush.msra.mxu0 0.0
  %222 = vmatpush.msra.mxu0 0.0
  %223 = vmatpush.msra.mxu0 0.0
  %224 = vmatpush.msra.mxu0 0.0
  %225 = vmatpush.msra.mxu0 0.0
  %226 = vmatpush.msra.mxu0 0.0
  %227 = vmatpush.msra.mxu0 0.0
  %228 = vmatpush.msra.mxu0 0.0
  %229 = vmatpush.msra.mxu0 0.0
  %230 = vmatpush.msra.mxu0 0.0
  %231 = vmatpush.msra.mxu0 %v161
  %232 = vmatmul.f32.gmra.mxu0 %v121
  %v233 = vpop.f32.mrf.mxu0
  %v234 = vadd.f32 0.0, %v233
  %235 = vmatmul.f32.gmra.mxu0 %v124
  %v236 = vpop.f32.mrf.mxu0
  %v237 = vadd.f32 0.0, %v236
  %238 = vmatmul.f32.gmra.mxu0 %v127
  %v239 = vpop.f32.mrf.mxu0
  %v240 = vadd.f32 0.0, %v239
  %241 = vmatmul.f32.gmra.mxu0 %v130
  %v242 = vpop.f32.mrf.mxu0
  %v243 = vadd.f32 0.0, %v242
  %244 = vmatmul.f32.gmra.mxu0 %v133
  %v245 = vpop.f32.mrf.mxu0
  %v246 = vadd.f32 0.0, %v245
  %247 = vmatmul.f32.gmra.mxu0 %v136
  %v248 = vpop.f32.mrf.mxu0
  %v249 = vadd.f32 0.0, %v248
  %250 = vmatmul.f32.gmra.mxu0 %v139
  %v251 = vpop.f32.mrf.mxu0
  %v252 = vadd.f32 0.0, %v251
  %253 = vmatmul.f32.gmra.mxu0 %v142
  %v254 = vpop.f32.mrf.mxu0
  %v255 = vadd.f32 0.0, %v254
  %256 = vmatmul.f32.gmra.mxu0 %v145
  %v257 = vpop.f32.mrf.mxu0
  %v258 = vadd.f32 0.0, %v257
  %259 = vmatmul.f32.gmra.mxu0 %v148
  %v260 = vpop.f32.mrf.mxu0
  %v261 = vadd.f32 0.0, %v260
  %262 = vmatmul.f32.gmra.mxu0 %v151
  %v263 = vpop.f32.mrf.mxu0
  %v264 = vadd.f32 0.0, %v263
  %265 = vmatmul.f32.gmra.mxu0 %v154
  %v266 = vpop.f32.mrf.mxu0
  %v267 = vadd.f32 0.0, %v266
  %268 = vdwg.mxu0
  %v269 = vld [vmem:[%s2] sm:$0x1]
  %v270 = vperm.slane %v269, 0
  %v271 = vadd.f32 %v181, %v270
  %v272 = vadd.f32 %v184, %v270
  %v273 = vadd.f32 %v187, %v270
  %v274 = vadd.f32 %v190, %v270
  %v275 = vadd.f32 %v193, %v270
  %v276 = vadd.f32 %v196, %v270
  %v277 = vadd.f32 %v199, %v270
  %v278 = vadd.f32 %v202, %v270
  %v279 = vld [vmem:[%s2 + $0x1] sm:$0x1]
  %v280 = vperm.slane %v279, 0
  %282 = vrot.lane.b32.xlu0 %v280, 96
  %v283 = vpop.permute.xlu0 %282
  %v285 = vadd.f32 %v205, %v283
  %v286 = vadd.f32 %v258, %v283
  %v287 = vadd.f32 %v208, %v283
  %v288 = vadd.f32 %v261, %v283
  %v289 = vadd.f32 %v211, %v283
  %v290 = vadd.f32 %v264, %v283
  %v291 = vadd.f32 %v214, %v283
  %v292 = vadd.f32 %v267, %v283
  %v293 = vld [vmem:[%s2 + $0x6] sm:$0x1]
  %v294 = vperm.slane %v293, 0
  %296 = vrot.lane.b32.xlu0 %v294, 64
  %v297 = vpop.permute.xlu0 %296
  %v299 = vadd.f32 %v234, %v297
  %v300 = vadd.f32 %v237, %v297
  %v301 = vadd.f32 %v240, %v297
  %v302 = vadd.f32 %v243, %v297
  %v303 = vadd.f32 %v246, %v297
  %v304 = vadd.f32 %v249, %v297
  %v305 = vadd.f32 %v252, %v297
  %v306 = vadd.f32 %v255, %v297
  %v307 = vadd.f32 %v258, %v297
  %v308 = vadd.f32 %v261, %v297
  %v309 = vadd.f32 %v264, %v297
  %v310 = vadd.f32 %v267, %v297
  %v311 = vmax.f32 %v299, 0.0
  %v312 = vmax.f32 %v300, 0.0
  %v313 = vmax.f32 %v301, 0.0
  %v314 = vmax.f32 %v302, 0.0
  %v315 = vmax.f32 %v303, 0.0
  %v316 = vmax.f32 %v304, 0.0
  %v317 = vmax.f32 %v305, 0.0
  %v318 = vmax.f32 %v306, 0.0
  %v319 = vmax.f32 %v307, 0.0
  %v320 = vmax.f32 %v308, 0.0
  %v321 = vmax.f32 %v309, 0.0
  %v322 = vmax.f32 %v310, 0.0
  %v323 = vld [vmem:[%s2 + $0x7] sm:$0x1]
  %v324 = vperm.slane %v323, 0
  %337 = vrot.lane.b32.xlu0 %v311, 64
  %v338 = vpop.permute.xlu0 %337
  %339 = vrot.lane.b32.xlu0 %v312, 64
  %v340 = vpop.permute.xlu0 %339
  %341 = vrot.lane.b32.xlu0 %v313, 64
  %v342 = vpop.permute.xlu0 %341
  %343 = vrot.lane.b32.xlu0 %v314, 64
  %v344 = vpop.permute.xlu0 %343
  %345 = vrot.lane.b32.xlu0 %v315, 64
  %v346 = vpop.permute.xlu0 %345
  %347 = vrot.lane.b32.xlu0 %v316, 64
  %v348 = vpop.permute.xlu0 %347
  %349 = vrot.lane.b32.xlu0 %v317, 64
  %v350 = vpop.permute.xlu0 %349
  %351 = vrot.lane.b32.xlu0 %v318, 64
  %v352 = vpop.permute.xlu0 %351
  %353 = vrot.lane.b32.xlu0 %v319, 64
  %v354 = vpop.permute.xlu0 %353
  %355 = vrot.lane.b32.xlu0 %v320, 64
  %v356 = vpop.permute.xlu0 %355
  %357 = vrot.lane.b32.xlu0 %v321, 64
  %v358 = vpop.permute.xlu0 %357
  %359 = vrot.lane.b32.xlu0 %v322, 64
  %v360 = vpop.permute.xlu0 %359
  %vm361 = vcmask 130048
  %v362 = vsel %vm361, %v338, 0
  %v364 = vsel %vm361, %v340, 0
  %v366 = vsel %vm361, %v342, 0
  %v368 = vsel %vm361, %v344, 0
  %v370 = vsel %vm361, %v346, 0
  %v372 = vsel %vm361, %v348, 0
  %v374 = vsel %vm361, %v350, 0
  %v376 = vsel %vm361, %v352, 0
  %v378 = vsel %vm361, %v354, 0
  %v380 = vsel %vm361, %v356, 0
  %v382 = vsel %vm361, %v358, 0
  %v384 = vsel %vm361, %v360, 0
  %386 = vmatpush.msra.mxu0 0.0
  %387 = vmatpush.msra.mxu0 0.0
  %388 = vmatpush.msra.mxu0 0.0
  %389 = vmatpush.msra.mxu0 0.0
  %390 = vmatpush.msra.mxu0 0.0
  %391 = vmatpush.msra.mxu0 0.0
  %392 = vmatpush.msra.mxu0 0.0
  %393 = vmatpush.msra.mxu0 0.0
  %394 = vmatpush.msra.mxu0 0.0
  %395 = vmatpush.msra.mxu0 0.0
  %396 = vmatpush.msra.mxu0 0.0
  %397 = vmatpush.msra.mxu0 0.0
  %398 = vmatpush.msra.mxu0 0.0
  %399 = vmatpush.msra.mxu0 0.0
  %400 = vmatpush.msra.mxu0 %v54
  %401 = vmatpush.msra.mxu0 %v53
  %402 = vmatmul.f32.gmra.mxu0 %v362
  %v403 = vpop.f32.mrf.mxu0
  %v404 = vadd.f32 %v324, %v403
  %405 = vmatmul.f32.gmra.mxu0 %v364
  %v406 = vpop.f32.mrf.mxu0
  %v407 = vadd.f32 %v324, %v406
  %408 = vmatmul.f32.gmra.mxu0 %v366
  %v409 = vpop.f32.mrf.mxu0
  %v410 = vadd.f32 %v324, %v409
  %411 = vmatmul.f32.gmra.mxu0 %v368
  %v412 = vpop.f32.mrf.mxu0
  %v413 = vadd.f32 %v324, %v412
  %414 = vmatmul.f32.gmra.mxu0 %v370
  %v415 = vpop.f32.mrf.mxu0
  %v416 = vadd.f32 %v324, %v415
  %417 = vmatmul.f32.gmra.mxu0 %v372
  %v418 = vpop.f32.mrf.mxu0
  %v419 = vadd.f32 %v324, %v418
  %420 = vmatmul.f32.gmra.mxu0 %v374
  %v421 = vpop.f32.mrf.mxu0
  %v422 = vadd.f32 %v324, %v421
  %423 = vmatmul.f32.gmra.mxu0 %v376
  %v424 = vpop.f32.mrf.mxu0
  %v425 = vadd.f32 %v324, %v424
  %426 = vmatmul.f32.gmra.mxu0 %v378
  %v427 = vpop.f32.mrf.mxu0
  %v428 = vadd.f32 %v324, %v427
  %429 = vmatmul.f32.gmra.mxu0 %v380
  %v430 = vpop.f32.mrf.mxu0
  %v431 = vadd.f32 %v324, %v430
  %432 = vmatmul.f32.gmra.mxu0 %v382
  %v433 = vpop.f32.mrf.mxu0
  %v434 = vadd.f32 %v324, %v433
  %435 = vmatmul.f32.gmra.mxu0 %v384
  %v436 = vpop.f32.mrf.mxu0
  %v437 = vadd.f32 %v324, %v436
  %438 = vdwg.mxu0
  %451 = vrot.lane.b32.xlu0 %v234, 48
  %v452 = vpop.permute.xlu0 %451
  %453 = vrot.lane.b32.xlu0 %v237, 48
  %v454 = vpop.permute.xlu0 %453
  %455 = vrot.lane.b32.xlu0 %v240, 48
  %v456 = vpop.permute.xlu0 %455
  %457 = vrot.lane.b32.xlu0 %v243, 48
  %v458 = vpop.permute.xlu0 %457
  %459 = vrot.lane.b32.xlu0 %v246, 48
  %v460 = vpop.permute.xlu0 %459
  %461 = vrot.lane.b32.xlu0 %v249, 48
  %v462 = vpop.permute.xlu0 %461
  %463 = vrot.lane.b32.xlu0 %v252, 48
  %v464 = vpop.permute.xlu0 %463
  %465 = vrot.lane.b32.xlu0 %v255, 48
  %v466 = vpop.permute.xlu0 %465
  %467 = vrot.lane.b32.xlu0 %v258, 48
  %v468 = vpop.permute.xlu0 %467
  %469 = vrot.lane.b32.xlu0 %v261, 48
  %v470 = vpop.permute.xlu0 %469
  %471 = vrot.lane.b32.xlu0 %v264, 48
  %v472 = vpop.permute.xlu0 %471
  %473 = vrot.lane.b32.xlu0 %v267, 48
  %v474 = vpop.permute.xlu0 %473
  %v487 = vadd.f32 %v404, %v452
  %v488 = vadd.f32 %v407, %v454
  %v489 = vadd.f32 %v410, %v456
  %v490 = vadd.f32 %v413, %v458
  %v491 = vadd.f32 %v416, %v460
  %v492 = vadd.f32 %v419, %v462
  %v493 = vadd.f32 %v422, %v464
  %v494 = vadd.f32 %v425, %v466
  %v495 = vadd.f32 %v428, %v468
  %v496 = vadd.f32 %v431, %v470
  %v497 = vadd.f32 %v434, %v472
  %v498 = vadd.f32 %v437, %v474
  %v499 = vld [vmem:[%s2 + $0x2] sm:$0x1]
  %v500 = vperm.slane %v499, 0
  %v501 = vld [vmem:[%s2 + $0x3] sm:$0x1]
  %v502 = vperm.slane %v501, 0
  %vm503 = vcmask 261120
  %v505 = vsel %vm503, 0.0, 0
  %507 = vmatpush.msra.mxu0 0.0
  %508 = vmatpush.msra.mxu0 0.0
  %509 = vmatpush.msra.mxu0 0.0
  %510 = vmatpush.msra.mxu0 0.0
  %511 = vmatpush.msra.mxu0 0.0
  %512 = vmatpush.msra.mxu0 0.0
  %513 = vmatpush.msra.mxu0 0.0
  %514 = vmatpush.msra.mxu0 0.0
  %515 = vmatpush.msra.mxu0 0.0
  %516 = vmatpush.msra.mxu0 0.0
  %517 = vmatpush.msra.mxu0 0.0
  %518 = vmatpush.msra.mxu0 0.0
  %519 = vmatpush.msra.mxu0 %v44
  %520 = vmatpush.msra.mxu0 %v43
  %521 = vmatpush.msra.mxu0 %v42
  %522 = vmatpush.msra.mxu0 %v41
  %523 = vmatmul.f32.gmra.mxu0 %v505
  %v524 = vpop.f32.mrf.mxu0
  %v525 = vadd.f32 %v500, %v524
  %526 = vdwg.mxu0
  %v527 = vadd.f32 %v271, %v525
  %v528 = vsub.f32 0.0, %v527
  %v529 = vmul.f32 %v528, 1.442695
  %v530 = vpow.pop %v529
  %v531 = vadd.f32 %v530, 1.0
  %v532 = vrcp.pop %v531
  %v533 = vmul.f32 %v531, %v532
  %v534 = vsub.f32 1.0, %v533
  %v535 = vmul.f32 %v532, %v534
  %v536 = vadd.f32 %v532, %v535
  %vm537 = vweird.f32 %v531
  %vm538 = vweird.f32 %v532
  %vm539 = vmor %vm537, %vm538
  %v540 = vsel %vm539, %v532, %v536
  %v541 = vand.u32 2147483647, %v531
  %vm542 = vcmp.eq.f32.partialorder %v541, 8.507059e+37
  %v543 = vand.u32 %v531, 2147483648
  %v544 = vor.u32 1.1754944e-38, %v543
  %v545 = vsel %vm542, %v544, %v540
  %v546 = vmul.f32 1.0, %v545
  %548 = vrot.lane.b32.xlu0 %v525, 64
  %v549 = vpop.permute.xlu0 %548
  %v551 = vmul.f32 %v546, %v549
  %553 = vrot.lane.b32.xlu0 %v551, 64
  %v554 = vpop.permute.xlu0 %553
  %v556 = vadd.f32 %v271, %v554
  %v557 = vtanh.pop %v556
  %v558 = vsub.f32 1.0, %v546
  %560 = vrot.lane.b32.xlu0 %v557, 96
  %v561 = vpop.permute.xlu0 %560
  %v563 = vmul.f32 %v558, %v561
  %v564 = vmul.f32 %v546, 0.0
  %v565 = vadd.f32 %v563, %v564
  %567 = vrot.lane.b32.xlu0 %v565, 96
  %v568 = vpop.permute.xlu0 %567
  %570 = vst.msk [vmem:[#allocation2] sm:$0xff] %vm503, %v568
  %v571 = vsel %vm503, %v568, 0
  %573 = vmatpush.msra.mxu0 0.0
  %574 = vmatpush.msra.mxu0 0.0
  %575 = vmatpush.msra.mxu0 0.0
  %576 = vmatpush.msra.mxu0 0.0
  %577 = vmatpush.msra.mxu0 0.0
  %578 = vmatpush.msra.mxu0 0.0
  %579 = vmatpush.msra.mxu0 0.0
  %580 = vmatpush.msra.mxu0 0.0
  %581 = vmatpush.msra.mxu0 0.0
  %582 = vmatpush.msra.mxu0 0.0
  %583 = vmatpush.msra.mxu0 0.0
  %584 = vmatpush.msra.mxu0 0.0
  %585 = vmatpush.msra.mxu0 %v44
  %586 = vmatpush.msra.mxu0 %v43
  %587 = vmatpush.msra.mxu0 %v42
  %588 = vmatpush.msra.mxu0 %v41
  %589 = vmatmul.f32.gmra.mxu0 %v571
  %v590 = vpop.f32.mrf.mxu0
  %v591 = vadd.f32 %v500, %v590
  %592 = vdwg.mxu0
  %v593 = vadd.f32 %v272, %v591
  %v594 = vsub.f32 0.0, %v593
  %v595 = vmul.f32 %v594, 1.442695
  %v596 = vpow.pop %v595
  %v597 = vadd.f32 %v596, 1.0
  %v598 = vrcp.pop %v597
  %v599 = vmul.f32 %v597, %v598
  %v600 = vsub.f32 1.0, %v599
  %v601 = vmul.f32 %v598, %v600
  %v602 = vadd.f32 %v598, %v601
  %vm603 = vweird.f32 %v597
  %vm604 = vweird.f32 %v598
  %vm605 = vmor %vm603, %vm604
  %v606 = vsel %vm605, %v598, %v602
  %v607 = vand.u32 2147483647, %v597
  %vm608 = vcmp.eq.f32.partialorder %v607, 8.507059e+37
  %v609 = vand.u32 %v597, 2147483648
  %v610 = vor.u32 1.1754944e-38, %v609
  %v611 = vsel %vm608, %v610, %v606
  %v612 = vmul.f32 1.0, %v611
  %614 = vrot.lane.b32.xlu0 %v591, 64
  %v615 = vpop.permute.xlu0 %614
  %v617 = vmul.f32 %v612, %v615
  %619 = vrot.lane.b32.xlu0 %v617, 64
  %v620 = vpop.permute.xlu0 %619
  %v622 = vadd.f32 %v272, %v620
  %v623 = vtanh.pop %v622
  %v624 = vsub.f32 1.0, %v612
  %626 = vrot.lane.b32.xlu0 %v623, 96
  %v627 = vpop.permute.xlu0 %626
  %v629 = vmul.f32 %v624, %v627
  %v630 = vmul.f32 %v612, %v565
  %v631 = vadd.f32 %v629, %v630
  %633 = vrot.lane.b32.xlu0 %v631, 96
  %v634 = vpop.permute.xlu0 %633
  %636 = vst.msk [vmem:[#allocation2 + $0x8] sm:$0xff] %vm503, %v634
  %v637 = vsel %vm503, %v634, 0
  %639 = vmatpush.msra.mxu0 0.0
  %640 = vmatpush.msra.mxu0 0.0
  %641 = vmatpush.msra.mxu0 0.0
  %642 = vmatpush.msra.mxu0 0.0
  %643 = vmatpush.msra.mxu0 0.0
  %644 = vmatpush.msra.mxu0 0.0
  %645 = vmatpush.msra.mxu0 0.0
  %646 = vmatpush.msra.mxu0 0.0
  %647 = vmatpush.msra.mxu0 0.0
  %648 = vmatpush.msra.mxu0 0.0
  %649 = vmatpush.msra.mxu0 0.0
  %650 = vmatpush.msra.mxu0 0.0
  %651 = vmatpush.msra.mxu0 %v44
  %652 = vmatpush.msra.mxu0 %v43
  %653 = vmatpush.msra.mxu0 %v42
  %654 = vmatpush.msra.mxu0 %v41
  %655 = vmatmul.f32.gmra.mxu0 %v637
  %v656 = vpop.f32.mrf.mxu0
  %v657 = vadd.f32 %v500, %v656
  %658 = vdwg.mxu0
  %v659 = vadd.f32 %v273, %v657
  %v660 = vsub.f32 0.0, %v659
  %v661 = vmul.f32 %v660, 1.442695
  %v662 = vpow.pop %v661
  %v663 = vadd.f32 %v662, 1.0
  %v664 = vrcp.pop %v663
  %v665 = vmul.f32 %v663, %v664
  %v666 = vsub.f32 1.0, %v665
  %v667 = vmul.f32 %v664, %v666
  %v668 = vadd.f32 %v664, %v667
  %vm669 = vweird.f32 %v663
  %vm670 = vweird.f32 %v664
  %vm671 = vmor %vm669, %vm670
  %v672 = vsel %vm671, %v664, %v668
  %v673 = vand.u32 2147483647, %v663
  %vm674 = vcmp.eq.f32.partialorder %v673, 8.507059e+37
  %v675 = vand.u32 %v663, 2147483648
  %v676 = vor.u32 1.1754944e-38, %v675
  %v677 = vsel %vm674, %v676, %v672
  %v678 = vmul.f32 1.0, %v677
  %680 = vrot.lane.b32.xlu0 %v657, 64
  %v681 = vpop.permute.xlu0 %680
  %v683 = vmul.f32 %v678, %v681
  %685 = vrot.lane.b32.xlu0 %v683, 64
  %v686 = vpop.permute.xlu0 %685
  %v688 = vadd.f32 %v273, %v686
  %v689 = vtanh.pop %v688
  %v690 = vsub.f32 1.0, %v678
  %692 = vrot.lane.b32.xlu0 %v689, 96
  %v693 = vpop.permute.xlu0 %692
  %v695 = vmul.f32 %v690, %v693
  %v696 = vmul.f32 %v678, %v631
  %v697 = vadd.f32 %v695, %v696
  %699 = vrot.lane.b32.xlu0 %v697, 96
  %v700 = vpop.permute.xlu0 %699
  %702 = vst.msk [vmem:[#allocation2 + $0x10] sm:$0xff] %vm503, %v700
  %v703 = vsel %vm503, %v700, 0
  %705 = vmatpush.msra.mxu0 0.0
  %706 = vmatpush.msra.mxu0 0.0
  %707 = vmatpush.msra.mxu0 0.0
  %708 = vmatpush.msra.mxu0 0.0
  %709 = vmatpush.msra.mxu0 0.0
  %710 = vmatpush.msra.mxu0 0.0
  %711 = vmatpush.msra.mxu0 0.0
  %712 = vmatpush.msra.mxu0 0.0
  %713 = vmatpush.msra.mxu0 0.0
  %714 = vmatpush.msra.mxu0 0.0
  %715 = vmatpush.msra.mxu0 0.0
  %716 = vmatpush.msra.mxu0 0.0
  %717 = vmatpush.msra.mxu0 %v44
  %718 = vmatpush.msra.mxu0 %v43
  %719 = vmatpush.msra.mxu0 %v42
  %720 = vmatpush.msra.mxu0 %v41
  %721 = vmatmul.f32.gmra.mxu0 %v703
  %v722 = vpop.f32.mrf.mxu0
  %v723 = vadd.f32 %v500, %v722
  %724 = vdwg.mxu0
  %v725 = vadd.f32 %v274, %v723
  %v726 = vsub.f32 0.0, %v725
  %v727 = vmul.f32 %v726, 1.442695
  %v728 = vpow.pop %v727
  %v729 = vadd.f32 %v728, 1.0
  %v730 = vrcp.pop %v729
  %v731 = vmul.f32 %v729, %v730
  %v732 = vsub.f32 1.0, %v731
  %v733 = vmul.f32 %v730, %v732
  %v734 = vadd.f32 %v730, %v733
  %vm735 = vweird.f32 %v729
  %vm736 = vweird.f32 %v730
  %vm737 = vmor %vm735, %vm736
  %v738 = vsel %vm737, %v730, %v734
  %v739 = vand.u32 2147483647, %v729
  %vm740 = vcmp.eq.f32.partialorder %v739, 8.507059e+37
  %v741 = vand.u32 %v729, 2147483648
  %v742 = vor.u32 1.1754944e-38, %v741
  %v743 = vsel %vm740, %v742, %v738
  %v744 = vmul.f32 1.0, %v743
  %746 = vrot.lane.b32.xlu0 %v723, 64
  %v747 = vpop.permute.xlu0 %746
  %v749 = vmul.f32 %v744, %v747
  %751 = vrot.lane.b32.xlu0 %v749, 64
  %v752 = vpop.permute.xlu0 %751
  %v754 = vadd.f32 %v274, %v752
  %v755 = vtanh.pop %v754
  %v756 = vsub.f32 1.0, %v744
  %758 = vrot.lane.b32.xlu0 %v755, 96
  %v759 = vpop.permute.xlu0 %758
  %v761 = vmul.f32 %v756, %v759
  %v762 = vmul.f32 %v744, %v697
  %v763 = vadd.f32 %v761, %v762
  %765 = vrot.lane.b32.xlu0 %v763, 96
  %v766 = vpop.permute.xlu0 %765
  %768 = vst.msk [vmem:[#allocation2 + $0x18] sm:$0xff] %vm503, %v766
  %v769 = vsel %vm503, %v766, 0
  %771 = vmatpush.msra.mxu0 0.0
  %772 = vmatpush.msra.mxu0 0.0
  %773 = vmatpush.msra.mxu0 0.0
  %774 = vmatpush.msra.mxu0 0.0
  %775 = vmatpush.msra.mxu0 0.0
  %776 = vmatpush.msra.mxu0 0.0
  %777 = vmatpush.msra.mxu0 0.0
  %778 = vmatpush.msra.mxu0 0.0
  %779 = vmatpush.msra.mxu0 0.0
  %780 = vmatpush.msra.mxu0 0.0
  %781 = vmatpush.msra.mxu0 0.0
  %782 = vmatpush.msra.mxu0 0.0
  %783 = vmatpush.msra.mxu0 %v44
  %784 = vmatpush.msra.mxu0 %v43
  %785 = vmatpush.msra.mxu0 %v42
  %786 = vmatpush.msra.mxu0 %v41
  %787 = vmatmul.f32.gmra.mxu0 %v769
  %v788 = vpop.f32.mrf.mxu0
  %v789 = vadd.f32 %v500, %v788
  %790 = vdwg.mxu0
  %v791 = vadd.f32 %v275, %v789
  %v792 = vsub.f32 0.0, %v791
  %v793 = vmul.f32 %v792, 1.442695
  %v794 = vpow.pop %v793
  %v795 = vadd.f32 %v794, 1.0
  %v796 = vrcp.pop %v795
  %v797 = vmul.f32 %v795, %v796
  %v798 = vsub.f32 1.0, %v797
  %v799 = vmul.f32 %v796, %v798
  %v800 = vadd.f32 %v796, %v799
  %vm801 = vweird.f32 %v795
  %vm802 = vweird.f32 %v796
  %vm803 = vmor %vm801, %vm802
  %v804 = vsel %vm803, %v796, %v800
  %v805 = vand.u32 2147483647, %v795
  %vm806 = vcmp.eq.f32.partialorder %v805, 8.507059e+37
  %v807 = vand.u32 %v795, 2147483648
  %v808 = vor.u32 1.1754944e-38, %v807
  %v809 = vsel %vm806, %v808, %v804
  %v810 = vmul.f32 1.0, %v809
  %812 = vrot.lane.b32.xlu0 %v789, 64
  %v813 = vpop.permute.xlu0 %812
  %v815 = vmul.f32 %v810, %v813
  %817 = vrot.lane.b32.xlu0 %v815, 64
  %v818 = vpop.permute.xlu0 %817
  %v820 = vadd.f32 %v275, %v818
  %v821 = vtanh.pop %v820
  %v822 = vsub.f32 1.0, %v810
  %824 = vrot.lane.b32.xlu0 %v821, 96
  %v825 = vpop.permute.xlu0 %824
  %v827 = vmul.f32 %v822, %v825
  %v828 = vmul.f32 %v810, %v763
  %v829 = vadd.f32 %v827, %v828
  %831 = vrot.lane.b32.xlu0 %v829, 96
  %v832 = vpop.permute.xlu0 %831
  %834 = vst.msk [vmem:[#allocation2 + $0x20] sm:$0xff] %vm503, %v832
  %v835 = vsel %vm503, %v832, 0
  %837 = vmatpush.msra.mxu0 0.0
  %838 = vmatpush.msra.mxu0 0.0
  %839 = vmatpush.msra.mxu0 0.0
  %840 = vmatpush.msra.mxu0 0.0
  %841 = vmatpush.msra.mxu0 0.0
  %842 = vmatpush.msra.mxu0 0.0
  %843 = vmatpush.msra.mxu0 0.0
  %844 = vmatpush.msra.mxu0 0.0
  %845 = vmatpush.msra.mxu0 0.0
  %846 = vmatpush.msra.mxu0 0.0
  %847 = vmatpush.msra.mxu0 0.0
  %848 = vmatpush.msra.mxu0 0.0
  %849 = vmatpush.msra.mxu0 %v44
  %850 = vmatpush.msra.mxu0 %v43
  %851 = vmatpush.msra.mxu0 %v42
  %852 = vmatpush.msra.mxu0 %v41
  %853 = vmatmul.f32.gmra.mxu0 %v835
  %v854 = vpop.f32.mrf.mxu0
  %v855 = vadd.f32 %v500, %v854
  %856 = vdwg.mxu0
  %v857 = vadd.f32 %v276, %v855
  %v858 = vsub.f32 0.0, %v857
  %v859 = vmul.f32 %v858, 1.442695
  %v860 = vpow.pop %v859
  %v861 = vadd.f32 %v860, 1.0
  %v862 = vrcp.pop %v861
  %v863 = vmul.f32 %v861, %v862
  %v864 = vsub.f32 1.0, %v863
  %v865 = vmul.f32 %v862, %v864
  %v866 = vadd.f32 %v862, %v865
  %vm867 = vweird.f32 %v861
  %vm868 = vweird.f32 %v862
  %vm869 = vmor %vm867, %vm868
  %v870 = vsel %vm869, %v862, %v866
  %v871 = vand.u32 2147483647, %v861
  %vm872 = vcmp.eq.f32.partialorder %v871, 8.507059e+37
  %v873 = vand.u32 %v861, 2147483648
  %v874 = vor.u32 1.1754944e-38, %v873
  %v875 = vsel %vm872, %v874, %v870
  %v876 = vmul.f32 1.0, %v875
  %878 = vrot.lane.b32.xlu0 %v855, 64
  %v879 = vpop.permute.xlu0 %878
  %v881 = vmul.f32 %v876, %v879
  %883 = vrot.lane.b32.xlu0 %v881, 64
  %v884 = vpop.permute.xlu0 %883
  %v886 = vadd.f32 %v276, %v884
  %v887 = vtanh.pop %v886
  %v888 = vsub.f32 1.0, %v876
  %890 = vrot.lane.b32.xlu0 %v887, 96
  %v891 = vpop.permute.xlu0 %890
  %v893 = vmul.f32 %v888, %v891
  %v894 = vmul.f32 %v876, %v829
  %v895 = vadd.f32 %v893, %v894
  %897 = vrot.lane.b32.xlu0 %v895, 96
  %v898 = vpop.permute.xlu0 %897
  %900 = vst.msk [vmem:[#allocation2 + $0x28] sm:$0xff] %vm503, %v898
  %v901 = vsel %vm503, %v898, 0
  %903 = vmatpush.msra.mxu0 0.0
  %904 = vmatpush.msra.mxu0 0.0
  %905 = vmatpush.msra.mxu0 0.0
  %906 = vmatpush.msra.mxu0 0.0
  %907 = vmatpush.msra.mxu0 0.0
  %908 = vmatpush.msra.mxu0 0.0
  %909 = vmatpush.msra.mxu0 0.0
  %910 = vmatpush.msra.mxu0 0.0
  %911 = vmatpush.msra.mxu0 0.0
  %912 = vmatpush.msra.mxu0 0.0
  %913 = vmatpush.msra.mxu0 0.0
  %914 = vmatpush.msra.mxu0 0.0
  %915 = vmatpush.msra.mxu0 %v44
  %916 = vmatpush.msra.mxu0 %v43
  %917 = vmatpush.msra.mxu0 %v42
  %918 = vmatpush.msra.mxu0 %v41
  %919 = vmatmul.f32.gmra.mxu0 %v901
  %v920 = vpop.f32.mrf.mxu0
  %v921 = vadd.f32 %v500, %v920
  %922 = vdwg.mxu0
  %v923 = vadd.f32 %v277, %v921
  %v924 = vsub.f32 0.0, %v923
  %v925 = vmul.f32 %v924, 1.442695
  %v926 = vpow.pop %v925
  %v927 = vadd.f32 %v926, 1.0
  %v928 = vrcp.pop %v927
  %v929 = vmul.f32 %v927, %v928
  %v930 = vsub.f32 1.0, %v929
  %v931 = vmul.f32 %v928, %v930
  %v932 = vadd.f32 %v928, %v931
  %vm933 = vweird.f32 %v927
  %vm934 = vweird.f32 %v928
  %vm935 = vmor %vm933, %vm934
  %v936 = vsel %vm935, %v928, %v932
  %v937 = vand.u32 2147483647, %v927
  %vm938 = vcmp.eq.f32.partialorder %v937, 8.507059e+37
  %v939 = vand.u32 %v927, 2147483648
  %v940 = vor.u32 1.1754944e-38, %v939
  %v941 = vsel %vm938, %v940, %v936
  %v942 = vmul.f32 1.0, %v941
  %944 = vrot.lane.b32.xlu0 %v921, 64
  %v945 = vpop.permute.xlu0 %944
  %v947 = vmul.f32 %v942, %v945
  %949 = vrot.lane.b32.xlu0 %v947, 64
  %v950 = vpop.permute.xlu0 %949
  %v952 = vadd.f32 %v277, %v950
  %v953 = vtanh.pop %v952
  %v954 = vsub.f32 1.0, %v942
  %956 = vrot.lane.b32.xlu0 %v953, 96
  %v957 = vpop.permute.xlu0 %956
  %v959 = vmul.f32 %v954, %v957
  %v960 = vmul.f32 %v942, %v895
  %v961 = vadd.f32 %v959, %v960
  %963 = vrot.lane.b32.xlu0 %v961, 96
  %v964 = vpop.permute.xlu0 %963
  %966 = vst.msk [vmem:[#allocation2 + $0x30] sm:$0xff] %vm503, %v964
  %v967 = vsel %vm503, %v964, 0
  %969 = vmatpush.msra.mxu0 0.0
  %970 = vmatpush.msra.mxu0 0.0
  %971 = vmatpush.msra.mxu0 0.0
  %972 = vmatpush.msra.mxu0 0.0
  %973 = vmatpush.msra.mxu0 0.0
  %974 = vmatpush.msra.mxu0 0.0
  %975 = vmatpush.msra.mxu0 0.0
  %976 = vmatpush.msra.mxu0 0.0
  %977 = vmatpush.msra.mxu0 0.0
  %978 = vmatpush.msra.mxu0 0.0
  %979 = vmatpush.msra.mxu0 0.0
  %980 = vmatpush.msra.mxu0 0.0
  %981 = vmatpush.msra.mxu0 %v44
  %982 = vmatpush.msra.mxu0 %v43
  %983 = vmatpush.msra.mxu0 %v42
  %984 = vmatpush.msra.mxu0 %v41
  %985 = vmatmul.f32.gmra.mxu0 %v967
  %v986 = vpop.f32.mrf.mxu0
  %v987 = vadd.f32 %v500, %v986
  %988 = vdwg.mxu0
  %v989 = vadd.f32 %v278, %v987
  %v990 = vsub.f32 0.0, %v989
  %v991 = vmul.f32 %v990, 1.442695
  %v992 = vpow.pop %v991
  %v993 = vadd.f32 %v992, 1.0
  %v994 = vrcp.pop %v993
  %v995 = vmul.f32 %v993, %v994
  %v996 = vsub.f32 1.0, %v995
  %v997 = vmul.f32 %v994, %v996
  %v998 = vadd.f32 %v994, %v997
  %vm999 = vweird.f32 %v993
  %vm1000 = vweird.f32 %v994
  %vm1001 = vmor %vm999, %vm1000
  %v1002 = vsel %vm1001, %v994, %v998
  %v1003 = vand.u32 2147483647, %v993
  %vm1004 = vcmp.eq.f32.partialorder %v1003, 8.507059e+37
  %v1005 = vand.u32 %v993, 2147483648
  %v1006 = vor.u32 1.1754944e-38, %v1005
  %v1007 = vsel %vm1004, %v1006, %v1002
  %v1008 = vmul.f32 1.0, %v1007
  %1010 = vrot.lane.b32.xlu0 %v987, 64
  %v1011 = vpop.permute.xlu0 %1010
  %v1013 = vmul.f32 %v1008, %v1011
  %1015 = vrot.lane.b32.xlu0 %v1013, 64
  %v1016 = vpop.permute.xlu0 %1015
  %v1018 = vadd.f32 %v278, %v1016
  %v1019 = vtanh.pop %v1018
  %v1020 = vsub.f32 1.0, %v1008
  %1022 = vrot.lane.b32.xlu0 %v1019, 96
  %v1023 = vpop.permute.xlu0 %1022
  %v1025 = vmul.f32 %v1020, %v1023
  %v1026 = vmul.f32 %v1008, %v961
  %v1027 = vadd.f32 %v1025, %v1026
  %1029 = vrot.lane.b32.xlu0 %v1027, 96
  %v1030 = vpop.permute.xlu0 %1029
  %1032 = vst.msk [vmem:[#allocation2 + $0x38] sm:$0xff] %vm503, %v1030
  %v1033 = vsel %vm503, %v1030, 0
  %1035 = vmatpush.msra.mxu0 0.0
  %1036 = vmatpush.msra.mxu0 0.0
  %1037 = vmatpush.msra.mxu0 0.0
  %1038 = vmatpush.msra.mxu0 0.0
  %1039 = vmatpush.msra.mxu0 0.0
  %1040 = vmatpush.msra.mxu0 0.0
  %1041 = vmatpush.msra.mxu0 0.0
  %1042 = vmatpush.msra.mxu0 0.0
  %1043 = vmatpush.msra.mxu0 0.0
  %1044 = vmatpush.msra.mxu0 0.0
  %1045 = vmatpush.msra.mxu0 0.0
  %1046 = vmatpush.msra.mxu0 0.0
  %1047 = vmatpush.msra.mxu0 %v48
  %1048 = vmatpush.msra.mxu0 %v47
  %1049 = vmatpush.msra.mxu0 %v46
  %1050 = vmatpush.msra.mxu0 %v45
  %1051 = vmatmul.f32.gmra.mxu0 %v1033
  %v1052 = vpop.f32.mrf.mxu0
  %v1053 = vadd.f32 %v502, %v1052
  %1054 = vdwg.mxu0
  %1056 = vrot.lane.b32.xlu0 %v1053, 96
  %v1057 = vpop.permute.xlu0 %1056
  %v1059 = vadd.f32 %v285, %v1057
  %v1060 = vsub.f32 0.0, %v1059
  %v1061 = vmul.f32 %v1060, 1.442695
  %v1062 = vpow.pop %v1061
  %v1063 = vadd.f32 %v1062, 1.0
  %v1064 = vrcp.pop %v1063
  %v1065 = vmul.f32 %v1063, %v1064
  %v1066 = vsub.f32 1.0, %v1065
  %v1067 = vmul.f32 %v1064, %v1066
  %v1068 = vadd.f32 %v1064, %v1067
  %vm1069 = vweird.f32 %v1063
  %vm1070 = vweird.f32 %v1064
  %vm1071 = vmor %vm1069, %vm1070
  %v1072 = vsel %vm1071, %v1064, %v1068
  %v1073 = vand.u32 2147483647, %v1063
  %vm1074 = vcmp.eq.f32.partialorder %v1073, 8.507059e+37
  %v1075 = vand.u32 %v1063, 2147483648
  %v1076 = vor.u32 1.1754944e-38, %v1075
  %v1077 = vsel %vm1074, %v1076, %v1072
  %v1078 = vmul.f32 1.0, %v1077
  %v1079 = vadd.f32 %v286, %v1057
  %v1080 = vsub.f32 0.0, %v1079
  %v1081 = vmul.f32 %v1080, 1.442695
  %v1082 = vpow.pop %v1081
  %v1083 = vadd.f32 %v1082, 1.0
  %v1084 = vrcp.pop %v1083
  %v1085 = vmul.f32 %v1083, %v1084
  %v1086 = vsub.f32 1.0, %v1085
  %v1087 = vmul.f32 %v1084, %v1086
  %v1088 = vadd.f32 %v1084, %v1087
  %vm1089 = vweird.f32 %v1083
  %vm1090 = vweird.f32 %v1084
  %vm1091 = vmor %vm1089, %vm1090
  %v1092 = vsel %vm1091, %v1084, %v1088
  %v1093 = vand.u32 2147483647, %v1083
  %vm1094 = vcmp.eq.f32.partialorder %v1093, 8.507059e+37
  %v1095 = vand.u32 %v1083, 2147483648
  %v1096 = vor.u32 1.1754944e-38, %v1095
  %v1097 = vsel %vm1094, %v1096, %v1092
  %v1098 = vmul.f32 1.0, %v1097
  %1099 = vrot.lane.b32.xlu0 %v1053, 32
  %v1100 = vpop.permute.xlu0 %1099
  %v1102 = vmul.f32 %v1078, %v1100
  %1104 = vrot.lane.b32.xlu0 %v1102, 64
  %v1105 = vpop.permute.xlu0 %1104
  %v1107 = vadd.f32 %v286, %v1105
  %v1108 = vtanh.pop %v1107
  %v1109 = vsub.f32 1.0, %v1098
  %1111 = vrot.lane.b32.xlu0 %v1108, 96
  %v1112 = vpop.permute.xlu0 %1111
  %v1114 = vmul.f32 %v1109, %v1112
  %v1115 = vmul.f32 %v1098, %v1030
  %v1116 = vadd.f32 %v1114, %v1115
  %1117 = vst.msk [vmem:[#allocation2 + $0x40] sm:$0xff] %vm503, %v1116
  %v1119 = vsel %vm503, %v1116, 0
  %1121 = vmatpush.msra.mxu0 0.0
  %1122 = vmatpush.msra.mxu0 0.0
  %1123 = vmatpush.msra.mxu0 0.0
  %1124 = vmatpush.msra.mxu0 0.0
  %1125 = vmatpush.msra.mxu0 0.0
  %1126 = vmatpush.msra.mxu0 0.0
  %1127 = vmatpush.msra.mxu0 0.0
  %1128 = vmatpush.msra.mxu0 0.0
  %1129 = vmatpush.msra.mxu0 0.0
  %1130 = vmatpush.msra.mxu0 0.0
  %1131 = vmatpush.msra.mxu0 0.0
  %1132 = vmatpush.msra.mxu0 0.0
  %1133 = vmatpush.msra.mxu0 %v48
  %1134 = vmatpush.msra.mxu0 %v47
  %1135 = vmatpush.msra.mxu0 %v46
  %1136 = vmatpush.msra.mxu0 %v45
  %1137 = vmatmul.f32.gmra.mxu0 %v1119
  %v1138 = vpop.f32.mrf.mxu0
  %v1139 = vadd.f32 %v502, %v1138
  %1140 = vdwg.mxu0
  %1142 = vrot.lane.b32.xlu0 %v1139, 96
  %v1143 = vpop.permute.xlu0 %1142
  %v1145 = vadd.f32 %v287, %v1143
  %v1146 = vsub.f32 0.0, %v1145
  %v1147 = vmul.f32 %v1146, 1.442695
  %v1148 = vpow.pop %v1147
  %v1149 = vadd.f32 %v1148, 1.0
  %v1150 = vrcp.pop %v1149
  %v1151 = vmul.f32 %v1149, %v1150
  %v1152 = vsub.f32 1.0, %v1151
  %v1153 = vmul.f32 %v1150, %v1152
  %v1154 = vadd.f32 %v1150, %v1153
  %vm1155 = vweird.f32 %v1149
  %vm1156 = vweird.f32 %v1150
  %vm1157 = vmor %vm1155, %vm1156
  %v1158 = vsel %vm1157, %v1150, %v1154
  %v1159 = vand.u32 2147483647, %v1149
  %vm1160 = vcmp.eq.f32.partialorder %v1159, 8.507059e+37
  %v1161 = vand.u32 %v1149, 2147483648
  %v1162 = vor.u32 1.1754944e-38, %v1161
  %v1163 = vsel %vm1160, %v1162, %v1158
  %v1164 = vmul.f32 1.0, %v1163
  %v1165 = vadd.f32 %v288, %v1143
  %v1166 = vsub.f32 0.0, %v1165
  %v1167 = vmul.f32 %v1166, 1.442695
  %v1168 = vpow.pop %v1167
  %v1169 = vadd.f32 %v1168, 1.0
  %v1170 = vrcp.pop %v1169
  %v1171 = vmul.f32 %v1169, %v1170
  %v1172 = vsub.f32 1.0, %v1171
  %v1173 = vmul.f32 %v1170, %v1172
  %v1174 = vadd.f32 %v1170, %v1173
  %vm1175 = vweird.f32 %v1169
  %vm1176 = vweird.f32 %v1170
  %vm1177 = vmor %vm1175, %vm1176
  %v1178 = vsel %vm1177, %v1170, %v1174
  %v1179 = vand.u32 2147483647, %v1169
  %vm1180 = vcmp.eq.f32.partialorder %v1179, 8.507059e+37
  %v1181 = vand.u32 %v1169, 2147483648
  %v1182 = vor.u32 1.1754944e-38, %v1181
  %v1183 = vsel %vm1180, %v1182, %v1178
  %v1184 = vmul.f32 1.0, %v1183
  %1185 = vrot.lane.b32.xlu0 %v1139, 32
  %v1186 = vpop.permute.xlu0 %1185
  %v1188 = vmul.f32 %v1164, %v1186
  %1190 = vrot.lane.b32.xlu0 %v1188, 64
  %v1191 = vpop.permute.xlu0 %1190
  %v1193 = vadd.f32 %v288, %v1191
  %v1194 = vtanh.pop %v1193
  %v1195 = vsub.f32 1.0, %v1184
  %1197 = vrot.lane.b32.xlu0 %v1194, 96
  %v1198 = vpop.permute.xlu0 %1197
  %v1200 = vmul.f32 %v1195, %v1198
  %v1201 = vmul.f32 %v1184, %v1116
  %v1202 = vadd.f32 %v1200, %v1201
  %1203 = vst.msk [vmem:[#allocation2 + $0x48] sm:$0xff] %vm503, %v1202
  %v1205 = vsel %vm503, %v1202, 0
  %1207 = vmatpush.msra.mxu0 0.0
  %1208 = vmatpush.msra.mxu0 0.0
  %1209 = vmatpush.msra.mxu0 0.0
  %1210 = vmatpush.msra.mxu0 0.0
  %1211 = vmatpush.msra.mxu0 0.0
  %1212 = vmatpush.msra.mxu0 0.0
  %1213 = vmatpush.msra.mxu0 0.0
  %1214 = vmatpush.msra.mxu0 0.0
  %1215 = vmatpush.msra.mxu0 0.0
  %1216 = vmatpush.msra.mxu0 0.0
  %1217 = vmatpush.msra.mxu0 0.0
  %1218 = vmatpush.msra.mxu0 0.0
  %1219 = vmatpush.msra.mxu0 %v48
  %1220 = vmatpush.msra.mxu0 %v47
  %1221 = vmatpush.msra.mxu0 %v46
  %1222 = vmatpush.msra.mxu0 %v45
  %1223 = vmatmul.f32.gmra.mxu0 %v1205
  %v1224 = vpop.f32.mrf.mxu0
  %v1225 = vadd.f32 %v502, %v1224
  %1226 = vdwg.mxu0
  %1228 = vrot.lane.b32.xlu0 %v1225, 96
  %v1229 = vpop.permute.xlu0 %1228
  %v1231 = vadd.f32 %v289, %v1229
  %v1232 = vsub.f32 0.0, %v1231
  %v1233 = vmul.f32 %v1232, 1.442695
  %v1234 = vpow.pop %v1233
  %v1235 = vadd.f32 %v1234, 1.0
  %v1236 = vrcp.pop %v1235
  %v1237 = vmul.f32 %v1235, %v1236
  %v1238 = vsub.f32 1.0, %v1237
  %v1239 = vmul.f32 %v1236, %v1238
  %v1240 = vadd.f32 %v1236, %v1239
  %vm1241 = vweird.f32 %v1235
  %vm1242 = vweird.f32 %v1236
  %vm1243 = vmor %vm1241, %vm1242
  %v1244 = vsel %vm1243, %v1236, %v1240
  %v1245 = vand.u32 2147483647, %v1235
  %vm1246 = vcmp.eq.f32.partialorder %v1245, 8.507059e+37
  %v1247 = vand.u32 %v1235, 2147483648
  %v1248 = vor.u32 1.1754944e-38, %v1247
  %v1249 = vsel %vm1246, %v1248, %v1244
  %v1250 = vmul.f32 1.0, %v1249
  %v1251 = vadd.f32 %v290, %v1229
  %v1252 = vsub.f32 0.0, %v1251
  %v1253 = vmul.f32 %v1252, 1.442695
  %v1254 = vpow.pop %v1253
  %v1255 = vadd.f32 %v1254, 1.0
  %v1256 = vrcp.pop %v1255
  %v1257 = vmul.f32 %v1255, %v1256
  %v1258 = vsub.f32 1.0, %v1257
  %v1259 = vmul.f32 %v1256, %v1258
  %v1260 = vadd.f32 %v1256, %v1259
  %vm1261 = vweird.f32 %v1255
  %vm1262 = vweird.f32 %v1256
  %vm1263 = vmor %vm1261, %vm1262
  %v1264 = vsel %vm1263, %v1256, %v1260
  %v1265 = vand.u32 2147483647, %v1255
  %vm1266 = vcmp.eq.f32.partialorder %v1265, 8.507059e+37
  %v1267 = vand.u32 %v1255, 2147483648
  %v1268 = vor.u32 1.1754944e-38, %v1267
  %v1269 = vsel %vm1266, %v1268, %v1264
  %v1270 = vmul.f32 1.0, %v1269
  %1271 = vrot.lane.b32.xlu0 %v1225, 32
  %v1272 = vpop.permute.xlu0 %1271
  %v1274 = vmul.f32 %v1250, %v1272
  %1276 = vrot.lane.b32.xlu0 %v1274, 64
  %v1277 = vpop.permute.xlu0 %1276
  %v1279 = vadd.f32 %v290, %v1277
  %v1280 = vtanh.pop %v1279
  %v1281 = vsub.f32 1.0, %v1270
  %1283 = vrot.lane.b32.xlu0 %v1280, 96
  %v1284 = vpop.permute.xlu0 %1283
  %v1286 = vmul.f32 %v1281, %v1284
  %v1287 = vmul.f32 %v1270, %v1202
  %v1288 = vadd.f32 %v1286, %v1287
  %1289 = vst.msk [vmem:[#allocation2 + $0x50] sm:$0xff] %vm503, %v1288
  %v1291 = vsel %vm503, %v1288, 0
  %1293 = vmatpush.msra.mxu0 0.0
  %1294 = vmatpush.msra.mxu0 0.0
  %1295 = vmatpush.msra.mxu0 0.0
  %1296 = vmatpush.msra.mxu0 0.0
  %1297 = vmatpush.msra.mxu0 0.0
  %1298 = vmatpush.msra.mxu0 0.0
  %1299 = vmatpush.msra.mxu0 0.0
  %1300 = vmatpush.msra.mxu0 0.0
  %1301 = vmatpush.msra.mxu0 0.0
  %1302 = vmatpush.msra.mxu0 0.0
  %1303 = vmatpush.msra.mxu0 0.0
  %1304 = vmatpush.msra.mxu0 0.0
  %1305 = vmatpush.msra.mxu0 %v48
  %1306 = vmatpush.msra.mxu0 %v47
  %1307 = vmatpush.msra.mxu0 %v46
  %1308 = vmatpush.msra.mxu0 %v45
  %1309 = vmatmul.f32.gmra.mxu0 %v1291
  %v1310 = vpop.f32.mrf.mxu0
  %v1311 = vadd.f32 %v502, %v1310
  %1312 = vdwg.mxu0
  %1314 = vrot.lane.b32.xlu0 %v1311, 96
  %v1315 = vpop.permute.xlu0 %1314
  %v1317 = vadd.f32 %v291, %v1315
  %v1318 = vsub.f32 0.0, %v1317
  %v1319 = vmul.f32 %v1318, 1.442695
  %v1320 = vpow.pop %v1319
  %v1321 = vadd.f32 %v1320, 1.0
  %v1322 = vrcp.pop %v1321
  %v1323 = vmul.f32 %v1321, %v1322
  %v1324 = vsub.f32 1.0, %v1323
  %v1325 = vmul.f32 %v1322, %v1324
  %v1326 = vadd.f32 %v1322, %v1325
  %vm1327 = vweird.f32 %v1321
  %vm1328 = vweird.f32 %v1322
  %vm1329 = vmor %vm1327, %vm1328
  %v1330 = vsel %vm1329, %v1322, %v1326
  %v1331 = vand.u32 2147483647, %v1321
  %vm1332 = vcmp.eq.f32.partialorder %v1331, 8.507059e+37
  %v1333 = vand.u32 %v1321, 2147483648
  %v1334 = vor.u32 1.1754944e-38, %v1333
  %v1335 = vsel %vm1332, %v1334, %v1330
  %v1336 = vmul.f32 1.0, %v1335
  %v1337 = vadd.f32 %v292, %v1315
  %v1338 = vsub.f32 0.0, %v1337
  %v1339 = vmul.f32 %v1338, 1.442695
  %v1340 = vpow.pop %v1339
  %v1341 = vadd.f32 %v1340, 1.0
  %v1342 = vrcp.pop %v1341
  %v1343 = vmul.f32 %v1341, %v1342
  %v1344 = vsub.f32 1.0, %v1343
  %v1345 = vmul.f32 %v1342, %v1344
  %v1346 = vadd.f32 %v1342, %v1345
  %vm1347 = vweird.f32 %v1341
  %vm1348 = vweird.f32 %v1342
  %vm1349 = vmor %vm1347, %vm1348
  %v1350 = vsel %vm1349, %v1342, %v1346
  %v1351 = vand.u32 2147483647, %v1341
  %vm1352 = vcmp.eq.f32.partialorder %v1351, 8.507059e+37
  %v1353 = vand.u32 %v1341, 2147483648
  %v1354 = vor.u32 1.1754944e-38, %v1353
  %v1355 = vsel %vm1352, %v1354, %v1350
  %v1356 = vmul.f32 1.0, %v1355
  %1357 = vrot.lane.b32.xlu0 %v1311, 32
  %v1358 = vpop.permute.xlu0 %1357
  %v1360 = vmul.f32 %v1336, %v1358
  %1362 = vrot.lane.b32.xlu0 %v1360, 64
  %v1363 = vpop.permute.xlu0 %1362
  %v1365 = vadd.f32 %v292, %v1363
  %v1366 = vtanh.pop %v1365
  %v1367 = vsub.f32 1.0, %v1356
  %1369 = vrot.lane.b32.xlu0 %v1366, 96
  %v1370 = vpop.permute.xlu0 %1369
  %v1372 = vmul.f32 %v1367, %v1370
  %v1373 = vmul.f32 %v1356, %v1288
  %v1374 = vadd.f32 %v1372, %v1373
  %1375 = vst.msk [vmem:[#allocation2 + $0x58] sm:$0xff] %vm503, %v1374
  %v1376 = vld [vmem:[#allocation2 + $0x40] sm:$0xff]
  %v1377 = vld [vmem:[#allocation2 + $0x48] sm:$0xff]
  %v1378 = vld [vmem:[#allocation2 + $0x50] sm:$0xff]
  %v1379 = vld [vmem:[#allocation2 + $0x58] sm:$0xff]
  %v1380 = vld [vmem:[%s2 + $0x5] sm:$0x1]
  %v1381 = vperm.slane %v1380, 0
  %v1383 = vsel %vm503, %v1376, 0
  %v1386 = vsel %vm503, %v1377, 0
  %v1389 = vsel %vm503, %v1378, 0
  %v1392 = vsel %vm503, %v1379, 0
  %1394 = vmatpush.msra.mxu0 0.0
  %1395 = vmatpush.msra.mxu0 0.0
  %1396 = vmatpush.msra.mxu0 0.0
  %1397 = vmatpush.msra.mxu0 0.0
  %1398 = vmatpush.msra.mxu0 0.0
  %1399 = vmatpush.msra.mxu0 0.0
  %1400 = vmatpush.msra.mxu0 0.0
  %1401 = vmatpush.msra.mxu0 0.0
  %1402 = vmatpush.msra.mxu0 0.0
  %1403 = vmatpush.msra.mxu0 0.0
  %1404 = vmatpush.msra.mxu0 0.0
  %1405 = vmatpush.msra.mxu0 0.0
  %1406 = vmatpush.msra.mxu0 %v52
  %1407 = vmatpush.msra.mxu0 %v51
  %1408 = vmatpush.msra.mxu0 %v50
  %1409 = vmatpush.msra.mxu0 %v49
  %1410 = vmatmul.f32.gmra.mxu0 %v1383
  %v1411 = vpop.f32.mrf.mxu0
  %v1412 = vadd.f32 %v1381, %v1411
  %1413 = vmatmul.f32.gmra.mxu0 %v1386
  %v1414 = vpop.f32.mrf.mxu0
  %v1415 = vadd.f32 %v1381, %v1414
  %1416 = vmatmul.f32.gmra.mxu0 %v1389
  %v1417 = vpop.f32.mrf.mxu0
  %v1418 = vadd.f32 %v1381, %v1417
  %1419 = vmatmul.f32.gmra.mxu0 %v1392
  %v1420 = vpop.f32.mrf.mxu0
  %v1421 = vadd.f32 %v1381, %v1420
  %1422 = vdwg.mxu0
  %1423 = vst.msk [vmem:[#allocation2 + $0x40] sm:$0xff] %vm503, %v1412
  %1424 = vst.msk [vmem:[#allocation2 + $0x48] sm:$0xff] %vm503, %v1415
  %1425 = vst.msk [vmem:[#allocation2 + $0x50] sm:$0xff] %vm503, %v1418
  %1426 = vst.msk [vmem:[#allocation2 + $0x58] sm:$0xff] %vm503, %v1421
  %v1427 = vld [vmem:[#allocation2] sm:$0xff]
  %v1428 = vld [vmem:[#allocation2 + $0x8] sm:$0xff]
  %v1429 = vld [vmem:[#allocation2 + $0x10] sm:$0xff]
  %v1430 = vld [vmem:[#allocation2 + $0x18] sm:$0xff]
  %v1431 = vld [vmem:[#allocation2 + $0x20] sm:$0xff]
  %v1432 = vld [vmem:[#allocation2 + $0x28] sm:$0xff]
  %v1433 = vld [vmem:[#allocation2 + $0x30] sm:$0xff]
  %v1434 = vld [vmem:[#allocation2 + $0x38] sm:$0xff]
  %v1435 = vld [vmem:[#allocation2 + $0x40] sm:$0xff]
  %v1436 = vld [vmem:[#allocation2 + $0x48] sm:$0xff]
  %v1437 = vld [vmem:[#allocation2 + $0x50] sm:$0xff]
  %v1438 = vld [vmem:[#allocation2 + $0x58] sm:$0xff]
  %v1439 = vadd.f32 %v1427, %v487
  %v1440 = vadd.f32 %v1428, %v488
  %v1441 = vadd.f32 %v1429, %v489
  %v1442 = vadd.f32 %v1430, %v490
  %v1443 = vadd.f32 %v1431, %v491
  %v1444 = vadd.f32 %v1432, %v492
  %v1445 = vadd.f32 %v1433, %v493
  %v1446 = vadd.f32 %v1434, %v494
  %v1447 = vadd.f32 %v1435, %v495
  %v1448 = vadd.f32 %v1436, %v496
  %v1449 = vadd.f32 %v1437, %v497
  %v1450 = vadd.f32 %v1438, %v498
  %v1451 = vld [vmem:[%s2 + $0x8] sm:$0x1]
  %v1452 = vld [vmem:[%s2 + $0x9] sm:$0x1]
  %v1453 = vsel %vm503, %v1439, 0.0
  %1454 = vadd.xlane.f32.xlu0 %v1453
  %v1455 = vpop.xlane.xlu0 %1454
  %v1456 = vsel %vm503, %v1440, 0.0
  %1457 = vadd.xlane.f32.xlu0 %v1456
  %v1458 = vpop.xlane.xlu0 %1457
  %v1459 = vsel %vm503, %v1441, 0.0
  %1460 = vadd.xlane.f32.xlu0 %v1459
  %v1461 = vpop.xlane.xlu0 %1460
  %v1462 = vsel %vm503, %v1442, 0.0
  %1463 = vadd.xlane.f32.xlu0 %v1462
  %v1464 = vpop.xlane.xlu0 %1463
  %v1465 = vsel %vm503, %v1443, 0.0
  %1466 = vadd.xlane.f32.xlu0 %v1465
  %v1467 = vpop.xlane.xlu0 %1466
  %v1468 = vsel %vm503, %v1444, 0.0
  %1469 = vadd.xlane.f32.xlu0 %v1468
  %v1470 = vpop.xlane.xlu0 %1469
  %v1471 = vsel %vm503, %v1445, 0.0
  %1472 = vadd.xlane.f32.xlu0 %v1471
  %v1473 = vpop.xlane.xlu0 %1472
  %v1474 = vsel %vm503, %v1446, 0.0
  %1475 = vadd.xlane.f32.xlu0 %v1474
  %v1476 = vpop.xlane.xlu0 %1475
  %v1477 = vsel %vm503, %v1447, 0.0
  %1478 = vadd.xlane.f32.xlu0 %v1477
  %v1479 = vpop.xlane.xlu0 %1478
  %v1480 = vsel %vm503, %v1448, 0.0
  %1481 = vadd.xlane.f32.xlu0 %v1480
  %v1482 = vpop.xlane.xlu0 %1481
  %v1483 = vsel %vm503, %v1449, 0.0
  %1484 = vadd.xlane.f32.xlu0 %v1483
  %v1485 = vpop.xlane.xlu0 %1484
  %v1486 = vsel %vm503, %v1450, 0.0
  %1487 = vadd.xlane.f32.xlu0 %v1486
  %v1488 = vpop.xlane.xlu0 %1487
  %v1489 = vrcp.pop 32.0
  %v1490 = vmul.f32 32.0, %v1489
  %v1491 = vsub.f32 1.0, %v1490
  %v1492 = vmul.f32 %v1489, %v1491
  %v1493 = vadd.f32 %v1489, %v1492
  %vm1494 = vweird.f32 %v1489
  %v1495 = vsel %vm1494, %v1489, %v1493
  %v1496 = vmul.f32 %v1455, %v1495
  %v1497 = vmul.f32 %v1458, %v1495
  %v1498 = vmul.f32 %v1461, %v1495
  %v1499 = vmul.f32 %v1464, %v1495
  %v1500 = vmul.f32 %v1467, %v1495
  %v1501 = vmul.f32 %v1470, %v1495
  %v1502 = vmul.f32 %v1473, %v1495
  %v1503 = vmul.f32 %v1476, %v1495
  %v1504 = vmul.f32 %v1479, %v1495
  %v1505 = vmul.f32 %v1482, %v1495
  %v1506 = vmul.f32 %v1485, %v1495
  %v1507 = vmul.f32 %v1488, %v1495
  %v1508 = vsub.f32 %v1439, %v1496
  %v1509 = vsub.f32 %v1440, %v1497
  %v1510 = vsub.f32 %v1441, %v1498
  %v1511 = vsub.f32 %v1442, %v1499
  %v1512 = vsub.f32 %v1443, %v1500
  %v1513 = vsub.f32 %v1444, %v1501
  %v1514 = vsub.f32 %v1445, %v1502
  %v1515 = vsub.f32 %v1446, %v1503
  %v1516 = vsub.f32 %v1447, %v1504
  %v1517 = vsub.f32 %v1448, %v1505
  %v1518 = vsub.f32 %v1449, %v1506
  %v1519 = vsub.f32 %v1450, %v1507
  %v1520 = vmul.f32 %v1508, %v1508
  %v1521 = vmul.f32 %v1509, %v1509
  %v1522 = vmul.f32 %v1510, %v1510
  %v1523 = vmul.f32 %v1511, %v1511
  %v1524 = vmul.f32 %v1512, %v1512
  %v1525 = vmul.f32 %v1513, %v1513
  %v1526 = vmul.f32 %v1514, %v1514
  %v1527 = vmul.f32 %v1515, %v1515
  %v1528 = vmul.f32 %v1516, %v1516
  %v1529 = vmul.f32 %v1517, %v1517
  %v1530 = vmul.f32 %v1518, %v1518
  %v1531 = vmul.f32 %v1519, %v1519
  %v1532 = vsel %vm503, %v1520, 0.0
  %1533 = vadd.xlane.f32.xlu0 %v1532
  %v1534 = vpop.xlane.xlu0 %1533
  %v1535 = vsel %vm503, %v1521, 0.0
  %1536 = vadd.xlane.f32.xlu0 %v1535
  %v1537 = vpop.xlane.xlu0 %1536
  %v1538 = vsel %vm503, %v1522, 0.0
  %1539 = vadd.xlane.f32.xlu0 %v1538
  %v1540 = vpop.xlane.xlu0 %1539
  %v1541 = vsel %vm503, %v1523, 0.0
  %1542 = vadd.xlane.f32.xlu0 %v1541
  %v1543 = vpop.xlane.xlu0 %1542
  %v1544 = vsel %vm503, %v1524, 0.0
  %1545 = vadd.xlane.f32.xlu0 %v1544
  %v1546 = vpop.xlane.xlu0 %1545
  %v1547 = vsel %vm503, %v1525, 0.0
  %1548 = vadd.xlane.f32.xlu0 %v1547
  %v1549 = vpop.xlane.xlu0 %1548
  %v1550 = vsel %vm503, %v1526, 0.0
  %1551 = vadd.xlane.f32.xlu0 %v1550
  %v1552 = vpop.xlane.xlu0 %1551
  %v1553 = vsel %vm503, %v1527, 0.0
  %1554 = vadd.xlane.f32.xlu0 %v1553
  %v1555 = vpop.xlane.xlu0 %1554
  %v1556 = vsel %vm503, %v1528, 0.0
  %1557 = vadd.xlane.f32.xlu0 %v1556
  %v1558 = vpop.xlane.xlu0 %1557
  %v1559 = vsel %vm503, %v1529, 0.0
  %1560 = vadd.xlane.f32.xlu0 %v1559
  %v1561 = vpop.xlane.xlu0 %1560
  %v1562 = vsel %vm503, %v1530, 0.0
  %1563 = vadd.xlane.f32.xlu0 %v1562
  %v1564 = vpop.xlane.xlu0 %1563
  %v1565 = vsel %vm503, %v1531, 0.0
  %1566 = vadd.xlane.f32.xlu0 %v1565
  %v1567 = vpop.xlane.xlu0 %1566
  %v1568 = vmul.f32 %v1534, %v1495
  %v1569 = vmul.f32 %v1537, %v1495
  %v1570 = vmul.f32 %v1540, %v1495
  %v1571 = vmul.f32 %v1543, %v1495
  %v1572 = vmul.f32 %v1546, %v1495
  %v1573 = vmul.f32 %v1549, %v1495
  %v1574 = vmul.f32 %v1552, %v1495
  %v1575 = vmul.f32 %v1555, %v1495
  %v1576 = vmul.f32 %v1558, %v1495
  %v1577 = vmul.f32 %v1561, %v1495
  %v1578 = vmul.f32 %v1564, %v1495
  %v1579 = vmul.f32 %v1567, %v1495
  %v1580 = vadd.f32 %v1568, 1e-05
  %v1581 = vadd.f32 %v1569, 1e-05
  %v1582 = vadd.f32 %v1570, 1e-05
  %v1583 = vadd.f32 %v1571, 1e-05
  %v1584 = vadd.f32 %v1572, 1e-05
  %v1585 = vadd.f32 %v1573, 1e-05
  %v1586 = vadd.f32 %v1574, 1e-05
  %v1587 = vadd.f32 %v1575, 1e-05
  %v1588 = vadd.f32 %v1576, 1e-05
  %v1589 = vadd.f32 %v1577, 1e-05
  %v1590 = vadd.f32 %v1578, 1e-05
  %v1591 = vadd.f32 %v1579, 1e-05
  %v1592 = vrsqrt.pop %v1580
  %v1593 = vmul.f32 %v1592, %v1580
  %v1594 = vmul.f32 %v1593, %v1592
  %v1595 = vmul.f32 0.5, %v1594
  %v1596 = vsub.f32 1.5, %v1595
  %v1597 = vmul.f32 %v1592, %v1596
  %vm1598 = vweird.f32 %v1580
  %vm1599 = vweird.f32 %v1592
  %vm1600 = vmor %vm1598, %vm1599
  %v1601 = vsel %vm1600, %v1592, %v1597
  %v1602 = vrsqrt.pop %v1581
  %v1603 = vmul.f32 %v1602, %v1581
  %v1604 = vmul.f32 %v1603, %v1602
  %v1605 = vmul.f32 0.5, %v1604
  %v1606 = vsub.f32 1.5, %v1605
  %v1607 = vmul.f32 %v1602, %v1606
  %vm1608 = vweird.f32 %v1581
  %vm1609 = vweird.f32 %v1602
  %vm1610 = vmor %vm1608, %vm1609
  %v1611 = vsel %vm1610, %v1602, %v1607
  %v1612 = vrsqrt.pop %v1582
  %v1613 = vmul.f32 %v1612, %v1582
  %v1614 = vmul.f32 %v1613, %v1612
  %v1615 = vmul.f32 0.5, %v1614
  %v1616 = vsub.f32 1.5, %v1615
  %v1617 = vmul.f32 %v1612, %v1616
  %vm1618 = vweird.f32 %v1582
  %vm1619 = vweird.f32 %v1612
  %vm1620 = vmor %vm1618, %vm1619
  %v1621 = vsel %vm1620, %v1612, %v1617
  %v1622 = vrsqrt.pop %v1583
  %v1623 = vmul.f32 %v1622, %v1583
  %v1624 = vmul.f32 %v1623, %v1622
  %v1625 = vmul.f32 0.5, %v1624
  %v1626 = vsub.f32 1.5, %v1625
  %v1627 = vmul.f32 %v1622, %v1626
  %vm1628 = vweird.f32 %v1583
  %vm1629 = vweird.f32 %v1622
  %vm1630 = vmor %vm1628, %vm1629
  %v1631 = vsel %vm1630, %v1622, %v1627
  %v1632 = vrsqrt.pop %v1584
  %v1633 = vmul.f32 %v1632, %v1584
  %v1634 = vmul.f32 %v1633, %v1632
  %v1635 = vmul.f32 0.5, %v1634
  %v1636 = vsub.f32 1.5, %v1635
  %v1637 = vmul.f32 %v1632, %v1636
  %vm1638 = vweird.f32 %v1584
  %vm1639 = vweird.f32 %v1632
  %vm1640 = vmor %vm1638, %vm1639
  %v1641 = vsel %vm1640, %v1632, %v1637
  %v1642 = vrsqrt.pop %v1585
  %v1643 = vmul.f32 %v1642, %v1585
  %v1644 = vmul.f32 %v1643, %v1642
  %v1645 = vmul.f32 0.5, %v1644
  %v1646 = vsub.f32 1.5, %v1645
  %v1647 = vmul.f32 %v1642, %v1646
  %vm1648 = vweird.f32 %v1585
  %vm1649 = vweird.f32 %v1642
  %vm1650 = vmor %vm1648, %vm1649
  %v1651 = vsel %vm1650, %v1642, %v1647
  %v1652 = vrsqrt.pop %v1586
  %v1653 = vmul.f32 %v1652, %v1586
  %v1654 = vmul.f32 %v1653, %v1652
  %v1655 = vmul.f32 0.5, %v1654
  %v1656 = vsub.f32 1.5, %v1655
  %v1657 = vmul.f32 %v1652, %v1656
  %vm1658 = vweird.f32 %v1586
  %vm1659 = vweird.f32 %v1652
  %vm1660 = vmor %vm1658, %vm1659
  %v1661 = vsel %vm1660, %v1652, %v1657
  %v1662 = vrsqrt.pop %v1587
  %v1663 = vmul.f32 %v1662, %v1587
  %v1664 = vmul.f32 %v1663, %v1662
  %v1665 = vmul.f32 0.5, %v1664
  %v1666 = vsub.f32 1.5, %v1665
  %v1667 = vmul.f32 %v1662, %v1666
  %vm1668 = vweird.f32 %v1587
  %vm1669 = vweird.f32 %v1662
  %vm1670 = vmor %vm1668, %vm1669
  %v1671 = vsel %vm1670, %v1662, %v1667
  %v1672 = vrsqrt.pop %v1588
  %v1673 = vmul.f32 %v1672, %v1588
  %v1674 = vmul.f32 %v1673, %v1672
  %v1675 = vmul.f32 0.5, %v1674
  %v1676 = vsub.f32 1.5, %v1675
  %v1677 = vmul.f32 %v1672, %v1676
  %vm1678 = vweird.f32 %v1588
  %vm1679 = vweird.f32 %v1672
  %vm1680 = vmor %vm1678, %vm1679
  %v1681 = vsel %vm1680, %v1672, %v1677
  %v1682 = vrsqrt.pop %v1589
  %v1683 = vmul.f32 %v1682, %v1589
  %v1684 = vmul.f32 %v1683, %v1682
  %v1685 = vmul.f32 0.5, %v1684
  %v1686 = vsub.f32 1.5, %v1685
  %v1687 = vmul.f32 %v1682, %v1686
  %vm1688 = vweird.f32 %v1589
  %vm1689 = vweird.f32 %v1682
  %vm1690 = vmor %vm1688, %vm1689
  %v1691 = vsel %vm1690, %v1682, %v1687
  %v1692 = vrsqrt.pop %v1590
  %v1693 = vmul.f32 %v1692, %v1590
  %v1694 = vmul.f32 %v1693, %v1692
  %v1695 = vmul.f32 0.5, %v1694
  %v1696 = vsub.f32 1.5, %v1695
  %v1697 = vmul.f32 %v1692, %v1696
  %vm1698 = vweird.f32 %v1590
  %vm1699 = vweird.f32 %v1692
  %vm1700 = vmor %vm1698, %vm1699
  %v1701 = vsel %vm1700, %v1692, %v1697
  %v1702 = vrsqrt.pop %v1591
  %v1703 = vmul.f32 %v1702, %v1591
  %v1704 = vmul.f32 %v1703, %v1702
  %v1705 = vmul.f32 0.5, %v1704
  %v1706 = vsub.f32 1.5, %v1705
  %v1707 = vmul.f32 %v1702, %v1706
  %vm1708 = vweird.f32 %v1591
  %vm1709 = vweird.f32 %v1702
  %vm1710 = vmor %vm1708, %vm1709
  %v1711 = vsel %vm1710, %v1702, %v1707
  %v1712 = vmul.f32 %v1508, %v1601
  %v1713 = vmul.f32 %v1509, %v1611
  %v1714 = vmul.f32 %v1510, %v1621
  %v1715 = vmul.f32 %v1511, %v1631
  %v1716 = vmul.f32 %v1512, %v1641
  %v1717 = vmul.f32 %v1513, %v1651
  %v1718 = vmul.f32 %v1514, %v1661
  %v1719 = vmul.f32 %v1515, %v1671
  %v1720 = vmul.f32 %v1516, %v1681
  %v1721 = vmul.f32 %v1517, %v1691
  %v1722 = vmul.f32 %v1518, %v1701
  %v1723 = vmul.f32 %v1519, %v1711
  %v1724 = vperm.slane %v1451, 0
  %v1725 = vmul.f32 %v1712, %v1724
  %v1726 = vmul.f32 %v1713, %v1724
  %v1727 = vmul.f32 %v1714, %v1724
  %v1728 = vmul.f32 %v1715, %v1724
  %v1729 = vmul.f32 %v1716, %v1724
  %v1730 = vmul.f32 %v1717, %v1724
  %v1731 = vmul.f32 %v1718, %v1724
  %v1732 = vmul.f32 %v1719, %v1724
  %v1733 = vmul.f32 %v1720, %v1724
  %v1734 = vmul.f32 %v1721, %v1724
  %v1735 = vmul.f32 %v1722, %v1724
  %v1736 = vmul.f32 %v1723, %v1724
  %v1737 = vperm.slane %v1452, 0
  %v1738 = vadd.f32 %v1725, %v1737
  %v1739 = vadd.f32 %v1726, %v1737
  %v1740 = vadd.f32 %v1727, %v1737
  %v1741 = vadd.f32 %v1728, %v1737
  %v1742 = vadd.f32 %v1729, %v1737
  %v1743 = vadd.f32 %v1730, %v1737
  %v1744 = vadd.f32 %v1731, %v1737
  %v1745 = vadd.f32 %v1732, %v1737
  %v1746 = vadd.f32 %v1733, %v1737
  %v1747 = vadd.f32 %v1734, %v1737
  %v1748 = vadd.f32 %v1735, %v1737
  %v1749 = vadd.f32 %v1736, %v1737
  %v1750 = vadd.f32 %v1738, %v26
  %v1751 = vadd.f32 %v1739, %v27
  %v1752 = vadd.f32 %v1740, %v28
  %v1753 = vadd.f32 %v1741, %v29
  %v1754 = vadd.f32 %v1742, %v30
  %v1755 = vadd.f32 %v1743, %v31
  %v1756 = vadd.f32 %v1744, %v32
  %v1757 = vadd.f32 %v1745, %v33
  %v1758 = vadd.f32 %v1746, %v34
  %v1759 = vadd.f32 %v1747, %v35
  %v1760 = vadd.f32 %v1748, %v36
  %v1761 = vadd.f32 %v1749, %v37
  %v1763 = vsel %vm503, %v1750, 0
  %v1766 = vsel %vm503, %v1751, 0
  %v1769 = vsel %vm503, %v1752, 0
  %v1772 = vsel %vm503, %v1753, 0
  %v1775 = vsel %vm503, %v1754, 0
  %v1778 = vsel %vm503, %v1755, 0
  %v1781 = vsel %vm503, %v1756, 0
  %v1784 = vsel %vm503, %v1757, 0
  %v1787 = vsel %vm503, %v1758, 0
  %v1790 = vsel %vm503, %v1759, 0
  %v1793 = vsel %vm503, %v1760, 0
  %v1796 = vsel %vm503, %v1761, 0
  %1798 = vmatpush.msra.mxu0 0.0
  %1799 = vmatpush.msra.mxu0 0.0
  %1800 = vmatpush.msra.mxu0 0.0
  %1801 = vmatpush.msra.mxu0 0.0
  %1802 = vmatpush.msra.mxu0 0.0
  %1803 = vmatpush.msra.mxu0 0.0
  %1804 = vmatpush.msra.mxu0 0.0
  %1805 = vmatpush.msra.mxu0 0.0
  %1806 = vmatpush.msra.mxu0 0.0
  %1807 = vmatpush.msra.mxu0 0.0
  %1808 = vmatpush.msra.mxu0 0.0
  %1809 = vmatpush.msra.mxu0 0.0
  %1810 = vmatpush.msra.mxu0 %v58
  %1811 = vmatpush.msra.mxu0 %v57
  %1812 = vmatpush.msra.mxu0 %v56
  %1813 = vmatpush.msra.mxu0 %v55
  %1814 = vmatmul.f32.gmra.mxu0 %v1763
  %v1815 = vpop.f32.mrf.mxu0
  %v1816 = vadd.f32 0.0, %v1815
  %1817 = vmatmul.f32.gmra.mxu0 %v1766
  %v1818 = vpop.f32.mrf.mxu0
  %v1819 = vadd.f32 0.0, %v1818
  %1820 = vmatmul.f32.gmra.mxu0 %v1769
  %v1821 = vpop.f32.mrf.mxu0
  %v1822 = vadd.f32 0.0, %v1821
  %1823 = vmatmul.f32.gmra.mxu0 %v1772
  %v1824 = vpop.f32.mrf.mxu0
  %v1825 = vadd.f32 0.0, %v1824
  %1826 = vmatmul.f32.gmra.mxu0 %v1775
  %v1827 = vpop.f32.mrf.mxu0
  %v1828 = vadd.f32 0.0, %v1827
  %1829 = vmatmul.f32.gmra.mxu0 %v1778
  %v1830 = vpop.f32.mrf.mxu0
  %v1831 = vadd.f32 0.0, %v1830
  %1832 = vmatmul.f32.gmra.mxu0 %v1781
  %v1833 = vpop.f32.mrf.mxu0
  %v1834 = vadd.f32 0.0, %v1833
  %1835 = vmatmul.f32.gmra.mxu0 %v1784
  %v1836 = vpop.f32.mrf.mxu0
  %v1837 = vadd.f32 0.0, %v1836
  %1838 = vmatmul.f32.gmra.mxu0 %v1787
  %v1839 = vpop.f32.mrf.mxu0
  %v1840 = vadd.f32 0.0, %v1839
  %1841 = vmatmul.f32.gmra.mxu0 %v1790
  %v1842 = vpop.f32.mrf.mxu0
  %v1843 = vadd.f32 0.0, %v1842
  %1844 = vmatmul.f32.gmra.mxu0 %v1793
  %v1845 = vpop.f32.mrf.mxu0
  %v1846 = vadd.f32 0.0, %v1845
  %1847 = vmatmul.f32.gmra.mxu0 %v1796
  %v1848 = vpop.f32.mrf.mxu0
  %v1849 = vadd.f32 0.0, %v1848
  %1850 = vdwg.mxu0
  %1863 = vrot.lane.b32.xlu0 %v1816, 112
  %v1864 = vpop.permute.xlu0 %1863
  %1865 = vrot.lane.b32.xlu0 %v1819, 112
  %v1866 = vpop.permute.xlu0 %1865
  %1867 = vrot.lane.b32.xlu0 %v1822, 112
  %v1868 = vpop.permute.xlu0 %1867
  %1869 = vrot.lane.b32.xlu0 %v1825, 112
  %v1870 = vpop.permute.xlu0 %1869
  %1871 = vrot.lane.b32.xlu0 %v1828, 112
  %v1872 = vpop.permute.xlu0 %1871
  %1873 = vrot.lane.b32.xlu0 %v1831, 112
  %v1874 = vpop.permute.xlu0 %1873
  %1875 = vrot.lane.b32.xlu0 %v1834, 112
  %v1876 = vpop.permute.xlu0 %1875
  %1877 = vrot.lane.b32.xlu0 %v1837, 112
  %v1878 = vpop.permute.xlu0 %1877
  %1879 = vrot.lane.b32.xlu0 %v1840, 112
  %v1880 = vpop.permute.xlu0 %1879
  %1881 = vrot.lane.b32.xlu0 %v1843, 112
  %v1882 = vpop.permute.xlu0 %1881
  %1883 = vrot.lane.b32.xlu0 %v1846, 112
  %v1884 = vpop.permute.xlu0 %1883
  %1885 = vrot.lane.b32.xlu0 %v1849, 112
  %v1886 = vpop.permute.xlu0 %1885
  %v1887 = vsel %vm361, %v1816, 0
  %v1889 = vsel %vm361, %v1819, 0
  %v1891 = vsel %vm361, %v1822, 0
  %v1893 = vsel %vm361, %v1825, 0
  %v1895 = vsel %vm361, %v1828, 0
  %v1897 = vsel %vm361, %v1831, 0
  %v1899 = vsel %vm361, %v1834, 0
  %v1901 = vsel %vm361, %v1837, 0
  %v1903 = vsel %vm361, %v1840, 0
  %v1905 = vsel %vm361, %v1843, 0
  %v1907 = vsel %vm361, %v1846, 0
  %v1909 = vsel %vm361, %v1849, 0
  %v1911 = vsel %vm361, %v1864, 0
  %v1913 = vsel %vm361, %v1866, 0
  %v1915 = vsel %vm361, %v1868, 0
  %v1917 = vsel %vm361, %v1870, 0
  %v1919 = vsel %vm361, %v1872, 0
  %v1921 = vsel %vm361, %v1874, 0
  %v1923 = vsel %vm361, %v1876, 0
  %v1925 = vsel %vm361, %v1878, 0
  %v1927 = vsel %vm361, %v1880, 0
  %v1929 = vsel %vm361, %v1882, 0
  %v1931 = vsel %vm361, %v1884, 0
  %v1933 = vsel %vm361, %v1886, 0
  %1935 = vmatpush.xpose.msra.mxu0 0.0
  %1936 = vmatpush.xpose.msra.mxu0 0.0
  %1937 = vmatpush.xpose.msra.mxu0 0.0
  %1938 = vmatpush.xpose.msra.mxu0 0.0
  %1939 = vmatpush.xpose.msra.mxu0 %v1933
  %1940 = vmatpush.xpose.msra.mxu0 %v1931
  %1941 = vmatpush.xpose.msra.mxu0 %v1929
  %1942 = vmatpush.xpose.msra.mxu0 %v1927
  %1943 = vmatpush.xpose.msra.mxu0 %v1925
  %1944 = vmatpush.xpose.msra.mxu0 %v1923
  %1945 = vmatpush.xpose.msra.mxu0 %v1921
  %1946 = vmatpush.xpose.msra.mxu0 %v1919
  %1947 = vmatpush.xpose.msra.mxu0 %v1917
  %1948 = vmatpush.xpose.msra.mxu0 %v1915
  %1949 = vmatpush.xpose.msra.mxu0 %v1913
  %1950 = vmatpush.xpose.msra.mxu0 %v1911
  %1951 = vmatmul.f32.gmra.mxu0 %v1887
  %v1952 = vpop.f32.mrf.mxu0
  %v1953 = vadd.f32 0.0, %v1952
  %1954 = vmatmul.f32.gmra.mxu0 %v1889
  %v1955 = vpop.f32.mrf.mxu0
  %v1956 = vadd.f32 0.0, %v1955
  %1957 = vmatmul.f32.gmra.mxu0 %v1891
  %v1958 = vpop.f32.mrf.mxu0
  %v1959 = vadd.f32 0.0, %v1958
  %1960 = vmatmul.f32.gmra.mxu0 %v1893
  %v1961 = vpop.f32.mrf.mxu0
  %v1962 = vadd.f32 0.0, %v1961
  %1963 = vmatmul.f32.gmra.mxu0 %v1895
  %v1964 = vpop.f32.mrf.mxu0
  %v1965 = vadd.f32 0.0, %v1964
  %1966 = vmatmul.f32.gmra.mxu0 %v1897
  %v1967 = vpop.f32.mrf.mxu0
  %v1968 = vadd.f32 0.0, %v1967
  %1969 = vmatmul.f32.gmra.mxu0 %v1899
  %v1970 = vpop.f32.mrf.mxu0
  %v1971 = vadd.f32 0.0, %v1970
  %1972 = vmatmul.f32.gmra.mxu0 %v1901
  %v1973 = vpop.f32.mrf.mxu0
  %v1974 = vadd.f32 0.0, %v1973
  %1975 = vmatmul.f32.gmra.mxu0 %v1903
  %v1976 = vpop.f32.mrf.mxu0
  %v1977 = vadd.f32 0.0, %v1976
  %1978 = vmatmul.f32.gmra.mxu0 %v1905
  %v1979 = vpop.f32.mrf.mxu0
  %v1980 = vadd.f32 0.0, %v1979
  %1981 = vmatmul.f32.gmra.mxu0 %v1907
  %v1982 = vpop.f32.mrf.mxu0
  %v1983 = vadd.f32 0.0, %v1982
  %1984 = vmatmul.f32.gmra.mxu0 %v1909
  %v1985 = vpop.f32.mrf.mxu0
  %v1986 = vadd.f32 0.0, %v1985
  %1987 = vdwg.mxu0
  %v1988 = vmul.f32 %v1953, 0.25
  %v1989 = vmul.f32 %v1956, 0.25
  %v1990 = vmul.f32 %v1959, 0.25
  %v1991 = vmul.f32 %v1962, 0.25
  %v1992 = vmul.f32 %v1965, 0.25
  %v1993 = vmul.f32 %v1968, 0.25
  %v1994 = vmul.f32 %v1971, 0.25
  %v1995 = vmul.f32 %v1974, 0.25
  %v1996 = vmul.f32 %v1977, 0.25
  %v1997 = vmul.f32 %v1980, 0.25
  %v1998 = vmul.f32 %v1983, 0.25
  %v1999 = vmul.f32 %v1986, 0.25
  %v2000 = vlaneseq
  %v2001 = vshrl.u32 %v2000, 7
  %v2002 = vadd.s32 %v2001, 8
  %v2003 = vadd.s32 %v2001, 16
  %v2004 = vadd.s32 %v2001, 24
  %v2005 = vadd.s32 %v2001, 32
  %v2006 = vadd.s32 %v2001, 40
  %v2007 = vadd.s32 %v2001, 48
  %v2008 = vadd.s32 %v2001, 56
  %v2009 = vadd.s32 %v2001, 64
  %v2010 = vadd.s32 %v2001, 72
  %v2011 = vadd.s32 %v2001, 80
  %v2012 = vadd.s32 %v2001, 88
  %v2013 = vand.u32 %v2001, 7
  %v2014 = vand.u32 %v2002, 7
  %v2015 = vand.u32 %v2003, 7
  %v2016 = vand.u32 %v2004, 7
  %v2017 = vand.u32 %v2005, 7
  %v2018 = vand.u32 %v2006, 7
  %v2019 = vand.u32 %v2007, 7
  %v2020 = vand.u32 %v2008, 7
  %v2021 = vand.u32 %v2009, 7
  %v2022 = vand.u32 %v2010, 7
  %v2023 = vand.u32 %v2011, 7
  %v2024 = vand.u32 %v2012, 7
  %v2025 = vlaneseq
  %v2026 = vand.u32 %v2025, 127
  %v2027 = vand.u32 %v2026, 7
  %vm2028 = vcmp.eq.s32.totalorder %v2013, %v2027
  %vm2029 = vcmp.eq.s32.totalorder %v2014, %v2027
  %vm2030 = vcmp.eq.s32.totalorder %v2015, %v2027
  %vm2031 = vcmp.eq.s32.totalorder %v2016, %v2027
  %vm2032 = vcmp.eq.s32.totalorder %v2017, %v2027
  %vm2033 = vcmp.eq.s32.totalorder %v2018, %v2027
  %vm2034 = vcmp.eq.s32.totalorder %v2019, %v2027
  %vm2035 = vcmp.eq.s32.totalorder %v2020, %v2027
  %vm2036 = vcmp.eq.s32.totalorder %v2021, %v2027
  %vm2037 = vcmp.eq.s32.totalorder %v2022, %v2027
  %vm2038 = vcmp.eq.s32.totalorder %v2023, %v2027
  %vm2039 = vcmp.eq.s32.totalorder %v2024, %v2027
  %v2040 = vsel %vm2028, %v1988, -1e+09
  %v2041 = vsel %vm2029, %v1989, -1e+09
  %v2042 = vsel %vm2030, %v1990, -1e+09
  %v2043 = vsel %vm2031, %v1991, -1e+09
  %v2044 = vsel %vm2032, %v1992, -1e+09
  %v2045 = vsel %vm2033, %v1993, -1e+09
  %v2046 = vsel %vm2034, %v1994, -1e+09
  %v2047 = vsel %vm2035, %v1995, -1e+09
  %v2048 = vsel %vm2036, %v1996, -1e+09
  %v2049 = vsel %vm2037, %v1997, -1e+09
  %v2050 = vsel %vm2038, %v1998, -1e+09
  %v2051 = vsel %vm2039, %v1999, -1e+09
  %vm2052 = vcmask 785408
  %v2053 = vsel %vm2052, %v2040, -inf
  %2054 = vmax.xlane.f32.xlu0 %v2053
  %v2055 = vpop.xlane.xlu0 %2054
  %v2056 = vsel %vm2052, %v2041, -inf
  %2057 = vmax.xlane.f32.xlu0 %v2056
  %v2058 = vpop.xlane.xlu0 %2057
  %v2059 = vsel %vm2052, %v2042, -inf
  %2060 = vmax.xlane.f32.xlu0 %v2059
  %v2061 = vpop.xlane.xlu0 %2060
  %v2062 = vsel %vm2052, %v2043, -inf
  %2063 = vmax.xlane.f32.xlu0 %v2062
  %v2064 = vpop.xlane.xlu0 %2063
  %v2065 = vsel %vm2052, %v2044, -inf
  %2066 = vmax.xlane.f32.xlu0 %v2065
  %v2067 = vpop.xlane.xlu0 %2066
  %v2068 = vsel %vm2052, %v2045, -inf
  %2069 = vmax.xlane.f32.xlu0 %v2068
  %v2070 = vpop.xlane.xlu0 %2069
  %v2071 = vsel %vm2052, %v2046, -inf
  %2072 = vmax.xlane.f32.xlu0 %v2071
  %v2073 = vpop.xlane.xlu0 %2072
  %v2074 = vsel %vm2052, %v2047, -inf
  %2075 = vmax.xlane.f32.xlu0 %v2074
  %v2076 = vpop.xlane.xlu0 %2075
  %v2077 = vsel %vm2052, %v2048, -inf
  %2078 = vmax.xlane.f32.xlu0 %v2077
  %v2079 = vpop.xlane.xlu0 %2078
  %v2080 = vsel %vm2052, %v2049, -inf
  %2081 = vmax.xlane.f32.xlu0 %v2080
  %v2082 = vpop.xlane.xlu0 %2081
  %v2083 = vsel %vm2052, %v2050, -inf
  %2084 = vmax.xlane.f32.xlu0 %v2083
  %v2085 = vpop.xlane.xlu0 %2084
  %v2086 = vsel %vm2052, %v2051, -inf
  %2087 = vmax.xlane.f32.xlu0 %v2086
  %v2088 = vpop.xlane.xlu0 %2087
  %v2089 = vsub.f32 %v2040, %v2055
  %v2090 = vsub.f32 %v2041, %v2058
  %v2091 = vsub.f32 %v2042, %v2061
  %v2092 = vsub.f32 %v2043, %v2064
  %v2093 = vsub.f32 %v2044, %v2067
  %v2094 = vsub.f32 %v2045, %v2070
  %v2095 = vsub.f32 %v2046, %v2073
  %v2096 = vsub.f32 %v2047, %v2076
  %v2097 = vsub.f32 %v2048, %v2079
  %v2098 = vsub.f32 %v2049, %v2082
  %v2099 = vsub.f32 %v2050, %v2085
  %v2100 = vsub.f32 %v2051, %v2088
  %v2101 = vmul.f32 %v2089, 1.442695
  %v2102 = vpow.pop %v2101
  %v2103 = vmul.f32 %v2090, 1.442695
  %v2104 = vpow.pop %v2103
  %v2105 = vmul.f32 %v2091, 1.442695
  %v2106 = vpow.pop %v2105
  %v2107 = vmul.f32 %v2092, 1.442695
  %v2108 = vpow.pop %v2107
  %v2109 = vmul.f32 %v2093, 1.442695
  %v2110 = vpow.pop %v2109
  %v2111 = vmul.f32 %v2094, 1.442695
  %v2112 = vpow.pop %v2111
  %v2113 = vmul.f32 %v2095, 1.442695
  %v2114 = vpow.pop %v2113
  %v2115 = vmul.f32 %v2096, 1.442695
  %v2116 = vpow.pop %v2115
  %v2117 = vmul.f32 %v2097, 1.442695
  %v2118 = vpow.pop %v2117
  %v2119 = vmul.f32 %v2098, 1.442695
  %v2120 = vpow.pop %v2119
  %v2121 = vmul.f32 %v2099, 1.442695
  %v2122 = vpow.pop %v2121
  %v2123 = vmul.f32 %v2100, 1.442695
  %v2124 = vpow.pop %v2123
  %v2125 = vsel %vm2052, %v2102, 0.0
  %2126 = vadd.xlane.f32.xlu0 %v2125
  %v2127 = vpop.xlane.xlu0 %2126
  %v2128 = vsel %vm2052, %v2104, 0.0
  %2129 = vadd.xlane.f32.xlu0 %v2128
  %v2130 = vpop.xlane.xlu0 %2129
  %v2131 = vsel %vm2052, %v2106, 0.0
  %2132 = vadd.xlane.f32.xlu0 %v2131
  %v2133 = vpop.xlane.xlu0 %2132
  %v2134 = vsel %vm2052, %v2108, 0.0
  %2135 = vadd.xlane.f32.xlu0 %v2134
  %v2136 = vpop.xlane.xlu0 %2135
  %v2137 = vsel %vm2052, %v2110, 0.0
  %2138 = vadd.xlane.f32.xlu0 %v2137
  %v2139 = vpop.xlane.xlu0 %2138
  %v2140 = vsel %vm2052, %v2112, 0.0
  %2141 = vadd.xlane.f32.xlu0 %v2140
  %v2142 = vpop.xlane.xlu0 %2141
  %v2143 = vsel %vm2052, %v2114, 0.0
  %2144 = vadd.xlane.f32.xlu0 %v2143
  %v2145 = vpop.xlane.xlu0 %2144
  %v2146 = vsel %vm2052, %v2116, 0.0
  %2147 = vadd.xlane.f32.xlu0 %v2146
  %v2148 = vpop.xlane.xlu0 %2147
  %v2149 = vsel %vm2052, %v2118, 0.0
  %2150 = vadd.xlane.f32.xlu0 %v2149
  %v2151 = vpop.xlane.xlu0 %2150
  %v2152 = vsel %vm2052, %v2120, 0.0
  %2153 = vadd.xlane.f32.xlu0 %v2152
  %v2154 = vpop.xlane.xlu0 %2153
  %v2155 = vsel %vm2052, %v2122, 0.0
  %2156 = vadd.xlane.f32.xlu0 %v2155
  %v2157 = vpop.xlane.xlu0 %2156
  %v2158 = vsel %vm2052, %v2124, 0.0
  %2159 = vadd.xlane.f32.xlu0 %v2158
  %v2160 = vpop.xlane.xlu0 %2159
  %v2161 = vrcp.pop %v2127
  %v2162 = vrcp.pop %v2130
  %v2163 = vrcp.pop %v2133
  %v2164 = vrcp.pop %v2136
  %v2165 = vrcp.pop %v2139
  %v2166 = vrcp.pop %v2142
  %v2167 = vrcp.pop %v2145
  %v2168 = vrcp.pop %v2148
  %v2169 = vrcp.pop %v2151
  %v2170 = vrcp.pop %v2154
  %v2171 = vrcp.pop %v2157
  %v2172 = vrcp.pop %v2160
  %v2173 = vmul.f32 %v2102, %v2161
  %v2174 = vmul.f32 %v2104, %v2162
  %v2175 = vmul.f32 %v2106, %v2163
  %v2176 = vmul.f32 %v2108, %v2164
  %v2177 = vmul.f32 %v2110, %v2165
  %v2178 = vmul.f32 %v2112, %v2166
  %v2179 = vmul.f32 %v2114, %v2167
  %v2180 = vmul.f32 %v2116, %v2168
  %v2181 = vmul.f32 %v2118, %v2169
  %v2182 = vmul.f32 %v2120, %v2170
  %v2183 = vmul.f32 %v2122, %v2171
  %v2184 = vmul.f32 %v2124, %v2172
  %2185 = vrot.lane.b32.xlu0 %v1816, 96
  %v2186 = vpop.permute.xlu0 %2185
  %2187 = vrot.lane.b32.xlu0 %v1819, 96
  %v2188 = vpop.permute.xlu0 %2187
  %2189 = vrot.lane.b32.xlu0 %v1822, 96
  %v2190 = vpop.permute.xlu0 %2189
  %2191 = vrot.lane.b32.xlu0 %v1825, 96
  %v2192 = vpop.permute.xlu0 %2191
  %2193 = vrot.lane.b32.xlu0 %v1828, 96
  %v2194 = vpop.permute.xlu0 %2193
  %2195 = vrot.lane.b32.xlu0 %v1831, 96
  %v2196 = vpop.permute.xlu0 %2195
  %2197 = vrot.lane.b32.xlu0 %v1834, 96
  %v2198 = vpop.permute.xlu0 %2197
  %2199 = vrot.lane.b32.xlu0 %v1837, 96
  %v2200 = vpop.permute.xlu0 %2199
  %2201 = vrot.lane.b32.xlu0 %v1840, 96
  %v2202 = vpop.permute.xlu0 %2201
  %2203 = vrot.lane.b32.xlu0 %v1843, 96
  %v2204 = vpop.permute.xlu0 %2203
  %2205 = vrot.lane.b32.xlu0 %v1846, 96
  %v2206 = vpop.permute.xlu0 %2205
  %2207 = vrot.lane.b32.xlu0 %v1849, 96
  %v2208 = vpop.permute.xlu0 %2207
  %v2222 = vsel %vm2052, %v2173, 0
  %v2225 = vsel %vm2052, %v2174, 0
  %v2228 = vsel %vm2052, %v2175, 0
  %v2231 = vsel %vm2052, %v2176, 0
  %v2234 = vsel %vm2052, %v2177, 0
  %v2237 = vsel %vm2052, %v2178, 0
  %v2240 = vsel %vm2052, %v2179, 0
  %v2243 = vsel %vm2052, %v2180, 0
  %v2246 = vsel %vm2052, %v2181, 0
  %v2249 = vsel %vm2052, %v2182, 0
  %v2252 = vsel %vm2052, %v2183, 0
  %v2255 = vsel %vm2052, %v2184, 0
  %2257 = vmatpush.msra.mxu0 0.0
  %2258 = vmatpush.msra.mxu0 0.0
  %2259 = vmatpush.msra.mxu0 0.0
  %2260 = vmatpush.msra.mxu0 0.0
  %2261 = vmatpush.msra.mxu0 %v2208
  %2262 = vmatpush.msra.mxu0 %v2206
  %2263 = vmatpush.msra.mxu0 %v2204
  %2264 = vmatpush.msra.mxu0 %v2202
  %2265 = vmatpush.msra.mxu0 %v2200
  %2266 = vmatpush.msra.mxu0 %v2198
  %2267 = vmatpush.msra.mxu0 %v2196
  %2268 = vmatpush.msra.mxu0 %v2194
  %2269 = vmatpush.msra.mxu0 %v2192
  %2270 = vmatpush.msra.mxu0 %v2190
  %2271 = vmatpush.msra.mxu0 %v2188
  %2272 = vmatpush.msra.mxu0 %v2186
  %2273 = vmatmul.f32.gmra.mxu0 %v2222
  %v2274 = vpop.f32.mrf.mxu0
  %2275 = vmatmul.f32.gmra.mxu0 %v2225
  %v2276 = vpop.f32.mrf.mxu0
  %2277 = vmatmul.f32.gmra.mxu0 %v2228
  %v2278 = vpop.f32.mrf.mxu0
  %2279 = vmatmul.f32.gmra.mxu0 %v2231
  %v2280 = vpop.f32.mrf.mxu0
  %2281 = vmatmul.f32.gmra.mxu0 %v2234
  %v2282 = vpop.f32.mrf.mxu0
  %2283 = vmatmul.f32.gmra.mxu0 %v2237
  %v2284 = vpop.f32.mrf.mxu0
  %2285 = vmatmul.f32.gmra.mxu0 %v2240
  %v2286 = vpop.f32.mrf.mxu0
  %2287 = vmatmul.f32.gmra.mxu0 %v2243
  %v2288 = vpop.f32.mrf.mxu0
  %2289 = vmatmul.f32.gmra.mxu0 %v2246
  %v2290 = vpop.f32.mrf.mxu0
  %v2291 = vadd.f32 0.0, %v2290
  %2292 = vmatmul.f32.gmra.mxu0 %v2249
  %v2293 = vpop.f32.mrf.mxu0
  %v2294 = vadd.f32 0.0, %v2293
  %2295 = vmatmul.f32.gmra.mxu0 %v2252
  %v2296 = vpop.f32.mrf.mxu0
  %v2297 = vadd.f32 0.0, %v2296
  %2298 = vmatmul.f32.gmra.mxu0 %v2255
  %v2299 = vpop.f32.mrf.mxu0
  %v2300 = vadd.f32 0.0, %v2299
  %2301 = vdwg.mxu0
  %v2303 = vsel %vm503, %v1746, 0
  %v2306 = vsel %vm503, %v1747, 0
  %v2309 = vsel %vm503, %v1748, 0
  %v2312 = vsel %vm503, %v1749, 0
  %2314 = vmatpush.msra.mxu0 0.0
  %2315 = vmatpush.msra.mxu0 0.0
  %2316 = vmatpush.msra.mxu0 0.0
  %2317 = vmatpush.msra.mxu0 0.0
  %2318 = vmatpush.msra.mxu0 0.0
  %2319 = vmatpush.msra.mxu0 0.0
  %2320 = vmatpush.msra.mxu0 0.0
  %2321 = vmatpush.msra.mxu0 0.0
  %2322 = vmatpush.msra.mxu0 0.0
  %2323 = vmatpush.msra.mxu0 0.0
  %2324 = vmatpush.msra.mxu0 0.0
  %2325 = vmatpush.msra.mxu0 0.0
  %2326 = vmatpush.msra.mxu0 %v62
  %2327 = vmatpush.msra.mxu0 %v61
  %2328 = vmatpush.msra.mxu0 %v60
  %2329 = vmatpush.msra.mxu0 %v59
  %2330 = vmatmul.f32.gmra.mxu0 %v2303
  %v2331 = vpop.f32.mrf.mxu0
  %v2332 = vadd.f32 0.0, %v2331
  %2333 = vmatmul.f32.gmra.mxu0 %v2306
  %v2334 = vpop.f32.mrf.mxu0
  %v2335 = vadd.f32 0.0, %v2334
  %2336 = vmatmul.f32.gmra.mxu0 %v2309
  %v2337 = vpop.f32.mrf.mxu0
  %v2338 = vadd.f32 0.0, %v2337
  %2339 = vmatmul.f32.gmra.mxu0 %v2312
  %v2340 = vpop.f32.mrf.mxu0
  %v2341 = vadd.f32 0.0, %v2340
  %2342 = vdwg.mxu0
  %v2343 = vld [vmem:[%s2 + $0xa] sm:$0x1]
  %v2344 = vperm.slane %v2343, 0
  %v2345 = vadd.f32 %v2332, %v2344
  %v2346 = vadd.f32 %v2335, %v2344
  %v2347 = vadd.f32 %v2338, %v2344
  %v2348 = vadd.f32 %v2341, %v2344
  %v2349 = vmax.f32 %v2345, 0.0
  %v2350 = vmax.f32 %v2346, 0.0
  %v2351 = vmax.f32 %v2347, 0.0
  %v2352 = vmax.f32 %v2348, 0.0
  %v2353 = vld [vmem:[%s2 + $0xb] sm:$0x1]
  %v2354 = vperm.slane %v2353, 0
  %v2356 = vsel %vm361, %v2349, 0
  %v2359 = vsel %vm361, %v2350, 0
  %v2362 = vsel %vm361, %v2351, 0
  %v2365 = vsel %vm361, %v2352, 0
  %2367 = vmatpush.msra.mxu0 0.0
  %2368 = vmatpush.msra.mxu0 0.0
  %2369 = vmatpush.msra.mxu0 0.0
  %2370 = vmatpush.msra.mxu0 0.0
  %2371 = vmatpush.msra.mxu0 0.0
  %2372 = vmatpush.msra.mxu0 0.0
  %2373 = vmatpush.msra.mxu0 0.0
  %2374 = vmatpush.msra.mxu0 0.0
  %2375 = vmatpush.msra.mxu0 0.0
  %2376 = vmatpush.msra.mxu0 0.0
  %2377 = vmatpush.msra.mxu0 0.0
  %2378 = vmatpush.msra.mxu0 0.0
  %2379 = vmatpush.msra.mxu0 0.0
  %2380 = vmatpush.msra.mxu0 0.0
  %2381 = vmatpush.msra.mxu0 %v64
  %2382 = vmatpush.msra.mxu0 %v63
  %2383 = vmatmul.f32.gmra.mxu0 %v2356
  %v2384 = vpop.f32.mrf.mxu0
  %v2385 = vadd.f32 %v2354, %v2384
  %2386 = vmatmul.f32.gmra.mxu0 %v2359
  %v2387 = vpop.f32.mrf.mxu0
  %v2388 = vadd.f32 %v2354, %v2387
  %2389 = vmatmul.f32.gmra.mxu0 %v2362
  %v2390 = vpop.f32.mrf.mxu0
  %v2391 = vadd.f32 %v2354, %v2390
  %2392 = vmatmul.f32.gmra.mxu0 %v2365
  %v2393 = vpop.f32.mrf.mxu0
  %v2394 = vadd.f32 %v2354, %v2393
  %2395 = vdwg.mxu0
  %2400 = vrot.lane.b32.xlu0 %v2332, 112
  %v2401 = vpop.permute.xlu0 %2400
  %2402 = vrot.lane.b32.xlu0 %v2335, 112
  %v2403 = vpop.permute.xlu0 %2402
  %2404 = vrot.lane.b32.xlu0 %v2338, 112
  %v2405 = vpop.permute.xlu0 %2404
  %2406 = vrot.lane.b32.xlu0 %v2341, 112
  %v2407 = vpop.permute.xlu0 %2406
  %v2412 = vadd.f32 %v2385, %v2401
  %v2413 = vadd.f32 %v2388, %v2403
  %v2414 = vadd.f32 %v2391, %v2405
  %v2415 = vadd.f32 %v2394, %v2407
  %v2416 = vadd.f32 %v2291, %v2412
  %v2417 = vadd.f32 %v2294, %v2413
  %v2418 = vadd.f32 %v2297, %v2414
  %v2419 = vadd.f32 %v2300, %v2415
  %v2420 = vld [vmem:[%s2 + $0xc] sm:$0x1]
  %v2421 = vld [vmem:[%s2 + $0xd] sm:$0x1]
  %v2422 = vsel %vm361, %v2416, 0.0
  %2423 = vadd.xlane.f32.xlu0 %v2422
  %v2424 = vpop.xlane.xlu0 %2423
  %v2425 = vsel %vm361, %v2417, 0.0
  %2426 = vadd.xlane.f32.xlu0 %v2425
  %v2427 = vpop.xlane.xlu0 %2426
  %v2428 = vsel %vm361, %v2418, 0.0
  %2429 = vadd.xlane.f32.xlu0 %v2428
  %v2430 = vpop.xlane.xlu0 %2429
  %v2431 = vsel %vm361, %v2419, 0.0
  %2432 = vadd.xlane.f32.xlu0 %v2431
  %v2433 = vpop.xlane.xlu0 %2432
  %v2434 = vrcp.pop 16.0
  %v2435 = vmul.f32 16.0, %v2434
  %v2436 = vsub.f32 1.0, %v2435
  %v2437 = vmul.f32 %v2434, %v2436
  %v2438 = vadd.f32 %v2434, %v2437
  %vm2439 = vweird.f32 %v2434
  %v2440 = vsel %vm2439, %v2434, %v2438
  %v2441 = vmul.f32 %v2424, %v2440
  %v2442 = vmul.f32 %v2427, %v2440
  %v2443 = vmul.f32 %v2430, %v2440
  %v2444 = vmul.f32 %v2433, %v2440
  %v2445 = vsub.f32 %v2416, %v2441
  %v2446 = vsub.f32 %v2417, %v2442
  %v2447 = vsub.f32 %v2418, %v2443
  %v2448 = vsub.f32 %v2419, %v2444
  %v2449 = vmul.f32 %v2445, %v2445
  %v2450 = vmul.f32 %v2446, %v2446
  %v2451 = vmul.f32 %v2447, %v2447
  %v2452 = vmul.f32 %v2448, %v2448
  %v2453 = vsel %vm361, %v2449, 0.0
  %2454 = vadd.xlane.f32.xlu0 %v2453
  %v2455 = vpop.xlane.xlu0 %2454
  %v2456 = vsel %vm361, %v2450, 0.0
  %2457 = vadd.xlane.f32.xlu0 %v2456
  %v2458 = vpop.xlane.xlu0 %2457
  %v2459 = vsel %vm361, %v2451, 0.0
  %2460 = vadd.xlane.f32.xlu0 %v2459
  %v2461 = vpop.xlane.xlu0 %2460
  %v2462 = vsel %vm361, %v2452, 0.0
  %2463 = vadd.xlane.f32.xlu0 %v2462
  %v2464 = vpop.xlane.xlu0 %2463
  %v2465 = vmul.f32 %v2455, %v2440
  %v2466 = vmul.f32 %v2458, %v2440
  %v2467 = vmul.f32 %v2461, %v2440
  %v2468 = vmul.f32 %v2464, %v2440
  %v2469 = vadd.f32 %v2465, 1e-05
  %v2470 = vadd.f32 %v2466, 1e-05
  %v2471 = vadd.f32 %v2467, 1e-05
  %v2472 = vadd.f32 %v2468, 1e-05
  %v2473 = vrsqrt.pop %v2469
  %v2474 = vmul.f32 %v2473, %v2469
  %v2475 = vmul.f32 %v2474, %v2473
  %v2476 = vmul.f32 0.5, %v2475
  %v2477 = vsub.f32 1.5, %v2476
  %v2478 = vmul.f32 %v2473, %v2477
  %vm2479 = vweird.f32 %v2469
  %vm2480 = vweird.f32 %v2473
  %vm2481 = vmor %vm2479, %vm2480
  %v2482 = vsel %vm2481, %v2473, %v2478
  %v2483 = vrsqrt.pop %v2470
  %v2484 = vmul.f32 %v2483, %v2470
  %v2485 = vmul.f32 %v2484, %v2483
  %v2486 = vmul.f32 0.5, %v2485
  %v2487 = vsub.f32 1.5, %v2486
  %v2488 = vmul.f32 %v2483, %v2487
  %vm2489 = vweird.f32 %v2470
  %vm2490 = vweird.f32 %v2483
  %vm2491 = vmor %vm2489, %vm2490
  %v2492 = vsel %vm2491, %v2483, %v2488
  %v2493 = vrsqrt.pop %v2471
  %v2494 = vmul.f32 %v2493, %v2471
  %v2495 = vmul.f32 %v2494, %v2493
  %v2496 = vmul.f32 0.5, %v2495
  %v2497 = vsub.f32 1.5, %v2496
  %v2498 = vmul.f32 %v2493, %v2497
  %vm2499 = vweird.f32 %v2471
  %vm2500 = vweird.f32 %v2493
  %vm2501 = vmor %vm2499, %vm2500
  %v2502 = vsel %vm2501, %v2493, %v2498
  %v2503 = vrsqrt.pop %v2472
  %v2504 = vmul.f32 %v2503, %v2472
  %v2505 = vmul.f32 %v2504, %v2503
  %v2506 = vmul.f32 0.5, %v2505
  %v2507 = vsub.f32 1.5, %v2506
  %v2508 = vmul.f32 %v2503, %v2507
  %vm2509 = vweird.f32 %v2472
  %vm2510 = vweird.f32 %v2503
  %vm2511 = vmor %vm2509, %vm2510
  %v2512 = vsel %vm2511, %v2503, %v2508
  %v2513 = vmul.f32 %v2445, %v2482
  %v2514 = vmul.f32 %v2446, %v2492
  %v2515 = vmul.f32 %v2447, %v2502
  %v2516 = vmul.f32 %v2448, %v2512
  %v2517 = vperm.slane %v2420, 0
  %v2518 = vmul.f32 %v2513, %v2517
  %v2519 = vmul.f32 %v2514, %v2517
  %v2520 = vmul.f32 %v2515, %v2517
  %v2521 = vmul.f32 %v2516, %v2517
  %v2522 = vperm.slane %v2421, 0
  %v2523 = vadd.f32 %v2518, %v2522
  %v2524 = vadd.f32 %v2519, %v2522
  %v2525 = vadd.f32 %v2520, %v2522
  %v2526 = vadd.f32 %v2521, %v2522
  %v2527 = vld [vmem:[%s2 + $0xe] sm:$0x1]
  %v2528 = vperm.slane %v2527, 0
  %v2530 = vsel %vm361, %v2523, 0
  %v2533 = vsel %vm361, %v2524, 0
  %v2536 = vsel %vm361, %v2525, 0
  %v2539 = vsel %vm361, %v2526, 0
  %2541 = vmatpush.msra.mxu0 0.0
  %2542 = vmatpush.msra.mxu0 0.0
  %2543 = vmatpush.msra.mxu0 0.0
  %2544 = vmatpush.msra.mxu0 0.0
  %2545 = vmatpush.msra.mxu0 0.0
  %2546 = vmatpush.msra.mxu0 0.0
  %2547 = vmatpush.msra.mxu0 0.0
  %2548 = vmatpush.msra.mxu0 0.0
  %2549 = vmatpush.msra.mxu0 0.0
  %2550 = vmatpush.msra.mxu0 0.0
  %2551 = vmatpush.msra.mxu0 0.0
  %2552 = vmatpush.msra.mxu0 0.0
  %2553 = vmatpush.msra.mxu0 0.0
  %2554 = vmatpush.msra.mxu0 0.0
  %2555 = vmatpush.msra.mxu0 %v66
  %2556 = vmatpush.msra.mxu0 %v65
  %2557 = vmatmul.f32.gmra.mxu0 %v2530
  %v2558 = vpop.f32.mrf.mxu0
  %v2559 = vadd.f32 %v2528, %v2558
  %2560 = vmatmul.f32.gmra.mxu0 %v2533
  %v2561 = vpop.f32.mrf.mxu0
  %v2562 = vadd.f32 %v2528, %v2561
  %2563 = vmatmul.f32.gmra.mxu0 %v2536
  %v2564 = vpop.f32.mrf.mxu0
  %v2565 = vadd.f32 %v2528, %v2564
  %2566 = vmatmul.f32.gmra.mxu0 %v2539
  %v2567 = vpop.f32.mrf.mxu0
  %v2568 = vadd.f32 %v2528, %v2567
  %2569 = vdwg.mxu0
  %v2570 = vmax.f32 %v2559, 0.0
  %v2571 = vmax.f32 %v2562, 0.0
  %v2572 = vmax.f32 %v2565, 0.0
  %v2573 = vmax.f32 %v2568, 0.0
  %v2574 = vand.u32 2147483647, %v2559
  %v2575 = vand.u32 2147483647, %v2562
  %v2576 = vand.u32 2147483647, %v2565
  %v2577 = vand.u32 2147483647, %v2568
  %v2578 = vsub.f32 0.0, %v2574
  %v2579 = vsub.f32 0.0, %v2575
  %v2580 = vsub.f32 0.0, %v2576
  %v2581 = vsub.f32 0.0, %v2577
  %v2582 = vmul.f32 %v2578, 1.442695
  %v2583 = vpow.pop %v2582
  %v2584 = vmul.f32 %v2579, 1.442695
  %v2585 = vpow.pop %v2584
  %v2586 = vmul.f32 %v2580, 1.442695
  %v2587 = vpow.pop %v2586
  %v2588 = vmul.f32 %v2581, 1.442695
  %v2589 = vpow.pop %v2588
  %v2590 = vadd.f32 %v2583, 1.0
  %v2591 = vlog2.pop %v2590
  %v2592 = vmul.f32 %v2591, 0.6931472
  %v2593 = vmul.f32 -0.5, %v2583
  %v2594 = vadd.f32 %v2593, 1.0
  %v2595 = vmul.f32 %v2594, %v2583
  %v2596 = vand.u32 2147483647, %v2583
  %vm2597 = vcmp.lt.f32.partialorder %v2596, 0.0004427343
  %v2598 = vsel %vm2597, %v2595, %v2592
  %v2599 = vadd.f32 %v2585, 1.0
  %v2600 = vlog2.pop %v2599
  %v2601 = vmul.f32 %v2600, 0.6931472
  %v2602 = vmul.f32 -0.5, %v2585
  %v2603 = vadd.f32 %v2602, 1.0
  %v2604 = vmul.f32 %v2603, %v2585
  %v2605 = vand.u32 2147483647, %v2585
  %vm2606 = vcmp.lt.f32.partialorder %v2605, 0.0004427343
  %v2607 = vsel %vm2606, %v2604, %v2601
  %v2608 = vadd.f32 %v2587, 1.0
  %v2609 = vlog2.pop %v2608
  %v2610 = vmul.f32 %v2609, 0.6931472
  %v2611 = vmul.f32 -0.5, %v2587
  %v2612 = vadd.f32 %v2611, 1.0
  %v2613 = vmul.f32 %v2612, %v2587
  %v2614 = vand.u32 2147483647, %v2587
  %vm2615 = vcmp.lt.f32.partialorder %v2614, 0.0004427343
  %v2616 = vsel %vm2615, %v2613, %v2610
  %v2617 = vadd.f32 %v2589, 1.0
  %v2618 = vlog2.pop %v2617
  %v2619 = vmul.f32 %v2618, 0.6931472
  %v2620 = vmul.f32 -0.5, %v2589
  %v2621 = vadd.f32 %v2620, 1.0
  %v2622 = vmul.f32 %v2621, %v2589
  %v2623 = vand.u32 2147483647, %v2589
  %vm2624 = vcmp.lt.f32.partialorder %v2623, 0.0004427343
  %v2625 = vsel %vm2624, %v2622, %v2619
  %v2626 = vadd.f32 %v2570, %v2598
  %v2627 = vadd.f32 %v2571, %v2607
  %v2628 = vadd.f32 %v2572, %v2616
  %v2629 = vadd.f32 %v2573, %v2625
  %v2630 = vadd.f32 %v2626, 1e-06
  %v2631 = vadd.f32 %v2627, 1e-06
  %v2632 = vadd.f32 %v2628, 1e-06
  %v2633 = vadd.f32 %v2629, 1e-06
  %vm2634 = vcmask 72752
  %v2635 = vsel %vm2634, %v2559, -inf
  %2636 = vmax.xlane.f32.xlu0 %v2635
  %v2637 = vpop.xlane.xlu0 %2636
  %v2638 = vsel %vm2634, %v2562, -inf
  %2639 = vmax.xlane.f32.xlu0 %v2638
  %v2640 = vpop.xlane.xlu0 %2639
  %v2641 = vsel %vm2634, %v2565, -inf
  %2642 = vmax.xlane.f32.xlu0 %v2641
  %v2643 = vpop.xlane.xlu0 %2642
  %v2644 = vsel %vm2634, %v2568, -inf
  %2645 = vmax.xlane.f32.xlu0 %v2644
  %v2646 = vpop.xlane.xlu0 %2645
  %v2647 = vsub.f32 %v2559, %v2637
  %v2648 = vsub.f32 %v2562, %v2640
  %v2649 = vsub.f32 %v2565, %v2643
  %v2650 = vsub.f32 %v2568, %v2646
  %v2651 = vmul.f32 %v2647, 1.442695
  %v2652 = vpow.pop %v2651
  %v2653 = vmul.f32 %v2648, 1.442695
  %v2654 = vpow.pop %v2653
  %v2655 = vmul.f32 %v2649, 1.442695
  %v2656 = vpow.pop %v2655
  %v2657 = vmul.f32 %v2650, 1.442695
  %v2658 = vpow.pop %v2657
  %2663 = vrot.lane.b32.xlu0 %v2652, 122
  %v2664 = vpop.permute.xlu0 %2663
  %2665 = vrot.lane.b32.xlu0 %v2654, 122
  %v2666 = vpop.permute.xlu0 %2665
  %2667 = vrot.lane.b32.xlu0 %v2656, 122
  %v2668 = vpop.permute.xlu0 %2667
  %2669 = vrot.lane.b32.xlu0 %v2658, 122
  %v2670 = vpop.permute.xlu0 %2669
  %vm2675 = vcmask 23552
  %v2676 = vsel %vm2675, %v2664, 0.0
  %2677 = vadd.xlane.f32.xlu0 %v2676
  %v2678 = vpop.xlane.xlu0 %2677
  %v2679 = vsel %vm2675, %v2666, 0.0
  %2680 = vadd.xlane.f32.xlu0 %v2679
  %v2681 = vpop.xlane.xlu0 %2680
  %v2682 = vsel %vm2675, %v2668, 0.0
  %2683 = vadd.xlane.f32.xlu0 %v2682
  %v2684 = vpop.xlane.xlu0 %2683
  %v2685 = vsel %vm2675, %v2670, 0.0
  %2686 = vadd.xlane.f32.xlu0 %v2685
  %v2687 = vpop.xlane.xlu0 %2686
  %v2688 = vrcp.pop %v2678
  %v2689 = vmul.f32 %v2678, %v2688
  %v2690 = vsub.f32 1.0, %v2689
  %v2691 = vmul.f32 %v2688, %v2690
  %v2692 = vadd.f32 %v2688, %v2691
  %vm2693 = vweird.f32 %v2678
  %vm2694 = vweird.f32 %v2688
  %vm2695 = vmor %vm2693, %vm2694
  %v2696 = vsel %vm2695, %v2688, %v2692
  %v2697 = vand.u32 2147483647, %v2678
  %vm2698 = vcmp.eq.f32.partialorder %v2697, 8.507059e+37
  %v2699 = vand.u32 %v2678, 2147483648
  %v2700 = vor.u32 1.1754944e-38, %v2699
  %v2701 = vsel %vm2698, %v2700, %v2696
  %v2702 = vmul.f32 %v2652, %v2701
  %v2703 = vrcp.pop %v2681
  %v2704 = vmul.f32 %v2681, %v2703
  %v2705 = vsub.f32 1.0, %v2704
  %v2706 = vmul.f32 %v2703, %v2705
  %v2707 = vadd.f32 %v2703, %v2706
  %vm2708 = vweird.f32 %v2681
  %vm2709 = vweird.f32 %v2703
  %vm2710 = vmor %vm2708, %vm2709
  %v2711 = vsel %vm2710, %v2703, %v2707
  %v2712 = vand.u32 2147483647, %v2681
  %vm2713 = vcmp.eq.f32.partialorder %v2712, 8.507059e+37
  %v2714 = vand.u32 %v2681, 2147483648
  %v2715 = vor.u32 1.1754944e-38, %v2714
  %v2716 = vsel %vm2713, %v2715, %v2711
  %v2717 = vmul.f32 %v2654, %v2716
  %v2718 = vrcp.pop %v2684
  %v2719 = vmul.f32 %v2684, %v2718
  %v2720 = vsub.f32 1.0, %v2719
  %v2721 = vmul.f32 %v2718, %v2720
  %v2722 = vadd.f32 %v2718, %v2721
  %vm2723 = vweird.f32 %v2684
  %vm2724 = vweird.f32 %v2718
  %vm2725 = vmor %vm2723, %vm2724
  %v2726 = vsel %vm2725, %v2718, %v2722
  %v2727 = vand.u32 2147483647, %v2684
  %vm2728 = vcmp.eq.f32.partialorder %v2727, 8.507059e+37
  %v2729 = vand.u32 %v2684, 2147483648
  %v2730 = vor.u32 1.1754944e-38, %v2729
  %v2731 = vsel %vm2728, %v2730, %v2726
  %v2732 = vmul.f32 %v2656, %v2731
  %v2733 = vrcp.pop %v2687
  %v2734 = vmul.f32 %v2687, %v2733
  %v2735 = vsub.f32 1.0, %v2734
  %v2736 = vmul.f32 %v2733, %v2735
  %v2737 = vadd.f32 %v2733, %v2736
  %vm2738 = vweird.f32 %v2687
  %vm2739 = vweird.f32 %v2733
  %vm2740 = vmor %vm2738, %vm2739
  %v2741 = vsel %vm2740, %v2733, %v2737
  %v2742 = vand.u32 2147483647, %v2687
  %vm2743 = vcmp.eq.f32.partialorder %v2742, 8.507059e+37
  %v2744 = vand.u32 %v2687, 2147483648
  %v2745 = vor.u32 1.1754944e-38, %v2744
  %v2746 = vsel %vm2743, %v2745, %v2741
  %v2747 = vmul.f32 %v2658, %v2746
  %v2748 = vsel %vm69, %v2630, %v2702
  %v2749 = vsel %vm69, %v2631, %v2717
  %v2750 = vsel %vm69, %v2632, %v2732
  %v2751 = vsel %vm69, %v2633, %v2747
  %vm2752 = vcmask 72704
  %2753 = vst.msk [vmem:[%s3] sm:$0xff] %vm2752, %v2748
  %2754 = vst.msk [vmem:[%s3 + $0x8] sm:$0xff] %vm2752, %v2749
  %2755 = vst.msk [vmem:[%s3 + $0x10] sm:$0xff] %vm2752, %v2750
  %2756 = vst.msk [vmem:[%s3 + $0x18] sm:$0xff] %vm2752, %v2751
  // Predicated region
  $region14: #{mstan_forward.1} parent=0 // pred_check
    _
  $region15: #{mstan_forward.1} parent=0 // pred_check_branch
    %2758 = sbr.rel (0) target = $region17
  $region16: #{mstan_forward.1} parent=0 // pred_region
    _
  $region17: #{mstan_forward.1} parent=0 // pred_fallthru
    _
  // Predicated region
  $region18: #{mstan_forward.1} parent=0 // pred_check
    _
  $region19: #{mstan_forward.1} parent=0 // pred_check_branch
    %2760 = sbr.rel (0) target = $region21
  $region20: #{mstan_forward.1} parent=0 // pred_region
    _
  $region21: #{mstan_forward.1} parent=0 // pred_fallthru
    _

</llo_original>
